<compile_context>
chip_gen: v6e
topology: v6e:2x2x1
jax: 0.10.0
libtpu: 0.0.40
codegen_flags: <defaults>
</compile_context>

<pallas_src>
import math
from functools import partial

import numpy as np
import jax
import jax.numpy as jnp
from jax.experimental import pallas as pl
from jax.experimental.pallas import tpu as pltpu

AMIN = 1e-7                              # module passes amin=1e-07 explicitly
AMIN_SQ = AMIN * AMIN                    # amplitude_to_db squares amin before power_to_db
TOP_DB = 80.0
_TOP_DB_POW = 10.0 ** (-TOP_DB / 10.0)   # top_db clamp expressed in the power domain
_LN_SCALE = (10.0 / math.log(10.0)) ** 2 # (natural-log diff) -> dB^2 conversion factor


def _vmem_capacity_bytes():
    try:
        return int(pltpu.get_tpu_info().vmem_capacity_bytes)
    except Exception:
        return 64 * 1024 * 1024          # v7x-safe fallback (smallest physical VMEM)


def _spectral_loss_kernel(p_ref, t_ref, out_ref,
                          pmax_acc, tmax_acc, sse_acc, floor_smem,
                          *, scale, t_valid, tile_cols, need_col_mask):
    """grid = (2, num_tiles): phase 0 = global max of x^2, phase 1 = dB-MSE."""
    phase = pl.program_id(0)
    i = pl.program_id(1)
    last = pl.num_programs(1) - 1
    amin_sq = jnp.float32(AMIN_SQ)

    @pl.when((phase == 0) & (i == 0))
    def _init():
        # x^2 >= 0, so zero is a valid identity for the running max too.
        pmax_acc[...] = jnp.zeros_like(pmax_acc)
        tmax_acc[...] = jnp.zeros_like(tmax_acc)
        sse_acc[...] = jnp.zeros_like(sse_acc)

    def _col_valid(shape):
        cols = jax.lax.broadcasted_iota(jnp.int32, shape, 1) + i * tile_cols
        return cols < t_valid

    @pl.when(phase == 0)
    def _max_phase():
        p = p_ref[...].astype(jnp.float32)
        t = t_ref[...].astype(jnp.float32)
        pp = p * p
        tt = t * t

        def _accum(ppv, ttv):
            pmax_acc[...] = jnp.maximum(pmax_acc[...],
                                        jnp.max(ppv, axis=1, keepdims=True))
            tmax_acc[...] = jnp.maximum(tmax_acc[...],
                                        jnp.max(ttv, axis=1, keepdims=True))

        if need_col_mask:
            # Edge-block lanes past T are unspecified -> must mask the max phase too.
            @pl.when(i == last)
            def _edge():
                valid = _col_valid(pp.shape)
                _accum(jnp.where(valid, pp, 0.0), jnp.where(valid, tt, 0.0))

            @pl.when(i != last)
            def _interior():
                _accum(pp, tt)
        else:
            _accum(pp, tt)

    @pl.when((phase == 1) & (i == 0))
    def _floors():
        # max(db, db.max() - top_db) == 10*log10(max(power, floor)) with
        # floor = max(amin^2, max(amin^2, power_max) * 10^(-top_db/10))
        #       = max(amin^2, power_max * 10^(-top_db/10))   (no log/exp needed here)
        top = jnp.float32(_TOP_DB_POW)
        floor_smem[0] = jnp.maximum(amin_sq, jnp.max(pmax_acc[...]) * top)
        floor_smem[1] = jnp.maximum(amin_sq, jnp.max(tmax_acc[...]) * top)

    @pl.when(phase == 1)
    def _loss_phase():
        floor_p = floor_smem[0]
        floor_t = floor_smem[1]
        p = p_ref[...].astype(jnp.float32)
        t = t_ref[...].astype(jnp.float32)
        # Natural-log domain; (10/ln10)^2 and 1/N are folded into `scale` at the end.
        lp = jnp.log(jnp.maximum(p * p, floor_p))
        lt = jnp.log(jnp.maximum(t * t, floor_t))
        d = lp - lt

        def _accum(dv):
            sse_acc[...] = sse_acc[...] + jnp.sum(dv * dv, axis=1, keepdims=True)

        if need_col_mask:
            @pl.when(i == last)
            def _edge():
                _accum(jnp.where(_col_valid(d.shape), d, 0.0))

            @pl.when(i != last)
            def _interior():
                _accum(d)
        else:
            _accum(d)

    @pl.when((phase == 1) & (i == last))
    def _finalize():
        out_ref[0, 0] = jnp.sum(sse_acc[...]) * jnp.float32(scale)


def _build_call(F, T, block_cols, num_tiles, single_buffer, bytes_in_elem, vmem_limit):
    need_col_mask = (num_tiles * block_cols) > T
    scale = _LN_SCALE / float(F * T)
    kernel = partial(_spectral_loss_kernel, scale=scale, t_valid=T,
                     tile_cols=block_cols, need_col_mask=need_col_mask)

    def idx(ph, i):
        return (0, i)

    if single_buffer:
        # Block index never changes across the (2, 1) grid -> double buffering is waste.
        in_spec = pl.BlockSpec((F, block_cols), idx, pipeline_mode=pl.Buffered(1))
    else:
        in_spec = pl.BlockSpec((F, block_cols), idx)

    hbm_passes = 1 if num_tiles == 1 else 2
    cost = pl.CostEstimate(
        flops=12 * F * T,
        transcendentals=2 * F * T,
        bytes_accessed=hbm_passes * F * T * bytes_in_elem + 4,
    )

    return pl.pallas_call(
        kernel,
        out_shape=jax.ShapeDtypeStruct((1, 1), jnp.float32),
        grid_spec=pltpu.PrefetchScalarGridSpec(
            num_scalar_prefetch=0,
            grid=(2, num_tiles),                       # (phase, lane tile)
            in_specs=[in_spec, in_spec],
            out_specs=pl.BlockSpec(memory_space=pltpu.MemorySpace.SMEM),
            scratch_shapes=[
                pltpu.VMEM((F, 1), jnp.float32),       # running per-row max of pred^2
                pltpu.VMEM((F, 1), jnp.float32),       # running per-row max of true^2
                pltpu.VMEM((F, 1), jnp.float32),       # running per-row SSE
                pltpu.SMEM((2,), jnp.float32),         # cached power-domain clamp floors
            ],
        ),
        compiler_params=pltpu.CompilerParams(
            dimension_semantics=("arbitrary", "arbitrary"),
            vmem_limit_bytes=vmem_limit,
        ),
        cost_estimate=cost,
    )


def spectral_loss(y_pred, y_true, *, vmem_budget_bytes=None):
    """Pallas implementation of SpectralLoss.forward. Input dtype is kept through DMA."""
    assert y_pred.shape == y_true.shape
    # dB max and the mean are global over the whole array, so flattening leading dims
    # to 2-D is semantics-preserving (and reshape of a contiguous array is free).
    if y_pred.ndim == 1:
        y_pred = y_pred.reshape(1, -1)
        y_true = y_true.reshape(1, -1)
    elif y_pred.ndim > 2:
        y_pred = y_pred.reshape(-1, y_pred.shape[-1])
        y_true = y_true.reshape(-1, y_true.shape[-1])
    F, T = y_pred.shape

    vmem_cap = _vmem_capacity_bytes()
    budget = int(vmem_cap * 0.70) if vmem_budget_bytes is None else int(vmem_budget_bytes)
    vmem_limit = int(vmem_cap * 0.85)

    bytes_in_elem = y_pred.dtype.itemsize + y_true.dtype.itemsize
    total_in = F * T * bytes_in_elem

    # Balanced streaming tiles (double-buffered) for the non-resident path.
    max_tile = max(128, (budget // (2 * F * bytes_in_elem)) // 128 * 128)
    c128 = -(-T // 128)
    s_tiles = -(-c128 // (max_tile // 128))
    s_cols = 128 * (-(-c128 // s_tiles))
    streaming_cfg = (s_cols, s_tiles, False)

    if 2 * total_in <= budget:
        # Resident even with default double buffering; try single buffering first.
        configs = [(T, 1, True), (T, 1, False)]
    elif total_in <= budget:
        # Resident only if single-buffered; otherwise stream in balanced tiles.
        configs = [(T, 1, True), streaming_cfg]
    else:
        configs = [streaming_cfg]

    last_err = None
    for block_cols, num_tiles, single_buffer in configs:
        try:
            call = _build_call(F, T, block_cols, num_tiles, single_buffer,
                               bytes_in_elem, vmem_limit)
            return call(y_pred, y_true)[0, 0]
        except Exception as e:     # e.g. pl.Buffered(1) unsupported -> safe fallback
            last_err = e
    raise last_err


# --- pure numpy reference (mirrors librosa.amplitude_to_db + torch.mean) ---
def _ref_amp_to_db(x):
    mag = np.abs(np.asarray(x, dtype=np.float32))
    power = mag * mag
    db = 10.0 * np.log10(np.maximum(np.float32(AMIN_SQ), power))
    return np.maximum(db, db.max() - np.float32(TOP_DB))


def _ref_loss(p, t):
    dp = _ref_amp_to_db(p)
    dt = _ref_amp_to_db(t)
    return float(np.mean((dp - dt) ** 2))


if __name__ == "__main__":
    key = jax.random.PRNGKey(0)
    ks = jax.random.split(key, 8)

    def check(y_pred, y_true, **kw):
        loss = jax.block_until_ready(spectral_loss(y_pred, y_true, **kw))
        ref = _ref_loss(np.asarray(y_pred).astype(np.float32),
                        np.asarray(y_true).astype(np.float32))
        assert np.allclose(float(loss), ref, rtol=2e-3, atol=2e-3), (float(loss), ref)

    # 1) aligned f32 spectrogram: whole-array-resident (single-buffered) path
    check(jax.random.normal(ks[0], (128, 256), jnp.float32) * 0.5,
          jax.random.normal(ks[1], (128, 256), jnp.float32) * 0.5)

    # 2) non-aligned shape: full-array block (no wrapper padding, no mask needed)
    check(jax.random.normal(ks[2], (65, 200), jnp.float32) * 0.3,
          jax.random.normal(ks[3], (65, 200), jnp.float32) * 0.3)

    # 3) forced streaming path with ragged (masked) last tile via tiny budget override
    check(jax.random.normal(ks[4], (96, 1000), jnp.float32) * 0.7,
          jax.random.normal(ks[5], (96, 1000), jnp.float32) * 0.7,
          vmem_budget_bytes=460_800)

    # 4) bf16 inputs: DMA'd natively in bf16, upcast inside the kernel
    check(jax.random.normal(ks[6], (64, 384), jnp.bfloat16) * 0.5,
          jax.random.normal(ks[7], (64, 384), jnp.bfloat16) * 0.5)

    print("KERNEL_OK")
</pallas_src>

<mosaic_0001>
module attributes {stable_mosaic.version = 11 : i64} {
  func.func @_spectral_loss_kernel(%arg0: i32, %arg1: i32, %arg2: memref<128x256xf32, #tpu.memory_space<vmem>>, %arg3: memref<128x256xf32, #tpu.memory_space<vmem>>, %arg4: memref<1x1xf32, #tpu.memory_space<smem>>, %arg5: memref<128x1xf32, #tpu.memory_space<vmem>>, %arg6: memref<128x1xf32, #tpu.memory_space<vmem>>, %arg7: memref<128x1xf32, #tpu.memory_space<vmem>>, %arg8: memref<2xf32, #tpu.memory_space<smem>>) attributes {dimension_semantics = [#tpu.dimension_semantics<arbitrary>, #tpu.dimension_semantics<arbitrary>], iteration_bounds = array<i64: 2, 1>, scalar_prefetch = 0 : i64, scratch_operands = 4 : i64, tpu.core_type = #tpu.core_type<tc>, window_params = [{pipeline_mode = #tpu.pipeline_mode<synchronous>, transform_indices = @transform_0, window_bounds = array<i64: 128, 256>}, {pipeline_mode = #tpu.pipeline_mode<synchronous>, transform_indices = @transform_1, window_bounds = array<i64: 128, 256>}, {transform_indices = @transform_2, window_bounds = array<i64: 1, 1>}]} {
    %c0_i32 = arith.constant 0 : i32
    %0 = arith.cmpi eq, %arg0, %c0_i32 : i32
    %c0_i32_0 = arith.constant 0 : i32
    %1 = arith.cmpi eq, %arg1, %c0_i32_0 : i32
    %2 = arith.andi %0, %1 : i1
    %3 = arith.extui %2 : i1 to i32
    %c0_i32_1 = arith.constant 0 : i32
    %4 = arith.cmpi ne, %3, %c0_i32_1 : i32
    scf.if %4 {
      %cst_11 = arith.constant 0.000000e+00 : f32
      %21 = vector.broadcast %cst_11 : f32 to vector<128x1xf32>
      %c0 = arith.constant 0 : index
      %c0_12 = arith.constant 0 : index
      %22 = vector.load %arg5[%c0, %c0_12] : memref<128x1xf32, #tpu.memory_space<vmem>>, vector<128x1xf32>
      tpu.vector_store %arg5[%c0, %c0_12], %21 {strides = array<i32>} : memref<128x1xf32, #tpu.memory_space<vmem>>, vector<128x1xf32>,
      %cst_13 = arith.constant 0.000000e+00 : f32
      %23 = vector.broadcast %cst_13 : f32 to vector<128x1xf32>
      %c0_14 = arith.constant 0 : index
      %c0_15 = arith.constant 0 : index
      %24 = vector.load %arg6[%c0_14, %c0_15] : memref<128x1xf32, #tpu.memory_space<vmem>>, vector<128x1xf32>
      tpu.vector_store %arg6[%c0_14, %c0_15], %23 {strides = array<i32>} : memref<128x1xf32, #tpu.memory_space<vmem>>, vector<128x1xf32>,
      %cst_16 = arith.constant 0.000000e+00 : f32
      %25 = vector.broadcast %cst_16 : f32 to vector<128x1xf32>
      %c0_17 = arith.constant 0 : index
      %c0_18 = arith.constant 0 : index
      %26 = vector.load %arg7[%c0_17, %c0_18] : memref<128x1xf32, #tpu.memory_space<vmem>>, vector<128x1xf32>
      tpu.vector_store %arg7[%c0_17, %c0_18], %25 {strides = array<i32>} : memref<128x1xf32, #tpu.memory_space<vmem>>, vector<128x1xf32>,
    } else {
    }
    %c0_i32_2 = arith.constant 0 : i32
    %5 = arith.cmpi eq, %arg0, %c0_i32_2 : i32
    %6 = arith.extui %5 : i1 to i32
    %c0_i32_3 = arith.constant 0 : i32
    %7 = arith.cmpi ne, %6, %c0_i32_3 : i32
    scf.if %7 {
      %c0 = arith.constant 0 : index
      %c0_11 = arith.constant 0 : index
      %21 = vector.load %arg2[%c0, %c0_11] : memref<128x256xf32, #tpu.memory_space<vmem>>, vector<128x256xf32>
      %c0_12 = arith.constant 0 : index
      %c0_13 = arith.constant 0 : index
      %22 = vector.load %arg3[%c0_12, %c0_13] : memref<128x256xf32, #tpu.memory_space<vmem>>, vector<128x256xf32>
      %23 = arith.mulf %21, %21 : vector<128x256xf32>
      %24 = arith.mulf %22, %22 : vector<128x256xf32>
      %c0_14 = arith.constant 0 : index
      %c0_15 = arith.constant 0 : index
      %25 = vector.load %arg5[%c0_14, %c0_15] : memref<128x1xf32, #tpu.memory_space<vmem>>, vector<128x1xf32>
      %cst_16 = arith.constant dense<0xFF800000> : vector<128xf32>
      %26 = vector.multi_reduction <maximumf>, %23, %cst_16 [1] : vector<128x256xf32> to vector<128xf32>
      %27 = vector.shape_cast %26 : vector<128xf32> to vector<128x1xf32>
      %28 = arith.maximumf %25, %27 : vector<128x1xf32>
      %c0_17 = arith.constant 0 : index
      %c0_18 = arith.constant 0 : index
      %29 = vector.load %arg5[%c0_17, %c0_18] : memref<128x1xf32, #tpu.memory_space<vmem>>, vector<128x1xf32>
      tpu.vector_store %arg5[%c0_17, %c0_18], %28 {strides = array<i32>} : memref<128x1xf32, #tpu.memory_space<vmem>>, vector<128x1xf32>,
      %c0_19 = arith.constant 0 : index
      %c0_20 = arith.constant 0 : index
      %30 = vector.load %arg6[%c0_19, %c0_20] : memref<128x1xf32, #tpu.memory_space<vmem>>, vector<128x1xf32>
      %cst_21 = arith.constant dense<0xFF800000> : vector<128xf32>
      %31 = vector.multi_reduction <maximumf>, %24, %cst_21 [1] : vector<128x256xf32> to vector<128xf32>
      %32 = vector.shape_cast %31 : vector<128xf32> to vector<128x1xf32>
      %33 = arith.maximumf %30, %32 : vector<128x1xf32>
      %c0_22 = arith.constant 0 : index
      %c0_23 = arith.constant 0 : index
      %34 = vector.load %arg6[%c0_22, %c0_23] : memref<128x1xf32, #tpu.memory_space<vmem>>, vector<128x1xf32>
      tpu.vector_store %arg6[%c0_22, %c0_23], %33 {strides = array<i32>} : memref<128x1xf32, #tpu.memory_space<vmem>>, vector<128x1xf32>,
    } else {
    }
    %c1_i32 = arith.constant 1 : i32
    %8 = arith.cmpi eq, %arg0, %c1_i32 : i32
    %c0_i32_4 = arith.constant 0 : i32
    %9 = arith.cmpi eq, %arg1, %c0_i32_4 : i32
    %10 = arith.andi %8, %9 : i1
    %11 = arith.extui %10 : i1 to i32
    %cst = arith.constant 9.99999982E-15 : f32
    %c0_i32_5 = arith.constant 0 : i32
    %12 = arith.cmpi ne, %11, %c0_i32_5 : i32
    scf.if %12 {
      %c0 = arith.constant 0 : index
      %c0_11 = arith.constant 0 : index
      %21 = vector.load %arg5[%c0, %c0_11] : memref<128x1xf32, #tpu.memory_space<vmem>>, vector<128x1xf32>
      %22 = vector.shape_cast %21 : vector<128x1xf32> to vector<1x128x1xf32>
      %cst_12 = arith.constant dense<0xFF800000> : vector<1xf32>
      %23 = vector.multi_reduction <maximumf>, %22, %cst_12 [1, 2] : vector<1x128x1xf32> to vector<1xf32>
      %24 = vector.shape_cast %23 : vector<1xf32> to vector<1x1x1xf32>
      %25 = vector.extract %24[0, 0, 0] : f32 from vector<1x1x1xf32>
      %cst_13 = arith.constant 9.99999993E-9 : f32
      %26 = arith.mulf %25, %cst_13 : f32
      %27 = arith.maximumf %cst, %26 : f32
      %c0_14 = arith.constant 0 : index
      %28 = memref.load %arg8[%c0_14] : memref<2xf32, #tpu.memory_space<smem>>
      memref.store %27, %arg8[%c0_14] : memref<2xf32, #tpu.memory_space<smem>>
      %c0_15 = arith.constant 0 : index
      %c0_16 = arith.constant 0 : index
      %29 = vector.load %arg6[%c0_15, %c0_16] : memref<128x1xf32, #tpu.memory_space<vmem>>, vector<128x1xf32>
      %30 = vector.shape_cast %29 : vector<128x1xf32> to vector<1x128x1xf32>
      %cst_17 = arith.constant dense<0xFF800000> : vector<1xf32>
      %31 = vector.multi_reduction <maximumf>, %30, %cst_17 [1, 2] : vector<1x128x1xf32> to vector<1xf32>
      %32 = vector.shape_cast %31 : vector<1xf32> to vector<1x1x1xf32>
      %33 = vector.extract %32[0, 0, 0] : f32 from vector<1x1x1xf32>
      %cst_18 = arith.constant 9.99999993E-9 : f32
      %34 = arith.mulf %33, %cst_18 : f32
      %35 = arith.maximumf %cst, %34 : f32
      %c1 = arith.constant 1 : index
      %36 = memref.load %arg8[%c1] : memref<2xf32, #tpu.memory_space<smem>>
      memref.store %35, %arg8[%c1] : memref<2xf32, #tpu.memory_space<smem>>
    } else {
    }
    %c1_i32_6 = arith.constant 1 : i32
    %13 = arith.cmpi eq, %arg0, %c1_i32_6 : i32
    %14 = arith.extui %13 : i1 to i32
    %c0_i32_7 = arith.constant 0 : i32
    %15 = arith.cmpi ne, %14, %c0_i32_7 : i32
    scf.if %15 {
      %c0 = arith.constant 0 : index
      %21 = memref.load %arg8[%c0] : memref<2xf32, #tpu.memory_space<smem>>
      %c1 = arith.constant 1 : index
      %22 = memref.load %arg8[%c1] : memref<2xf32, #tpu.memory_space<smem>>
      %c0_11 = arith.constant 0 : index
      %c0_12 = arith.constant 0 : index
      %23 = vector.load %arg2[%c0_11, %c0_12] : memref<128x256xf32, #tpu.memory_space<vmem>>, vector<128x256xf32>
      %c0_13 = arith.constant 0 : index
      %c0_14 = arith.constant 0 : index
      %24 = vector.load %arg3[%c0_13, %c0_14] : memref<128x256xf32, #tpu.memory_space<vmem>>, vector<128x256xf32>
      %25 = arith.mulf %23, %23 : vector<128x256xf32>
      %26 = vector.broadcast %21 : f32 to vector<128x256xf32>
      %27 = arith.maximumf %25, %26 : vector<128x256xf32>
      %28 = math.log %27 : vector<128x256xf32>
      %29 = arith.mulf %24, %24 : vector<128x256xf32>
      %30 = vector.broadcast %22 : f32 to vector<128x256xf32>
      %31 = arith.maximumf %29, %30 : vector<128x256xf32>
      %32 = math.log %31 : vector<128x256xf32>
      %33 = arith.subf %28, %32 : vector<128x256xf32>
      %c0_15 = arith.constant 0 : index
      %c0_16 = arith.constant 0 : index
      %34 = vector.load %arg7[%c0_15, %c0_16] : memref<128x1xf32, #tpu.memory_space<vmem>>, vector<128x1xf32>
      %35 = arith.mulf %33, %33 : vector<128x256xf32>
      %cst_17 = arith.constant dense<0.000000e+00> : vector<128xf32>
      %36 = vector.multi_reduction <add>, %35, %cst_17 [1] : vector<128x256xf32> to vector<128xf32>
      %37 = vector.shape_cast %36 : vector<128xf32> to vector<128x1xf32>
      %38 = arith.addf %34, %37 : vector<128x1xf32>
      %c0_18 = arith.constant 0 : index
      %c0_19 = arith.constant 0 : index
      %39 = vector.load %arg7[%c0_18, %c0_19] : memref<128x1xf32, #tpu.memory_space<vmem>>, vector<128x1xf32>
      tpu.vector_store %arg7[%c0_18, %c0_19], %38 {strides = array<i32>} : memref<128x1xf32, #tpu.memory_space<vmem>>, vector<128x1xf32>,
    } else {
    }
    %c1_i32_8 = arith.constant 1 : i32
    %16 = arith.cmpi eq, %arg0, %c1_i32_8 : i32
    %c0_i32_9 = arith.constant 0 : i32
    %17 = arith.cmpi eq, %arg1, %c0_i32_9 : i32
    %18 = arith.andi %16, %17 : i1
    %19 = arith.extui %18 : i1 to i32
    %c0_i32_10 = arith.constant 0 : i32
    %20 = arith.cmpi ne, %19, %c0_i32_10 : i32
    scf.if %20 {
      %c0 = arith.constant 0 : index
      %c0_11 = arith.constant 0 : index
      %21 = vector.load %arg7[%c0, %c0_11] : memref<128x1xf32, #tpu.memory_space<vmem>>, vector<128x1xf32>
      %22 = vector.shape_cast %21 : vector<128x1xf32> to vector<1x128x1xf32>
      %cst_12 = arith.constant dense<0.000000e+00> : vector<1xf32>
      %23 = vector.multi_reduction <add>, %22, %cst_12 [1, 2] : vector<1x128x1xf32> to vector<1xf32>
      %24 = vector.shape_cast %23 : vector<1xf32> to vector<1x1x1xf32>
      %25 = vector.extract %24[0, 0, 0] : f32 from vector<1x1x1xf32>
      %cst_13 = arith.constant 5.75597223E-4 : f32
      %26 = arith.mulf %25, %cst_13 : f32
      %c0_14 = arith.constant 0 : index
      %c0_15 = arith.constant 0 : index
      %27 = memref.load %arg4[%c0_14, %c0_15] : memref<1x1xf32, #tpu.memory_space<smem>>
      memref.store %26, %arg4[%c0_14, %c0_15] : memref<1x1xf32, #tpu.memory_space<smem>>
    } else {
    }
    return
  }
  func.func @transform_0(%arg0: i32, %arg1: i32) -> (i32, i32) {
    %c0_i32 = arith.constant 0 : i32
    %c0_i32_0 = arith.constant 0 : i32
    return %c0_i32, %arg1 : i32, i32
  }
  func.func @transform_1(%arg0: i32, %arg1: i32) -> (i32, i32) {
    %c0_i32 = arith.constant 0 : i32
    %c0_i32_0 = arith.constant 0 : i32
    return %c0_i32, %arg1 : i32, i32
  }
  func.func @transform_2(%arg0: i32, %arg1: i32) -> (i32, i32) {
    %c0_i32 = arith.constant 0 : i32
    %c0_i32_0 = arith.constant 0 : i32
    %c0_i32_1 = arith.constant 0 : i32
    return %c0_i32, %c0_i32_0 : i32, i32
  }
}

module attributes {stable_mosaic.version = 11 : i64} {
  func.func @_spectral_loss_kernel(%arg0: i32, %arg1: i32, %arg2: memref<128x256xf32, #tpu.memory_space<vmem>>, %arg3: memref<128x256xf32, #tpu.memory_space<vmem>>, %arg4: memref<1x1xf32, #tpu.memory_space<smem>>, %arg5: memref<128x1xf32, #tpu.memory_space<vmem>>, %arg6: memref<128x1xf32, #tpu.memory_space<vmem>>, %arg7: memref<128x1xf32, #tpu.memory_space<vmem>>, %arg8: memref<2xf32, #tpu.memory_space<smem>>) attributes {dimension_semantics = [#tpu.dimension_semantics<arbitrary>, #tpu.dimension_semantics<arbitrary>], iteration_bounds = array<i64: 2, 1>, scalar_prefetch = 0 : i64, scratch_operands = 4 : i64, tpu.core_type = #tpu.core_type<tc>, window_params = [{transform_indices = @transform_0, window_bounds = array<i64: 128, 256>}, {transform_indices = @transform_1, window_bounds = array<i64: 128, 256>}, {transform_indices = @transform_2, window_bounds = array<i64: 1, 1>}]} {
    %c0_i32 = arith.constant 0 : i32
    %0 = arith.cmpi eq, %arg0, %c0_i32 : i32
    %c0_i32_0 = arith.constant 0 : i32
    %1 = arith.cmpi eq, %arg1, %c0_i32_0 : i32
    %2 = arith.andi %0, %1 : i1
    %3 = arith.extui %2 : i1 to i32
    %c0_i32_1 = arith.constant 0 : i32
    %4 = arith.cmpi ne, %3, %c0_i32_1 : i32
    scf.if %4 {
      %cst_11 = arith.constant 0.000000e+00 : f32
      %21 = vector.broadcast %cst_11 : f32 to vector<128x1xf32>
      %c0 = arith.constant 0 : index
      %c0_12 = arith.constant 0 : index
      %22 = vector.load %arg5[%c0, %c0_12] : memref<128x1xf32, #tpu.memory_space<vmem>>, vector<128x1xf32>
      tpu.vector_store %arg5[%c0, %c0_12], %21 {strides = array<i32>} : memref<128x1xf32, #tpu.memory_space<vmem>>, vector<128x1xf32>,
      %cst_13 = arith.constant 0.000000e+00 : f32
      %23 = vector.broadcast %cst_13 : f32 to vector<128x1xf32>
      %c0_14 = arith.constant 0 : index
      %c0_15 = arith.constant 0 : index
      %24 = vector.load %arg6[%c0_14, %c0_15] : memref<128x1xf32, #tpu.memory_space<vmem>>, vector<128x1xf32>
      tpu.vector_store %arg6[%c0_14, %c0_15], %23 {strides = array<i32>} : memref<128x1xf32, #tpu.memory_space<vmem>>, vector<128x1xf32>,
      %cst_16 = arith.constant 0.000000e+00 : f32
      %25 = vector.broadcast %cst_16 : f32 to vector<128x1xf32>
      %c0_17 = arith.constant 0 : index
      %c0_18 = arith.constant 0 : index
      %26 = vector.load %arg7[%c0_17, %c0_18] : memref<128x1xf32, #tpu.memory_space<vmem>>, vector<128x1xf32>
      tpu.vector_store %arg7[%c0_17, %c0_18], %25 {strides = array<i32>} : memref<128x1xf32, #tpu.memory_space<vmem>>, vector<128x1xf32>,
    } else {
    }
    %c0_i32_2 = arith.constant 0 : i32
    %5 = arith.cmpi eq, %arg0, %c0_i32_2 : i32
    %6 = arith.extui %5 : i1 to i32
    %c0_i32_3 = arith.constant 0 : i32
    %7 = arith.cmpi ne, %6, %c0_i32_3 : i32
    scf.if %7 {
      %c0 = arith.constant 0 : index
      %c0_11 = arith.constant 0 : index
      %21 = vector.load %arg2[%c0, %c0_11] : memref<128x256xf32, #tpu.memory_space<vmem>>, vector<128x256xf32>
      %c0_12 = arith.constant 0 : index
      %c0_13 = arith.constant 0 : index
      %22 = vector.load %arg3[%c0_12, %c0_13] : memref<128x256xf32, #tpu.memory_space<vmem>>, vector<128x256xf32>
      %23 = arith.mulf %21, %21 : vector<128x256xf32>
      %24 = arith.mulf %22, %22 : vector<128x256xf32>
      %c0_14 = arith.constant 0 : index
      %c0_15 = arith.constant 0 : index
      %25 = vector.load %arg5[%c0_14, %c0_15] : memref<128x1xf32, #tpu.memory_space<vmem>>, vector<128x1xf32>
      %cst_16 = arith.constant dense<0xFF800000> : vector<128xf32>
      %26 = vector.multi_reduction <maximumf>, %23, %cst_16 [1] : vector<128x256xf32> to vector<128xf32>
      %27 = vector.shape_cast %26 : vector<128xf32> to vector<128x1xf32>
      %28 = arith.maximumf %25, %27 : vector<128x1xf32>
      %c0_17 = arith.constant 0 : index
      %c0_18 = arith.constant 0 : index
      %29 = vector.load %arg5[%c0_17, %c0_18] : memref<128x1xf32, #tpu.memory_space<vmem>>, vector<128x1xf32>
      tpu.vector_store %arg5[%c0_17, %c0_18], %28 {strides = array<i32>} : memref<128x1xf32, #tpu.memory_space<vmem>>, vector<128x1xf32>,
      %c0_19 = arith.constant 0 : index
      %c0_20 = arith.constant 0 : index
      %30 = vector.load %arg6[%c0_19, %c0_20] : memref<128x1xf32, #tpu.memory_space<vmem>>, vector<128x1xf32>
      %cst_21 = arith.constant dense<0xFF800000> : vector<128xf32>
      %31 = vector.multi_reduction <maximumf>, %24, %cst_21 [1] : vector<128x256xf32> to vector<128xf32>
      %32 = vector.shape_cast %31 : vector<128xf32> to vector<128x1xf32>
      %33 = arith.maximumf %30, %32 : vector<128x1xf32>
      %c0_22 = arith.constant 0 : index
      %c0_23 = arith.constant 0 : index
      %34 = vector.load %arg6[%c0_22, %c0_23] : memref<128x1xf32, #tpu.memory_space<vmem>>, vector<128x1xf32>
      tpu.vector_store %arg6[%c0_22, %c0_23], %33 {strides = array<i32>} : memref<128x1xf32, #tpu.memory_space<vmem>>, vector<128x1xf32>,
    } else {
    }
    %c1_i32 = arith.constant 1 : i32
    %8 = arith.cmpi eq, %arg0, %c1_i32 : i32
    %c0_i32_4 = arith.constant 0 : i32
    %9 = arith.cmpi eq, %arg1, %c0_i32_4 : i32
    %10 = arith.andi %8, %9 : i1
    %11 = arith.extui %10 : i1 to i32
    %cst = arith.constant 9.99999982E-15 : f32
    %c0_i32_5 = arith.constant 0 : i32
    %12 = arith.cmpi ne, %11, %c0_i32_5 : i32
    scf.if %12 {
      %c0 = arith.constant 0 : index
      %c0_11 = arith.constant 0 : index
      %21 = vector.load %arg5[%c0, %c0_11] : memref<128x1xf32, #tpu.memory_space<vmem>>, vector<128x1xf32>
      %22 = vector.shape_cast %21 : vector<128x1xf32> to vector<1x128x1xf32>
      %cst_12 = arith.constant dense<0xFF800000> : vector<1xf32>
      %23 = vector.multi_reduction <maximumf>, %22, %cst_12 [1, 2] : vector<1x128x1xf32> to vector<1xf32>
      %24 = vector.shape_cast %23 : vector<1xf32> to vector<1x1x1xf32>
      %25 = vector.extract %24[0, 0, 0] : f32 from vector<1x1x1xf32>
      %cst_13 = arith.constant 9.99999993E-9 : f32
      %26 = arith.mulf %25, %cst_13 : f32
      %27 = arith.maximumf %cst, %26 : f32
      %c0_14 = arith.constant 0 : index
      %28 = memref.load %arg8[%c0_14] : memref<2xf32, #tpu.memory_space<smem>>
      memref.store %27, %arg8[%c0_14] : memref<2xf32, #tpu.memory_space<smem>>
      %c0_15 = arith.constant 0 : index
      %c0_16 = arith.constant 0 : index
      %29 = vector.load %arg6[%c0_15, %c0_16] : memref<128x1xf32, #tpu.memory_space<vmem>>, vector<128x1xf32>
      %30 = vector.shape_cast %29 : vector<128x1xf32> to vector<1x128x1xf32>
      %cst_17 = arith.constant dense<0xFF800000> : vector<1xf32>
      %31 = vector.multi_reduction <maximumf>, %30, %cst_17 [1, 2] : vector<1x128x1xf32> to vector<1xf32>
      %32 = vector.shape_cast %31 : vector<1xf32> to vector<1x1x1xf32>
      %33 = vector.extract %32[0, 0, 0] : f32 from vector<1x1x1xf32>
      %cst_18 = arith.constant 9.99999993E-9 : f32
      %34 = arith.mulf %33, %cst_18 : f32
      %35 = arith.maximumf %cst, %34 : f32
      %c1 = arith.constant 1 : index
      %36 = memref.load %arg8[%c1] : memref<2xf32, #tpu.memory_space<smem>>
      memref.store %35, %arg8[%c1] : memref<2xf32, #tpu.memory_space<smem>>
    } else {
    }
    %c1_i32_6 = arith.constant 1 : i32
    %13 = arith.cmpi eq, %arg0, %c1_i32_6 : i32
    %14 = arith.extui %13 : i1 to i32
    %c0_i32_7 = arith.constant 0 : i32
    %15 = arith.cmpi ne, %14, %c0_i32_7 : i32
    scf.if %15 {
      %c0 = arith.constant 0 : index
      %21 = memref.load %arg8[%c0] : memref<2xf32, #tpu.memory_space<smem>>
      %c1 = arith.constant 1 : index
      %22 = memref.load %arg8[%c1] : memref<2xf32, #tpu.memory_space<smem>>
      %c0_11 = arith.constant 0 : index
      %c0_12 = arith.constant 0 : index
      %23 = vector.load %arg2[%c0_11, %c0_12] : memref<128x256xf32, #tpu.memory_space<vmem>>, vector<128x256xf32>
      %c0_13 = arith.constant 0 : index
      %c0_14 = arith.constant 0 : index
      %24 = vector.load %arg3[%c0_13, %c0_14] : memref<128x256xf32, #tpu.memory_space<vmem>>, vector<128x256xf32>
      %25 = arith.mulf %23, %23 : vector<128x256xf32>
      %26 = vector.broadcast %21 : f32 to vector<128x256xf32>
      %27 = arith.maximumf %25, %26 : vector<128x256xf32>
      %28 = math.log %27 : vector<128x256xf32>
      %29 = arith.mulf %24, %24 : vector<128x256xf32>
      %30 = vector.broadcast %22 : f32 to vector<128x256xf32>
      %31 = arith.maximumf %29, %30 : vector<128x256xf32>
      %32 = math.log %31 : vector<128x256xf32>
      %33 = arith.subf %28, %32 : vector<128x256xf32>
      %c0_15 = arith.constant 0 : index
      %c0_16 = arith.constant 0 : index
      %34 = vector.load %arg7[%c0_15, %c0_16] : memref<128x1xf32, #tpu.memory_space<vmem>>, vector<128x1xf32>
      %35 = arith.mulf %33, %33 : vector<128x256xf32>
      %cst_17 = arith.constant dense<0.000000e+00> : vector<128xf32>
      %36 = vector.multi_reduction <add>, %35, %cst_17 [1] : vector<128x256xf32> to vector<128xf32>
      %37 = vector.shape_cast %36 : vector<128xf32> to vector<128x1xf32>
      %38 = arith.addf %34, %37 : vector<128x1xf32>
      %c0_18 = arith.constant 0 : index
      %c0_19 = arith.constant 0 : index
      %39 = vector.load %arg7[%c0_18, %c0_19] : memref<128x1xf32, #tpu.memory_space<vmem>>, vector<128x1xf32>
      tpu.vector_store %arg7[%c0_18, %c0_19], %38 {strides = array<i32>} : memref<128x1xf32, #tpu.memory_space<vmem>>, vector<128x1xf32>,
    } else {
    }
    %c1_i32_8 = arith.constant 1 : i32
    %16 = arith.cmpi eq, %arg0, %c1_i32_8 : i32
    %c0_i32_9 = arith.constant 0 : i32
    %17 = arith.cmpi eq, %arg1, %c0_i32_9 : i32
    %18 = arith.andi %16, %17 : i1
    %19 = arith.extui %18 : i1 to i32
    %c0_i32_10 = arith.constant 0 : i32
    %20 = arith.cmpi ne, %19, %c0_i32_10 : i32
    scf.if %20 {
      %c0 = arith.constant 0 : index
      %c0_11 = arith.constant 0 : index
      %21 = vector.load %arg7[%c0, %c0_11] : memref<128x1xf32, #tpu.memory_space<vmem>>, vector<128x1xf32>
      %22 = vector.shape_cast %21 : vector<128x1xf32> to vector<1x128x1xf32>
      %cst_12 = arith.constant dense<0.000000e+00> : vector<1xf32>
      %23 = vector.multi_reduction <add>, %22, %cst_12 [1, 2] : vector<1x128x1xf32> to vector<1xf32>
      %24 = vector.shape_cast %23 : vector<1xf32> to vector<1x1x1xf32>
      %25 = vector.extract %24[0, 0, 0] : f32 from vector<1x1x1xf32>
      %cst_13 = arith.constant 5.75597223E-4 : f32
      %26 = arith.mulf %25, %cst_13 : f32
      %c0_14 = arith.constant 0 : index
      %c0_15 = arith.constant 0 : index
      %27 = memref.load %arg4[%c0_14, %c0_15] : memref<1x1xf32, #tpu.memory_space<smem>>
      memref.store %26, %arg4[%c0_14, %c0_15] : memref<1x1xf32, #tpu.memory_space<smem>>
    } else {
    }
    return
  }
  func.func @transform_0(%arg0: i32, %arg1: i32) -> (i32, i32) {
    %c0_i32 = arith.constant 0 : i32
    %c0_i32_0 = arith.constant 0 : i32
    return %c0_i32, %arg1 : i32, i32
  }
  func.func @transform_1(%arg0: i32, %arg1: i32) -> (i32, i32) {
    %c0_i32 = arith.constant 0 : i32
    %c0_i32_0 = arith.constant 0 : i32
    return %c0_i32, %arg1 : i32, i32
  }
  func.func @transform_2(%arg0: i32, %arg1: i32) -> (i32, i32) {
    %c0_i32 = arith.constant 0 : i32
    %c0_i32_0 = arith.constant 0 : i32
    %c0_i32_1 = arith.constant 0 : i32
    return %c0_i32, %c0_i32_0 : i32, i32
  }
}

</mosaic_0001>

<llo_original>
// kernel: tpu_custom_call.1
$region0: #{tpu_custom_call.1}
  #allocation0 [shape = 'u32[]', space=smem, size = 0x4, offset = 0x4, fixed_abs, tag = 'smem constant byte address 0x4 - core index']
  #allocation1 [shape = 'u32[144,128]{1,0:T(1,128)}', space=vmem, size = 0x12000, scoped, tag = 'internal scratch']
  #allocation2 [shape = 'f32[128,1]{1,0:T(8,128)}', space=vmem, size = 0x10000, scoped, tag = 'scratch operand']
  #allocation3 [shape = 'f32[128,1]{1,0:T(8,128)}', space=vmem, size = 0x10000, scoped, tag = 'scratch operand']
  #allocation4 [shape = 'f32[128,1]{1,0:T(8,128)}', space=vmem, size = 0x10000, scoped, tag = 'scratch operand']
  #allocation5 [shape = 'f32[2]{0:T(128)}', space=smem, size = 0x200, scoped, tag = 'scratch operand']
  %s0 = inlined_call_operand.hbm [shape: f32[128,256], index: 0, kind: input, shape index: {}]
  %s1 = inlined_call_operand.hbm [shape: f32[128,256], index: 1, kind: input, shape index: {}]
  %s2 = inlined_call_operand.hbm [shape: f32[1,1], index: 2, kind: output, shape index: {}]
  %s3 = sld [smem:[#allocation0]]
  $region69: #{tpu_custom_call.1} parent=0
    _
  %s5 = ssub.s32 1, %s3
  %s6 = scalar_select 0, %s5, %s3
  $region1: #{tpu_custom_call.1} parent=0
    #allocation6 [shape = 'u8[131072]{0}', space=vmem, size = 0x20000, scoped, tag = 'input window, operand 0, single buffered']
    #allocation7 [shape = 's32[2]{0}', space=sflag, size = 0x8, scoped, tag = 'scoped memory for tpu_custom_call.1']
    #allocation8 [shape = 's32[2]{0}', space=sflag, size = 0x8, scoped, tag = 'scoped memory for tpu_custom_call.1']
    #allocation9 [shape = 'u8[131072]{0}', space=vmem, size = 0x20000, scoped, tag = 'input window, operand 1, single buffered']
    #allocation10 [shape = 's32[1]{0}', space=sflag, size = 0x4, scoped, tag = 'scoped memory for tpu_custom_call.1']
    #allocation11 [shape = 'u8[512]{0}', space=smem, size = 0x200, scoped, tag = 'output window, operand 0, single buffered']
    %7 = vsyncpa [#allocation7], 0
    %8 = vsyncpa [#allocation10], 0
    %9 = vsyncpa [#allocation8], 0
    loop: start=0, step=1, limit=4
    $region2: #{tpu_custom_call.1} parent=1 // loop_pre_header
      _
    $region3: #{tpu_custom_call.1} parent=1 // loop_header
      %s11 = sphi 0, %s15
      %p12 = scmp.ge.s32.totalorder %s11, 4
      %s18 = sphi 0, %s30
      %s19 = sphi 0, %s26
      %s20 = sphi 0, %s18
      %s21 = sphi 0, %s19
      %s22 = sphi 0, %s20
      %s23 = sphi 0, %s21
      %s33 = sphi 0, %s35
      %s36 = sphi 0, %s33
      %s37 = sphi 0, %s36
      %s53 = sphi 0, %s37
      %s59 = sphi 0, %s61
      %s62 = sphi 0, %s59
      %s63 = sphi 0, %s62
      %s79 = sphi 0, %s63
      %s83 = sphi 0, %s83
      %s85 = sphi 0, %s83
      %s86 = sphi 0, %s85
      %s100 = sphi 0, %s86
    $region4: #{tpu_custom_call.1} parent=1 // loop_header_branch
      %14 = sbr.rel (%p12) target = $region8
    $region5: #{tpu_custom_call.1} parent=1 // loop_body
      %s16 = ssub.s32 %s11, 1
      %s17 = ssub.s32 %s11, 2
      %s24 = sadd.s32 1, %s19
      %p25 = scmp.ge.s32.totalorder %s24, 1
      %s26 = scalar_select %p25, 0, %s24
      %s27 = sadd.s32 1, %s18
      %s28 = scalar_select %p25, %s27, %s18
      %p29 = scmp.ge.s32.totalorder %s28, 2
      %s30 = scalar_select %p29, 0, %s28
      %s31 = ssub.s32 %s19, %s26
      %p32 = scmp.eq.s32.totalorder %s31, 0
      %s34 = sadd.s32 %s33, 1
      %s35 = scalar_select %p32, %s33, %s34
      %p38 = pneg %p32
      %p39 = scmp.eq.s32.totalorder %s11, 1
      %p40 = por %p38, %p39
      %p41 = scmp.ne.s32.totalorder %s33, %s36
      %p42 = scmp.eq.s32.totalorder %s11, 0
      %p43 = por %p41, %p42
      %p44 = scmp.ne.s32.totalorder %s33, %s36
      %p45 = scmp.eq.s32.totalorder %s16, 1
      %p46 = por %p44, %p45
      %p47 = scmp.ne.s32.totalorder %s36, %s37
      %p48 = scmp.eq.s32.totalorder %s16, 0
      %p49 = por %p47, %p48
      %p50 = scmp.ne.s32.totalorder %s36, %s37
      %p51 = scmp.eq.s32.totalorder %s17, 1
      %p52 = por %p50, %p51
      %p54 = scmp.ne.s32.totalorder %s37, %s53
      %p55 = scmp.eq.s32.totalorder %s17, 0
      %p56 = por %p54, %p55
      %s57 = ssub.s32 %s19, %s26
      %p58 = scmp.eq.s32.totalorder %s57, 0
      %s60 = sadd.s32 %s59, 1
      %s61 = scalar_select %p58, %s59, %s60
      %p64 = pneg %p58
      %p65 = scmp.eq.s32.totalorder %s11, 1
      %p66 = por %p64, %p65
      %p67 = scmp.ne.s32.totalorder %s59, %s62
      %p68 = scmp.eq.s32.totalorder %s11, 0
      %p69 = por %p67, %p68
      %p70 = scmp.ne.s32.totalorder %s59, %s62
      %p71 = scmp.eq.s32.totalorder %s16, 1
      %p72 = por %p70, %p71
      %p73 = scmp.ne.s32.totalorder %s62, %s63
      %p74 = scmp.eq.s32.totalorder %s16, 0
      %p75 = por %p73, %p74
      %p76 = scmp.ne.s32.totalorder %s62, %s63
      %p77 = scmp.eq.s32.totalorder %s17, 1
      %p78 = por %p76, %p77
      %p80 = scmp.ne.s32.totalorder %s63, %s79
      %p81 = scmp.eq.s32.totalorder %s17, 0
      %p82 = por %p80, %p81
      %s84 = sadd.s32 %s83, 1
      %p87 = scmp.eq.s32.totalorder %s11, 1
      %p88 = scmp.ne.s32.totalorder %s83, %s85
      %p89 = scmp.eq.s32.totalorder %s11, 0
      %p90 = por %p88, %p89
      %p91 = scmp.ne.s32.totalorder %s83, %s85
      %p92 = scmp.eq.s32.totalorder %s16, 1
      %p93 = por %p91, %p92
      %p94 = scmp.ne.s32.totalorder %s85, %s86
      %p95 = scmp.eq.s32.totalorder %s16, 0
      %p96 = por %p94, %p95
      %p97 = scmp.ne.s32.totalorder %s85, %s86
      %p98 = scmp.eq.s32.totalorder %s17, 1
      %p99 = por %p97, %p98
      %p101 = scmp.ne.s32.totalorder %s86, %s100
      %p102 = scmp.eq.s32.totalorder %s17, 0
      %p103 = por %p101, %p102
      %p104 = scmp.le.s32.totalorder 1, %s11
      %p105 = scmp.lt.s32.totalorder %s11, 3
      %p106 = pnand %p104, %p105
      %p107 = pneg %p106
      // Predicated region
      $region9: #{tpu_custom_call.1} parent=5 // pred_check
        _
      $region10: #{tpu_custom_call.1} parent=5 // pred_check_branch
        %109 = sbr.rel (%p106) target = $region12
      $region11: #{tpu_custom_call.1} parent=5 // pred_region
        %s110 = ssub.s32 %s11, 1
        // Predicated region
        $region13: #{tpu_custom_call.1} parent=11 // pred_check
          %p111 = pneg %p49
        $region14: #{tpu_custom_call.1} parent=11 // pred_check_branch
          %113 = sbr.rel (%p111) target = $region16
        $region15: #{tpu_custom_call.1} parent=11 // pred_region
          %s114 = smul.u32 2, %s21
          %s116 = ssub.s32 4096, 4096
          %117 = vsyncadd [#allocation7], %s116
          %s118 = smul.addr %s114, 128
          %s119 = scalar_lea.hbm %s0, %s118
          %s120 = sshll.u32 [#allocation6], 4
          %s121 = int_to_ptr.vmem [resolvable:$true] %s120
          %126 = dma.hbm_to_vmem [thread:$0]  %s119, 4096, %s121, [#allocation7], 256, 256, 16
        $region16: #{tpu_custom_call.1} parent=11 // pred_fallthru
          _
        // Predicated region
        $region17: #{tpu_custom_call.1} parent=11 // pred_check
          %p127 = pneg %p75
        $region18: #{tpu_custom_call.1} parent=11 // pred_check_branch
          %129 = sbr.rel (%p127) target = $region20
        $region19: #{tpu_custom_call.1} parent=11 // pred_region
          %s130 = smul.u32 2, %s21
          %s132 = ssub.s32 4096, 4096
          %133 = vsyncadd [#allocation10], %s132
          %s134 = smul.addr %s130, 128
          %s135 = scalar_lea.hbm %s1, %s134
          %s136 = sshll.u32 [#allocation9], 4
          %s137 = int_to_ptr.vmem [resolvable:$true] %s136
          %142 = dma.hbm_to_vmem [thread:$0]  %s135, 4096, %s137, [#allocation10], 256, 256, 16
        $region20: #{tpu_custom_call.1} parent=11 // pred_fallthru
          _
      $region12: #{tpu_custom_call.1} parent=5 // pred_fallthru
        _
      %p143 = scmp.lt.s32.totalorder %s11, 2
      // Predicated region
      $region21: #{tpu_custom_call.1} parent=5 // pred_check
        %p144 = pneg %p143
      $region22: #{tpu_custom_call.1} parent=5 // pred_check_branch
        %146 = sbr.rel (%p144) target = $region24
      $region23: #{tpu_custom_call.1} parent=5 // pred_region
        _
      $region24: #{tpu_custom_call.1} parent=5 // pred_fallthru
        _
      %p147 = scmp.le.s32.totalorder 1, %s11
      %p148 = scmp.lt.s32.totalorder %s11, 3
      %p149 = pnand %p147, %p148
      %p150 = pneg %p149
      // Predicated region
      $region25: #{tpu_custom_call.1} parent=5 // pred_check
        _
      $region26: #{tpu_custom_call.1} parent=5 // pred_check_branch
        %152 = sbr.rel (%p149) target = $region28
      $region27: #{tpu_custom_call.1} parent=5 // pred_region
        %s153 = ssub.s32 %s11, 1
        // Predicated region
        $region29: #{tpu_custom_call.1} parent=27 // pred_check
          %p154 = pneg %p49
        $region30: #{tpu_custom_call.1} parent=27 // pred_check_branch
          %156 = sbr.rel (%p154) target = $region32
        $region31: #{tpu_custom_call.1} parent=27 // pred_region
          %157 = dma.done [#allocation7], 4096
        $region32: #{tpu_custom_call.1} parent=27 // pred_fallthru
          _
        // Predicated region
        $region33: #{tpu_custom_call.1} parent=27 // pred_check
          %p158 = pneg %p75
        $region34: #{tpu_custom_call.1} parent=27 // pred_check_branch
          %160 = sbr.rel (%p158) target = $region36
        $region35: #{tpu_custom_call.1} parent=27 // pred_region
          %161 = dma.done [#allocation10], 4096
        $region36: #{tpu_custom_call.1} parent=27 // pred_fallthru
          _
        %p162 = pneg %p49
        %p163 = pneg %p46
        %p164 = pneg %p75
        %p165 = pneg %p72
        %p166 = pneg %p96
        %p167 = pneg %p93
        %s168 = smul.u32 2, %s21
        %s169 = smul.u32 2, %s21
        %p170 = scmp.eq.s32.totalorder %s20, 0
        %p171 = scmp.eq.s32.totalorder %s21, 0
        %p172 = pnand %p170, %p171
        %p173 = pneg %p172
        // Predicated region
        $region37: #{tpu_custom_call.1} parent=27 // pred_check
          _
        $region38: #{tpu_custom_call.1} parent=27 // pred_check_branch
          %175 = sbr.rel (%p172) target = $region40
        $region39: #{tpu_custom_call.1} parent=27 // pred_region
          %vm176 = vcmask 7168
          %177 = vst.msk [vmem:[#allocation2] sm:$0xff] %vm176, 0.0
          %178 = vst.msk [vmem:[#allocation2 + $0x8] sm:$0xff] %vm176, 0.0
          %179 = vst.msk [vmem:[#allocation2 + $0x10] sm:$0xff] %vm176, 0.0
          %180 = vst.msk [vmem:[#allocation2 + $0x18] sm:$0xff] %vm176, 0.0
          %181 = vst.msk [vmem:[#allocation2 + $0x20] sm:$0xff] %vm176, 0.0
          %182 = vst.msk [vmem:[#allocation2 + $0x28] sm:$0xff] %vm176, 0.0
          %183 = vst.msk [vmem:[#allocation2 + $0x30] sm:$0xff] %vm176, 0.0
          %184 = vst.msk [vmem:[#allocation2 + $0x38] sm:$0xff] %vm176, 0.0
          %185 = vst.msk [vmem:[#allocation2 + $0x40] sm:$0xff] %vm176, 0.0
          %186 = vst.msk [vmem:[#allocation2 + $0x48] sm:$0xff] %vm176, 0.0
          %187 = vst.msk [vmem:[#allocation2 + $0x50] sm:$0xff] %vm176, 0.0
          %188 = vst.msk [vmem:[#allocation2 + $0x58] sm:$0xff] %vm176, 0.0
          %189 = vst.msk [vmem:[#allocation2 + $0x60] sm:$0xff] %vm176, 0.0
          %190 = vst.msk [vmem:[#allocation2 + $0x68] sm:$0xff] %vm176, 0.0
          %191 = vst.msk [vmem:[#allocation2 + $0x70] sm:$0xff] %vm176, 0.0
          %192 = vst.msk [vmem:[#allocation2 + $0x78] sm:$0xff] %vm176, 0.0
          %193 = vst.msk [vmem:[#allocation3] sm:$0xff] %vm176, 0.0
          %194 = vst.msk [vmem:[#allocation3 + $0x8] sm:$0xff] %vm176, 0.0
          %195 = vst.msk [vmem:[#allocation3 + $0x10] sm:$0xff] %vm176, 0.0
          %196 = vst.msk [vmem:[#allocation3 + $0x18] sm:$0xff] %vm176, 0.0
          %197 = vst.msk [vmem:[#allocation3 + $0x20] sm:$0xff] %vm176, 0.0
          %198 = vst.msk [vmem:[#allocation3 + $0x28] sm:$0xff] %vm176, 0.0
          %199 = vst.msk [vmem:[#allocation3 + $0x30] sm:$0xff] %vm176, 0.0
          %200 = vst.msk [vmem:[#allocation3 + $0x38] sm:$0xff] %vm176, 0.0
          %201 = vst.msk [vmem:[#allocation3 + $0x40] sm:$0xff] %vm176, 0.0
          %202 = vst.msk [vmem:[#allocation3 + $0x48] sm:$0xff] %vm176, 0.0
          %203 = vst.msk [vmem:[#allocation3 + $0x50] sm:$0xff] %vm176, 0.0
          %204 = vst.msk [vmem:[#allocation3 + $0x58] sm:$0xff] %vm176, 0.0
          %205 = vst.msk [vmem:[#allocation3 + $0x60] sm:$0xff] %vm176, 0.0
          %206 = vst.msk [vmem:[#allocation3 + $0x68] sm:$0xff] %vm176, 0.0
          %207 = vst.msk [vmem:[#allocation3 + $0x70] sm:$0xff] %vm176, 0.0
          %208 = vst.msk [vmem:[#allocation3 + $0x78] sm:$0xff] %vm176, 0.0
          %209 = vst.msk [vmem:[#allocation4] sm:$0xff] %vm176, 0.0
          %210 = vst.msk [vmem:[#allocation4 + $0x8] sm:$0xff] %vm176, 0.0
          %211 = vst.msk [vmem:[#allocation4 + $0x10] sm:$0xff] %vm176, 0.0
          %212 = vst.msk [vmem:[#allocation4 + $0x18] sm:$0xff] %vm176, 0.0
          %213 = vst.msk [vmem:[#allocation4 + $0x20] sm:$0xff] %vm176, 0.0
          %214 = vst.msk [vmem:[#allocation4 + $0x28] sm:$0xff] %vm176, 0.0
          %215 = vst.msk [vmem:[#allocation4 + $0x30] sm:$0xff] %vm176, 0.0
          %216 = vst.msk [vmem:[#allocation4 + $0x38] sm:$0xff] %vm176, 0.0
          %217 = vst.msk [vmem:[#allocation4 + $0x40] sm:$0xff] %vm176, 0.0
          %218 = vst.msk [vmem:[#allocation4 + $0x48] sm:$0xff] %vm176, 0.0
          %219 = vst.msk [vmem:[#allocation4 + $0x50] sm:$0xff] %vm176, 0.0
          %220 = vst.msk [vmem:[#allocation4 + $0x58] sm:$0xff] %vm176, 0.0
          %221 = vst.msk [vmem:[#allocation4 + $0x60] sm:$0xff] %vm176, 0.0
          %222 = vst.msk [vmem:[#allocation4 + $0x68] sm:$0xff] %vm176, 0.0
          %223 = vst.msk [vmem:[#allocation4 + $0x70] sm:$0xff] %vm176, 0.0
          %224 = vst.msk [vmem:[#allocation4 + $0x78] sm:$0xff] %vm176, 0.0
        $region40: #{tpu_custom_call.1} parent=27 // pred_fallthru
          _
        // Predicated region
        $region41: #{tpu_custom_call.1} parent=27 // pred_check
          %p225 = pneg %p170
        $region42: #{tpu_custom_call.1} parent=27 // pred_check_branch
          %227 = sbr.rel (%p225) target = $region44
        $region43: #{tpu_custom_call.1} parent=27 // pred_region
          %v228 = vld [vmem:[#allocation6] sm:$0xff]
          %v229 = vld [vmem:[#allocation6 + $0x8] sm:$0xff]
          %v230 = vld [vmem:[#allocation6 + $0x10] sm:$0xff]
          %v231 = vld [vmem:[#allocation6 + $0x18] sm:$0xff]
          %v232 = vld [vmem:[#allocation6 + $0x20] sm:$0xff]
          %v233 = vld [vmem:[#allocation6 + $0x28] sm:$0xff]
          %v234 = vld [vmem:[#allocation6 + $0x30] sm:$0xff]
          %v235 = vld [vmem:[#allocation6 + $0x38] sm:$0xff]
          %v236 = vld [vmem:[#allocation6 + $0x40] sm:$0xff]
          %v237 = vld [vmem:[#allocation6 + $0x48] sm:$0xff]
          %v238 = vld [vmem:[#allocation6 + $0x50] sm:$0xff]
          %v239 = vld [vmem:[#allocation6 + $0x58] sm:$0xff]
          %v240 = vld [vmem:[#allocation6 + $0x60] sm:$0xff]
          %v241 = vld [vmem:[#allocation6 + $0x68] sm:$0xff]
          %v242 = vld [vmem:[#allocation6 + $0x70] sm:$0xff]
          %v243 = vld [vmem:[#allocation6 + $0x78] sm:$0xff]
          %v244 = vld [vmem:[#allocation6 + $0x80] sm:$0xff]
          %v245 = vld [vmem:[#allocation6 + $0x88] sm:$0xff]
          %v246 = vld [vmem:[#allocation6 + $0x90] sm:$0xff]
          %v247 = vld [vmem:[#allocation6 + $0x98] sm:$0xff]
          %v248 = vld [vmem:[#allocation6 + $0xa0] sm:$0xff]
          %v249 = vld [vmem:[#allocation6 + $0xa8] sm:$0xff]
          %v250 = vld [vmem:[#allocation6 + $0xb0] sm:$0xff]
          %v251 = vld [vmem:[#allocation6 + $0xb8] sm:$0xff]
          %v252 = vld [vmem:[#allocation6 + $0xc0] sm:$0xff]
          %v253 = vld [vmem:[#allocation6 + $0xc8] sm:$0xff]
          %v254 = vld [vmem:[#allocation6 + $0xd0] sm:$0xff]
          %v255 = vld [vmem:[#allocation6 + $0xd8] sm:$0xff]
          %v256 = vld [vmem:[#allocation6 + $0xe0] sm:$0xff]
          %v257 = vld [vmem:[#allocation6 + $0xe8] sm:$0xff]
          %v258 = vld [vmem:[#allocation6 + $0xf0] sm:$0xff]
          %v259 = vld [vmem:[#allocation6 + $0xf8] sm:$0xff]
          %v260 = vld [vmem:[#allocation9] sm:$0xff]
          %v261 = vld [vmem:[#allocation9 + $0x8] sm:$0xff]
          %v262 = vld [vmem:[#allocation9 + $0x10] sm:$0xff]
          %v263 = vld [vmem:[#allocation9 + $0x18] sm:$0xff]
          %v264 = vld [vmem:[#allocation9 + $0x20] sm:$0xff]
          %v265 = vld [vmem:[#allocation9 + $0x28] sm:$0xff]
          %v266 = vld [vmem:[#allocation9 + $0x30] sm:$0xff]
          %v267 = vld [vmem:[#allocation9 + $0x38] sm:$0xff]
          %v268 = vld [vmem:[#allocation9 + $0x40] sm:$0xff]
          %v269 = vld [vmem:[#allocation9 + $0x48] sm:$0xff]
          %v270 = vld [vmem:[#allocation9 + $0x50] sm:$0xff]
          %v271 = vld [vmem:[#allocation9 + $0x58] sm:$0xff]
          %v272 = vld [vmem:[#allocation9 + $0x60] sm:$0xff]
          %v273 = vld [vmem:[#allocation9 + $0x68] sm:$0xff]
          %v274 = vld [vmem:[#allocation9 + $0x70] sm:$0xff]
          %v275 = vld [vmem:[#allocation9 + $0x78] sm:$0xff]
          %v276 = vld [vmem:[#allocation9 + $0x80] sm:$0xff]
          %v277 = vld [vmem:[#allocation9 + $0x88] sm:$0xff]
          %v278 = vld [vmem:[#allocation9 + $0x90] sm:$0xff]
          %v279 = vld [vmem:[#allocation9 + $0x98] sm:$0xff]
          %v280 = vld [vmem:[#allocation9 + $0xa0] sm:$0xff]
          %v281 = vld [vmem:[#allocation9 + $0xa8] sm:$0xff]
          %v282 = vld [vmem:[#allocation9 + $0xb0] sm:$0xff]
          %v283 = vld [vmem:[#allocation9 + $0xb8] sm:$0xff]
          %v284 = vld [vmem:[#allocation9 + $0xc0] sm:$0xff]
          %v285 = vld [vmem:[#allocation9 + $0xc8] sm:$0xff]
          %v286 = vld [vmem:[#allocation9 + $0xd0] sm:$0xff]
          %v287 = vld [vmem:[#allocation9 + $0xd8] sm:$0xff]
          %v288 = vld [vmem:[#allocation9 + $0xe0] sm:$0xff]
          %v289 = vld [vmem:[#allocation9 + $0xe8] sm:$0xff]
          %v290 = vld [vmem:[#allocation9 + $0xf0] sm:$0xff]
          %v291 = vld [vmem:[#allocation9 + $0xf8] sm:$0xff]
          %v292 = vmul.f32 %v228, %v228
          %v293 = vmul.f32 %v229, %v229
          %v294 = vmul.f32 %v230, %v230
          %v295 = vmul.f32 %v231, %v231
          %v296 = vmul.f32 %v232, %v232
          %v297 = vmul.f32 %v233, %v233
          %v298 = vmul.f32 %v234, %v234
          %v299 = vmul.f32 %v235, %v235
          %v300 = vmul.f32 %v236, %v236
          %v301 = vmul.f32 %v237, %v237
          %v302 = vmul.f32 %v238, %v238
          %v303 = vmul.f32 %v239, %v239
          %v304 = vmul.f32 %v240, %v240
          %v305 = vmul.f32 %v241, %v241
          %v306 = vmul.f32 %v242, %v242
          %v307 = vmul.f32 %v243, %v243
          %v308 = vmul.f32 %v244, %v244
          %v309 = vmul.f32 %v245, %v245
          %v310 = vmul.f32 %v246, %v246
          %v311 = vmul.f32 %v247, %v247
          %v312 = vmul.f32 %v248, %v248
          %v313 = vmul.f32 %v249, %v249
          %v314 = vmul.f32 %v250, %v250
          %v315 = vmul.f32 %v251, %v251
          %v316 = vmul.f32 %v252, %v252
          %v317 = vmul.f32 %v253, %v253
          %v318 = vmul.f32 %v254, %v254
          %v319 = vmul.f32 %v255, %v255
          %v320 = vmul.f32 %v256, %v256
          %v321 = vmul.f32 %v257, %v257
          %v322 = vmul.f32 %v258, %v258
          %v323 = vmul.f32 %v259, %v259
          %v324 = vmul.f32 %v260, %v260
          %v325 = vmul.f32 %v261, %v261
          %v326 = vmul.f32 %v262, %v262
          %v327 = vmul.f32 %v263, %v263
          %v328 = vmul.f32 %v264, %v264
          %v329 = vmul.f32 %v265, %v265
          %v330 = vmul.f32 %v266, %v266
          %v331 = vmul.f32 %v267, %v267
          %v332 = vmul.f32 %v268, %v268
          %v333 = vmul.f32 %v269, %v269
          %v334 = vmul.f32 %v270, %v270
          %v335 = vmul.f32 %v271, %v271
          %v336 = vmul.f32 %v272, %v272
          %v337 = vmul.f32 %v273, %v273
          %v338 = vmul.f32 %v274, %v274
          %v339 = vmul.f32 %v275, %v275
          %v340 = vmul.f32 %v276, %v276
          %v341 = vmul.f32 %v277, %v277
          %v342 = vmul.f32 %v278, %v278
          %v343 = vmul.f32 %v279, %v279
          %v344 = vmul.f32 %v280, %v280
          %v345 = vmul.f32 %v281, %v281
          %v346 = vmul.f32 %v282, %v282
          %v347 = vmul.f32 %v283, %v283
          %v348 = vmul.f32 %v284, %v284
          %v349 = vmul.f32 %v285, %v285
          %v350 = vmul.f32 %v286, %v286
          %v351 = vmul.f32 %v287, %v287
          %v352 = vmul.f32 %v288, %v288
          %v353 = vmul.f32 %v289, %v289
          %v354 = vmul.f32 %v290, %v290
          %v355 = vmul.f32 %v291, %v291
          %v356 = vld [vmem:[#allocation2] sm:$0xff]
          %v357 = vld [vmem:[#allocation2 + $0x8] sm:$0xff]
          %v358 = vld [vmem:[#allocation2 + $0x10] sm:$0xff]
          %v359 = vld [vmem:[#allocation2 + $0x18] sm:$0xff]
          %v360 = vld [vmem:[#allocation2 + $0x20] sm:$0xff]
          %v361 = vld [vmem:[#allocation2 + $0x28] sm:$0xff]
          %v362 = vld [vmem:[#allocation2 + $0x30] sm:$0xff]
          %v363 = vld [vmem:[#allocation2 + $0x38] sm:$0xff]
          %v364 = vld [vmem:[#allocation2 + $0x40] sm:$0xff]
          %v365 = vld [vmem:[#allocation2 + $0x48] sm:$0xff]
          %v366 = vld [vmem:[#allocation2 + $0x50] sm:$0xff]
          %v367 = vld [vmem:[#allocation2 + $0x58] sm:$0xff]
          %v368 = vld [vmem:[#allocation2 + $0x60] sm:$0xff]
          %v369 = vld [vmem:[#allocation2 + $0x68] sm:$0xff]
          %v370 = vld [vmem:[#allocation2 + $0x70] sm:$0xff]
          %v371 = vld [vmem:[#allocation2 + $0x78] sm:$0xff]
          %v372 = vmax.f32 %v292, %v293
          %373 = vmax.xlane.f32.xlu0 %v372
          %v374 = vpop.xlane.xlu0 %373
          %v375 = vmax.f32 %v294, %v295
          %376 = vmax.xlane.f32.xlu0 %v375
          %v377 = vpop.xlane.xlu0 %376
          %v378 = vmax.f32 %v296, %v297
          %379 = vmax.xlane.f32.xlu0 %v378
          %v380 = vpop.xlane.xlu0 %379
          %v381 = vmax.f32 %v298, %v299
          %382 = vmax.xlane.f32.xlu0 %v381
          %v383 = vpop.xlane.xlu0 %382
          %v384 = vmax.f32 %v300, %v301
          %385 = vmax.xlane.f32.xlu0 %v384
          %v386 = vpop.xlane.xlu0 %385
          %v387 = vmax.f32 %v302, %v303
          %388 = vmax.xlane.f32.xlu0 %v387
          %v389 = vpop.xlane.xlu0 %388
          %v390 = vmax.f32 %v304, %v305
          %391 = vmax.xlane.f32.xlu0 %v390
          %v392 = vpop.xlane.xlu0 %391
          %v393 = vmax.f32 %v306, %v307
          %394 = vmax.xlane.f32.xlu0 %v393
          %v395 = vpop.xlane.xlu0 %394
          %v396 = vmax.f32 %v308, %v309
          %397 = vmax.xlane.f32.xlu0 %v396
          %v398 = vpop.xlane.xlu0 %397
          %v399 = vmax.f32 %v310, %v311
          %400 = vmax.xlane.f32.xlu0 %v399
          %v401 = vpop.xlane.xlu0 %400
          %v402 = vmax.f32 %v312, %v313
          %403 = vmax.xlane.f32.xlu0 %v402
          %v404 = vpop.xlane.xlu0 %403
          %v405 = vmax.f32 %v314, %v315
          %406 = vmax.xlane.f32.xlu0 %v405
          %v407 = vpop.xlane.xlu0 %406
          %v408 = vmax.f32 %v316, %v317
          %409 = vmax.xlane.f32.xlu0 %v408
          %v410 = vpop.xlane.xlu0 %409
          %v411 = vmax.f32 %v318, %v319
          %412 = vmax.xlane.f32.xlu0 %v411
          %v413 = vpop.xlane.xlu0 %412
          %v414 = vmax.f32 %v320, %v321
          %415 = vmax.xlane.f32.xlu0 %v414
          %v416 = vpop.xlane.xlu0 %415
          %v417 = vmax.f32 %v322, %v323
          %418 = vmax.xlane.f32.xlu0 %v417
          %v419 = vpop.xlane.xlu0 %418
          %v420 = vmax.f32 %v356, %v374
          %v421 = vmax.f32 %v357, %v377
          %v422 = vmax.f32 %v358, %v380
          %v423 = vmax.f32 %v359, %v383
          %v424 = vmax.f32 %v360, %v386
          %v425 = vmax.f32 %v361, %v389
          %v426 = vmax.f32 %v362, %v392
          %v427 = vmax.f32 %v363, %v395
          %v428 = vmax.f32 %v364, %v398
          %v429 = vmax.f32 %v365, %v401
          %v430 = vmax.f32 %v366, %v404
          %v431 = vmax.f32 %v367, %v407
          %v432 = vmax.f32 %v368, %v410
          %v433 = vmax.f32 %v369, %v413
          %v434 = vmax.f32 %v370, %v416
          %v435 = vmax.f32 %v371, %v419
          %vm436 = vcmask 7168
          %437 = vst.msk [vmem:[#allocation2] sm:$0xff] %vm436, %v420
          %438 = vst.msk [vmem:[#allocation2 + $0x8] sm:$0xff] %vm436, %v421
          %439 = vst.msk [vmem:[#allocation2 + $0x10] sm:$0xff] %vm436, %v422
          %440 = vst.msk [vmem:[#allocation2 + $0x18] sm:$0xff] %vm436, %v423
          %441 = vst.msk [vmem:[#allocation2 + $0x20] sm:$0xff] %vm436, %v424
          %442 = vst.msk [vmem:[#allocation2 + $0x28] sm:$0xff] %vm436, %v425
          %443 = vst.msk [vmem:[#allocation2 + $0x30] sm:$0xff] %vm436, %v426
          %444 = vst.msk [vmem:[#allocation2 + $0x38] sm:$0xff] %vm436, %v427
          %445 = vst.msk [vmem:[#allocation2 + $0x40] sm:$0xff] %vm436, %v428
          %446 = vst.msk [vmem:[#allocation2 + $0x48] sm:$0xff] %vm436, %v429
          %447 = vst.msk [vmem:[#allocation2 + $0x50] sm:$0xff] %vm436, %v430
          %448 = vst.msk [vmem:[#allocation2 + $0x58] sm:$0xff] %vm436, %v431
          %449 = vst.msk [vmem:[#allocation2 + $0x60] sm:$0xff] %vm436, %v432
          %450 = vst.msk [vmem:[#allocation2 + $0x68] sm:$0xff] %vm436, %v433
          %451 = vst.msk [vmem:[#allocation2 + $0x70] sm:$0xff] %vm436, %v434
          %452 = vst.msk [vmem:[#allocation2 + $0x78] sm:$0xff] %vm436, %v435
          %v453 = vld [vmem:[#allocation3] sm:$0xff]
          %v454 = vld [vmem:[#allocation3 + $0x8] sm:$0xff]
          %v455 = vld [vmem:[#allocation3 + $0x10] sm:$0xff]
          %v456 = vld [vmem:[#allocation3 + $0x18] sm:$0xff]
          %v457 = vld [vmem:[#allocation3 + $0x20] sm:$0xff]
          %v458 = vld [vmem:[#allocation3 + $0x28] sm:$0xff]
          %v459 = vld [vmem:[#allocation3 + $0x30] sm:$0xff]
          %v460 = vld [vmem:[#allocation3 + $0x38] sm:$0xff]
          %v461 = vld [vmem:[#allocation3 + $0x40] sm:$0xff]
          %v462 = vld [vmem:[#allocation3 + $0x48] sm:$0xff]
          %v463 = vld [vmem:[#allocation3 + $0x50] sm:$0xff]
          %v464 = vld [vmem:[#allocation3 + $0x58] sm:$0xff]
          %v465 = vld [vmem:[#allocation3 + $0x60] sm:$0xff]
          %v466 = vld [vmem:[#allocation3 + $0x68] sm:$0xff]
          %v467 = vld [vmem:[#allocation3 + $0x70] sm:$0xff]
          %v468 = vld [vmem:[#allocation3 + $0x78] sm:$0xff]
          %v469 = vmax.f32 %v324, %v325
          %470 = vmax.xlane.f32.xlu0 %v469
          %v471 = vpop.xlane.xlu0 %470
          %v472 = vmax.f32 %v326, %v327
          %473 = vmax.xlane.f32.xlu0 %v472
          %v474 = vpop.xlane.xlu0 %473
          %v475 = vmax.f32 %v328, %v329
          %476 = vmax.xlane.f32.xlu0 %v475
          %v477 = vpop.xlane.xlu0 %476
          %v478 = vmax.f32 %v330, %v331
          %479 = vmax.xlane.f32.xlu0 %v478
          %v480 = vpop.xlane.xlu0 %479
          %v481 = vmax.f32 %v332, %v333
          %482 = vmax.xlane.f32.xlu0 %v481
          %v483 = vpop.xlane.xlu0 %482
          %v484 = vmax.f32 %v334, %v335
          %485 = vmax.xlane.f32.xlu0 %v484
          %v486 = vpop.xlane.xlu0 %485
          %v487 = vmax.f32 %v336, %v337
          %488 = vmax.xlane.f32.xlu0 %v487
          %v489 = vpop.xlane.xlu0 %488
          %v490 = vmax.f32 %v338, %v339
          %491 = vmax.xlane.f32.xlu0 %v490
          %v492 = vpop.xlane.xlu0 %491
          %v493 = vmax.f32 %v340, %v341
          %494 = vmax.xlane.f32.xlu0 %v493
          %v495 = vpop.xlane.xlu0 %494
          %v496 = vmax.f32 %v342, %v343
          %497 = vmax.xlane.f32.xlu0 %v496
          %v498 = vpop.xlane.xlu0 %497
          %v499 = vmax.f32 %v344, %v345
          %500 = vmax.xlane.f32.xlu0 %v499
          %v501 = vpop.xlane.xlu0 %500
          %v502 = vmax.f32 %v346, %v347
          %503 = vmax.xlane.f32.xlu0 %v502
          %v504 = vpop.xlane.xlu0 %503
          %v505 = vmax.f32 %v348, %v349
          %506 = vmax.xlane.f32.xlu0 %v505
          %v507 = vpop.xlane.xlu0 %506
          %v508 = vmax.f32 %v350, %v351
          %509 = vmax.xlane.f32.xlu0 %v508
          %v510 = vpop.xlane.xlu0 %509
          %v511 = vmax.f32 %v352, %v353
          %512 = vmax.xlane.f32.xlu0 %v511
          %v513 = vpop.xlane.xlu0 %512
          %v514 = vmax.f32 %v354, %v355
          %515 = vmax.xlane.f32.xlu0 %v514
          %v516 = vpop.xlane.xlu0 %515
          %v517 = vmax.f32 %v453, %v471
          %v518 = vmax.f32 %v454, %v474
          %v519 = vmax.f32 %v455, %v477
          %v520 = vmax.f32 %v456, %v480
          %v521 = vmax.f32 %v457, %v483
          %v522 = vmax.f32 %v458, %v486
          %v523 = vmax.f32 %v459, %v489
          %v524 = vmax.f32 %v460, %v492
          %v525 = vmax.f32 %v461, %v495
          %v526 = vmax.f32 %v462, %v498
          %v527 = vmax.f32 %v463, %v501
          %v528 = vmax.f32 %v464, %v504
          %v529 = vmax.f32 %v465, %v507
          %v530 = vmax.f32 %v466, %v510
          %v531 = vmax.f32 %v467, %v513
          %v532 = vmax.f32 %v468, %v516
          %533 = vst.msk [vmem:[#allocation3] sm:$0xff] %vm436, %v517
          %534 = vst.msk [vmem:[#allocation3 + $0x8] sm:$0xff] %vm436, %v518
          %535 = vst.msk [vmem:[#allocation3 + $0x10] sm:$0xff] %vm436, %v519
          %536 = vst.msk [vmem:[#allocation3 + $0x18] sm:$0xff] %vm436, %v520
          %537 = vst.msk [vmem:[#allocation3 + $0x20] sm:$0xff] %vm436, %v521
          %538 = vst.msk [vmem:[#allocation3 + $0x28] sm:$0xff] %vm436, %v522
          %539 = vst.msk [vmem:[#allocation3 + $0x30] sm:$0xff] %vm436, %v523
          %540 = vst.msk [vmem:[#allocation3 + $0x38] sm:$0xff] %vm436, %v524
          %541 = vst.msk [vmem:[#allocation3 + $0x40] sm:$0xff] %vm436, %v525
          %542 = vst.msk [vmem:[#allocation3 + $0x48] sm:$0xff] %vm436, %v526
          %543 = vst.msk [vmem:[#allocation3 + $0x50] sm:$0xff] %vm436, %v527
          %544 = vst.msk [vmem:[#allocation3 + $0x58] sm:$0xff] %vm436, %v528
          %545 = vst.msk [vmem:[#allocation3 + $0x60] sm:$0xff] %vm436, %v529
          %546 = vst.msk [vmem:[#allocation3 + $0x68] sm:$0xff] %vm436, %v530
          %547 = vst.msk [vmem:[#allocation3 + $0x70] sm:$0xff] %vm436, %v531
          %548 = vst.msk [vmem:[#allocation3 + $0x78] sm:$0xff] %vm436, %v532
        $region44: #{tpu_custom_call.1} parent=27 // pred_fallthru
          _
        %p549 = scmp.eq.s32.totalorder %s20, 1
        %p550 = pnand %p549, %p171
        %p551 = pneg %p550
        // Predicated region
        $region45: #{tpu_custom_call.1} parent=27 // pred_check
          _
        $region46: #{tpu_custom_call.1} parent=27 // pred_check_branch
          %553 = sbr.rel (%p550) target = $region48
        $region47: #{tpu_custom_call.1} parent=27 // pred_region
          %v554 = vld [vmem:[#allocation2] sm:$0xff]
          %v555 = vld [vmem:[#allocation2 + $0x8] sm:$0xff]
          %v556 = vld [vmem:[#allocation2 + $0x10] sm:$0xff]
          %v557 = vld [vmem:[#allocation2 + $0x18] sm:$0xff]
          %v558 = vld [vmem:[#allocation2 + $0x20] sm:$0xff]
          %v559 = vld [vmem:[#allocation2 + $0x28] sm:$0xff]
          %v560 = vld [vmem:[#allocation2 + $0x30] sm:$0xff]
          %v561 = vld [vmem:[#allocation2 + $0x38] sm:$0xff]
          %v562 = vld [vmem:[#allocation2 + $0x40] sm:$0xff]
          %v563 = vld [vmem:[#allocation2 + $0x48] sm:$0xff]
          %v564 = vld [vmem:[#allocation2 + $0x50] sm:$0xff]
          %v565 = vld [vmem:[#allocation2 + $0x58] sm:$0xff]
          %v566 = vld [vmem:[#allocation2 + $0x60] sm:$0xff]
          %v567 = vld [vmem:[#allocation2 + $0x68] sm:$0xff]
          %v568 = vld [vmem:[#allocation2 + $0x70] sm:$0xff]
          %v569 = vld [vmem:[#allocation2 + $0x78] sm:$0xff]
          %vm570 = vcmask 7168
          %v571 = vsel %vm570, %v554, -inf
          %v572 = vsel %vm570, %v555, -inf
          %v573 = vsel %vm570, %v556, -inf
          %v574 = vsel %vm570, %v557, -inf
          %v575 = vsel %vm570, %v558, -inf
          %v576 = vmax.f32 %v571, %v575
          %v577 = vsel %vm570, %v559, -inf
          %v578 = vmax.f32 %v572, %v577
          %v579 = vsel %vm570, %v560, -inf
          %v580 = vmax.f32 %v573, %v579
          %v581 = vsel %vm570, %v561, -inf
          %v582 = vmax.f32 %v574, %v581
          %v583 = vsel %vm570, %v562, -inf
          %v584 = vmax.f32 %v576, %v583
          %v585 = vsel %vm570, %v563, -inf
          %v586 = vmax.f32 %v578, %v585
          %v587 = vsel %vm570, %v564, -inf
          %v588 = vmax.f32 %v580, %v587
          %v589 = vsel %vm570, %v565, -inf
          %v590 = vmax.f32 %v582, %v589
          %v591 = vsel %vm570, %v566, -inf
          %v592 = vmax.f32 %v584, %v591
          %v593 = vsel %vm570, %v567, -inf
          %v594 = vmax.f32 %v586, %v593
          %v595 = vsel %vm570, %v568, -inf
          %v596 = vmax.f32 %v588, %v595
          %v597 = vsel %vm570, %v569, -inf
          %v598 = vmax.f32 %v590, %v597
          %v599 = vmax.f32 %v592, %v594
          %v600 = vmax.f32 %v596, %v598
          %v601 = vmax.f32 %v599, %v600
          %602 = vmax.xlane.f32.xlu0 %v601
          %v603 = vpop.xlane.xlu0 %602
          %v604 = vrot.slane %v603, 4
          %v605 = vmax.f32 %v603, %v604
          %v606 = vrot.slane %v605, 2
          %v607 = vmax.f32 %v605, %v606
          %v608 = vrot.slane %v607, 1
          %v609 = vmax.f32 %v607, %v608
          %s610 = vtos %v609
          %s611 = smul.f32 %s610, 1e-08
          %s612 = smax.f32 %s611, 1e-14
          %s613 = scalar_lea.smem [#allocation5], 0
          %614 = sst [smem:[%s613]] %s612
          %v615 = vld [vmem:[#allocation3] sm:$0xff]
          %v616 = vld [vmem:[#allocation3 + $0x8] sm:$0xff]
          %v617 = vld [vmem:[#allocation3 + $0x10] sm:$0xff]
          %v618 = vld [vmem:[#allocation3 + $0x18] sm:$0xff]
          %v619 = vld [vmem:[#allocation3 + $0x20] sm:$0xff]
          %v620 = vld [vmem:[#allocation3 + $0x28] sm:$0xff]
          %v621 = vld [vmem:[#allocation3 + $0x30] sm:$0xff]
          %v622 = vld [vmem:[#allocation3 + $0x38] sm:$0xff]
          %v623 = vld [vmem:[#allocation3 + $0x40] sm:$0xff]
          %v624 = vld [vmem:[#allocation3 + $0x48] sm:$0xff]
          %v625 = vld [vmem:[#allocation3 + $0x50] sm:$0xff]
          %v626 = vld [vmem:[#allocation3 + $0x58] sm:$0xff]
          %v627 = vld [vmem:[#allocation3 + $0x60] sm:$0xff]
          %v628 = vld [vmem:[#allocation3 + $0x68] sm:$0xff]
          %v629 = vld [vmem:[#allocation3 + $0x70] sm:$0xff]
          %v630 = vld [vmem:[#allocation3 + $0x78] sm:$0xff]
          %v631 = vsel %vm570, %v615, -inf
          %v632 = vsel %vm570, %v616, -inf
          %v633 = vsel %vm570, %v617, -inf
          %v634 = vsel %vm570, %v618, -inf
          %v635 = vsel %vm570, %v619, -inf
          %v636 = vmax.f32 %v631, %v635
          %v637 = vsel %vm570, %v620, -inf
          %v638 = vmax.f32 %v632, %v637
          %v639 = vsel %vm570, %v621, -inf
          %v640 = vmax.f32 %v633, %v639
          %v641 = vsel %vm570, %v622, -inf
          %v642 = vmax.f32 %v634, %v641
          %v643 = vsel %vm570, %v623, -inf
          %v644 = vmax.f32 %v636, %v643
          %v645 = vsel %vm570, %v624, -inf
          %v646 = vmax.f32 %v638, %v645
          %v647 = vsel %vm570, %v625, -inf
          %v648 = vmax.f32 %v640, %v647
          %v649 = vsel %vm570, %v626, -inf
          %v650 = vmax.f32 %v642, %v649
          %v651 = vsel %vm570, %v627, -inf
          %v652 = vmax.f32 %v644, %v651
          %v653 = vsel %vm570, %v628, -inf
          %v654 = vmax.f32 %v646, %v653
          %v655 = vsel %vm570, %v629, -inf
          %v656 = vmax.f32 %v648, %v655
          %v657 = vsel %vm570, %v630, -inf
          %v658 = vmax.f32 %v650, %v657
          %v659 = vmax.f32 %v652, %v654
          %v660 = vmax.f32 %v656, %v658
          %v661 = vmax.f32 %v659, %v660
          %662 = vmax.xlane.f32.xlu0 %v661
          %v663 = vpop.xlane.xlu0 %662
          %v664 = vrot.slane %v663, 4
          %v665 = vmax.f32 %v663, %v664
          %v666 = vrot.slane %v665, 2
          %v667 = vmax.f32 %v665, %v666
          %v668 = vrot.slane %v667, 1
          %v669 = vmax.f32 %v667, %v668
          %s670 = vtos %v669
          %s671 = smul.f32 %s670, 1e-08
          %s672 = smax.f32 %s671, 1e-14
          %s673 = scalar_lea.smem [#allocation5], 1
          %674 = sst [smem:[%s673]] %s672
        $region48: #{tpu_custom_call.1} parent=27 // pred_fallthru
          _
        // Predicated region
        $region49: #{tpu_custom_call.1} parent=27 // pred_check
          %p675 = pneg %p549
        $region50: #{tpu_custom_call.1} parent=27 // pred_check_branch
          %677 = sbr.rel (%p675) target = $region52
        $region51: #{tpu_custom_call.1} parent=27 // pred_region
          %s678 = sld [smem:[#allocation5]]
          %s679 = sld [smem:[#allocation5 + $0x1]]
          %v680 = vld [vmem:[#allocation6] sm:$0xff]
          %v681 = vld [vmem:[#allocation6 + $0x8] sm:$0xff]
          %v682 = vld [vmem:[#allocation6 + $0x10] sm:$0xff]
          %v683 = vld [vmem:[#allocation6 + $0x18] sm:$0xff]
          %v684 = vld [vmem:[#allocation6 + $0x20] sm:$0xff]
          %v685 = vld [vmem:[#allocation6 + $0x28] sm:$0xff]
          %v686 = vld [vmem:[#allocation6 + $0x30] sm:$0xff]
          %v687 = vld [vmem:[#allocation6 + $0x38] sm:$0xff]
          %v688 = vld [vmem:[#allocation6 + $0x40] sm:$0xff]
          %v689 = vld [vmem:[#allocation6 + $0x48] sm:$0xff]
          %v690 = vld [vmem:[#allocation6 + $0x50] sm:$0xff]
          %v691 = vld [vmem:[#allocation6 + $0x58] sm:$0xff]
          %v692 = vld [vmem:[#allocation6 + $0x60] sm:$0xff]
          %v693 = vld [vmem:[#allocation6 + $0x68] sm:$0xff]
          %v694 = vld [vmem:[#allocation6 + $0x70] sm:$0xff]
          %v695 = vld [vmem:[#allocation6 + $0x78] sm:$0xff]
          %v696 = vld [vmem:[#allocation6 + $0x80] sm:$0xff]
          %v697 = vld [vmem:[#allocation6 + $0x88] sm:$0xff]
          %v698 = vld [vmem:[#allocation6 + $0x90] sm:$0xff]
          %v699 = vld [vmem:[#allocation6 + $0x98] sm:$0xff]
          %v700 = vld [vmem:[#allocation6 + $0xa0] sm:$0xff]
          %v701 = vld [vmem:[#allocation6 + $0xa8] sm:$0xff]
          %v702 = vld [vmem:[#allocation6 + $0xb0] sm:$0xff]
          %v703 = vld [vmem:[#allocation6 + $0xb8] sm:$0xff]
          %v704 = vld [vmem:[#allocation6 + $0xc0] sm:$0xff]
          %v705 = vld [vmem:[#allocation6 + $0xc8] sm:$0xff]
          %v706 = vld [vmem:[#allocation6 + $0xd0] sm:$0xff]
          %v707 = vld [vmem:[#allocation6 + $0xd8] sm:$0xff]
          %v708 = vld [vmem:[#allocation6 + $0xe0] sm:$0xff]
          %v709 = vld [vmem:[#allocation6 + $0xe8] sm:$0xff]
          %v710 = vld [vmem:[#allocation6 + $0xf0] sm:$0xff]
          %v711 = vld [vmem:[#allocation6 + $0xf8] sm:$0xff]
          %v712 = vld [vmem:[#allocation9] sm:$0xff]
          %v713 = vld [vmem:[#allocation9 + $0x8] sm:$0xff]
          %v714 = vld [vmem:[#allocation9 + $0x10] sm:$0xff]
          %v715 = vld [vmem:[#allocation9 + $0x18] sm:$0xff]
          %v716 = vld [vmem:[#allocation9 + $0x20] sm:$0xff]
          %v717 = vld [vmem:[#allocation9 + $0x28] sm:$0xff]
          %v718 = vld [vmem:[#allocation9 + $0x30] sm:$0xff]
          %v719 = vld [vmem:[#allocation9 + $0x38] sm:$0xff]
          %v720 = vld [vmem:[#allocation9 + $0x40] sm:$0xff]
          %v721 = vld [vmem:[#allocation9 + $0x48] sm:$0xff]
          %v722 = vld [vmem:[#allocation9 + $0x50] sm:$0xff]
          %v723 = vld [vmem:[#allocation9 + $0x58] sm:$0xff]
          %v724 = vld [vmem:[#allocation9 + $0x60] sm:$0xff]
          %v725 = vld [vmem:[#allocation9 + $0x68] sm:$0xff]
          %v726 = vld [vmem:[#allocation9 + $0x70] sm:$0xff]
          %v727 = vld [vmem:[#allocation9 + $0x78] sm:$0xff]
          %v728 = vld [vmem:[#allocation9 + $0x80] sm:$0xff]
          %v729 = vld [vmem:[#allocation9 + $0x88] sm:$0xff]
          %v730 = vld [vmem:[#allocation9 + $0x90] sm:$0xff]
          %v731 = vld [vmem:[#allocation9 + $0x98] sm:$0xff]
          %v732 = vld [vmem:[#allocation9 + $0xa0] sm:$0xff]
          %v733 = vld [vmem:[#allocation9 + $0xa8] sm:$0xff]
          %v734 = vld [vmem:[#allocation9 + $0xb0] sm:$0xff]
          %v735 = vld [vmem:[#allocation9 + $0xb8] sm:$0xff]
          %v736 = vld [vmem:[#allocation9 + $0xc0] sm:$0xff]
          %v737 = vld [vmem:[#allocation9 + $0xc8] sm:$0xff]
          %v738 = vld [vmem:[#allocation9 + $0xd0] sm:$0xff]
          %v739 = vld [vmem:[#allocation9 + $0xd8] sm:$0xff]
          %v740 = vld [vmem:[#allocation9 + $0xe0] sm:$0xff]
          %v741 = vld [vmem:[#allocation9 + $0xe8] sm:$0xff]
          %v742 = vld [vmem:[#allocation9 + $0xf0] sm:$0xff]
          %v743 = vld [vmem:[#allocation9 + $0xf8] sm:$0xff]
          %v744 = vmul.f32 %v680, %v680
          %v745 = vmul.f32 %v681, %v681
          %v746 = vmul.f32 %v682, %v682
          %v747 = vmul.f32 %v683, %v683
          %v748 = vmul.f32 %v684, %v684
          %v749 = vmul.f32 %v685, %v685
          %v750 = vmul.f32 %v686, %v686
          %v751 = vmul.f32 %v687, %v687
          %v752 = vmul.f32 %v688, %v688
          %v753 = vmul.f32 %v689, %v689
          %v754 = vmul.f32 %v690, %v690
          %v755 = vmul.f32 %v691, %v691
          %v756 = vmul.f32 %v692, %v692
          %v757 = vmul.f32 %v693, %v693
          %v758 = vmul.f32 %v694, %v694
          %v759 = vmul.f32 %v695, %v695
          %v760 = vmul.f32 %v696, %v696
          %v761 = vmul.f32 %v697, %v697
          %v762 = vmul.f32 %v698, %v698
          %v763 = vmul.f32 %v699, %v699
          %v764 = vmul.f32 %v700, %v700
          %v765 = vmul.f32 %v701, %v701
          %v766 = vmul.f32 %v702, %v702
          %v767 = vmul.f32 %v703, %v703
          %v768 = vmul.f32 %v704, %v704
          %v769 = vmul.f32 %v705, %v705
          %v770 = vmul.f32 %v706, %v706
          %v771 = vmul.f32 %v707, %v707
          %v772 = vmul.f32 %v708, %v708
          %v773 = vmul.f32 %v709, %v709
          %v774 = vmul.f32 %v710, %v710
          %v775 = vmul.f32 %v711, %v711
          %v776 = vstv %s678
          %v777 = vmax.f32 %v744, %v776
          %v778 = vmax.f32 %v745, %v776
          %v779 = vmax.f32 %v746, %v776
          %v780 = vmax.f32 %v747, %v776
          %v781 = vmax.f32 %v748, %v776
          %v782 = vmax.f32 %v749, %v776
          %v783 = vmax.f32 %v750, %v776
          %v784 = vmax.f32 %v751, %v776
          %v785 = vmax.f32 %v752, %v776
          %v786 = vmax.f32 %v753, %v776
          %v787 = vmax.f32 %v754, %v776
          %v788 = vmax.f32 %v755, %v776
          %v789 = vmax.f32 %v756, %v776
          %v790 = vmax.f32 %v757, %v776
          %v791 = vmax.f32 %v758, %v776
          %v792 = vmax.f32 %v759, %v776
          %v793 = vmax.f32 %v760, %v776
          %v794 = vmax.f32 %v761, %v776
          %v795 = vmax.f32 %v762, %v776
          %v796 = vmax.f32 %v763, %v776
          %v797 = vmax.f32 %v764, %v776
          %v798 = vmax.f32 %v765, %v776
          %v799 = vmax.f32 %v766, %v776
          %v800 = vmax.f32 %v767, %v776
          %v801 = vmax.f32 %v768, %v776
          %v802 = vmax.f32 %v769, %v776
          %v803 = vmax.f32 %v770, %v776
          %v804 = vmax.f32 %v771, %v776
          %v805 = vmax.f32 %v772, %v776
          %v806 = vmax.f32 %v773, %v776
          %v807 = vmax.f32 %v774, %v776
          %v808 = vmax.f32 %v775, %v776
          %v809 = vlog2.pop %v777
          %v810 = vmul.f32 %v809, 0.6931472
          %v811 = vlog2.pop %v778
          %v812 = vmul.f32 %v811, 0.6931472
          %v813 = vlog2.pop %v779
          %v814 = vmul.f32 %v813, 0.6931472
          %v815 = vlog2.pop %v780
          %v816 = vmul.f32 %v815, 0.6931472
          %v817 = vlog2.pop %v781
          %v818 = vmul.f32 %v817, 0.6931472
          %v819 = vlog2.pop %v782
          %v820 = vmul.f32 %v819, 0.6931472
          %v821 = vlog2.pop %v783
          %v822 = vmul.f32 %v821, 0.6931472
          %v823 = vlog2.pop %v784
          %v824 = vmul.f32 %v823, 0.6931472
          %v825 = vlog2.pop %v785
          %v826 = vmul.f32 %v825, 0.6931472
          %v827 = vlog2.pop %v786
          %v828 = vmul.f32 %v827, 0.6931472
          %v829 = vlog2.pop %v787
          %v830 = vmul.f32 %v829, 0.6931472
          %v831 = vlog2.pop %v788
          %v832 = vmul.f32 %v831, 0.6931472
          %v833 = vlog2.pop %v789
          %v834 = vmul.f32 %v833, 0.6931472
          %v835 = vlog2.pop %v790
          %v836 = vmul.f32 %v835, 0.6931472
          %v837 = vlog2.pop %v791
          %v838 = vmul.f32 %v837, 0.6931472
          %v839 = vlog2.pop %v792
          %v840 = vmul.f32 %v839, 0.6931472
          %v841 = vlog2.pop %v793
          %v842 = vmul.f32 %v841, 0.6931472
          %v843 = vlog2.pop %v794
          %v844 = vmul.f32 %v843, 0.6931472
          %v845 = vlog2.pop %v795
          %v846 = vmul.f32 %v845, 0.6931472
          %v847 = vlog2.pop %v796
          %v848 = vmul.f32 %v847, 0.6931472
          %v849 = vlog2.pop %v797
          %v850 = vmul.f32 %v849, 0.6931472
          %v851 = vlog2.pop %v798
          %v852 = vmul.f32 %v851, 0.6931472
          %v853 = vlog2.pop %v799
          %v854 = vmul.f32 %v853, 0.6931472
          %v855 = vlog2.pop %v800
          %v856 = vmul.f32 %v855, 0.6931472
          %v857 = vlog2.pop %v801
          %v858 = vmul.f32 %v857, 0.6931472
          %v859 = vlog2.pop %v802
          %v860 = vmul.f32 %v859, 0.6931472
          %v861 = vlog2.pop %v803
          %v862 = vmul.f32 %v861, 0.6931472
          %v863 = vlog2.pop %v804
          %v864 = vmul.f32 %v863, 0.6931472
          %v865 = vlog2.pop %v805
          %v866 = vmul.f32 %v865, 0.6931472
          %v867 = vlog2.pop %v806
          %v868 = vmul.f32 %v867, 0.6931472
          %v869 = vlog2.pop %v807
          %v870 = vmul.f32 %v869, 0.6931472
          %v871 = vlog2.pop %v808
          %v872 = vmul.f32 %v871, 0.6931472
          %v873 = vmul.f32 %v712, %v712
          %v874 = vmul.f32 %v713, %v713
          %v875 = vmul.f32 %v714, %v714
          %v876 = vmul.f32 %v715, %v715
          %v877 = vmul.f32 %v716, %v716
          %v878 = vmul.f32 %v717, %v717
          %v879 = vmul.f32 %v718, %v718
          %v880 = vmul.f32 %v719, %v719
          %v881 = vmul.f32 %v720, %v720
          %v882 = vmul.f32 %v721, %v721
          %v883 = vmul.f32 %v722, %v722
          %v884 = vmul.f32 %v723, %v723
          %v885 = vmul.f32 %v724, %v724
          %v886 = vmul.f32 %v725, %v725
          %v887 = vmul.f32 %v726, %v726
          %v888 = vmul.f32 %v727, %v727
          %v889 = vmul.f32 %v728, %v728
          %v890 = vmul.f32 %v729, %v729
          %v891 = vmul.f32 %v730, %v730
          %v892 = vmul.f32 %v731, %v731
          %v893 = vmul.f32 %v732, %v732
          %v894 = vmul.f32 %v733, %v733
          %v895 = vmul.f32 %v734, %v734
          %v896 = vmul.f32 %v735, %v735
          %v897 = vmul.f32 %v736, %v736
          %v898 = vmul.f32 %v737, %v737
          %v899 = vmul.f32 %v738, %v738
          %v900 = vmul.f32 %v739, %v739
          %v901 = vmul.f32 %v740, %v740
          %v902 = vmul.f32 %v741, %v741
          %v903 = vmul.f32 %v742, %v742
          %v904 = vmul.f32 %v743, %v743
          %v905 = vstv %s679
          %v906 = vmax.f32 %v873, %v905
          %v907 = vmax.f32 %v874, %v905
          %v908 = vmax.f32 %v875, %v905
          %v909 = vmax.f32 %v876, %v905
          %v910 = vmax.f32 %v877, %v905
          %v911 = vmax.f32 %v878, %v905
          %v912 = vmax.f32 %v879, %v905
          %v913 = vmax.f32 %v880, %v905
          %v914 = vmax.f32 %v881, %v905
          %v915 = vmax.f32 %v882, %v905
          %v916 = vmax.f32 %v883, %v905
          %v917 = vmax.f32 %v884, %v905
          %v918 = vmax.f32 %v885, %v905
          %v919 = vmax.f32 %v886, %v905
          %v920 = vmax.f32 %v887, %v905
          %v921 = vmax.f32 %v888, %v905
          %v922 = vmax.f32 %v889, %v905
          %v923 = vmax.f32 %v890, %v905
          %v924 = vmax.f32 %v891, %v905
          %v925 = vmax.f32 %v892, %v905
          %v926 = vmax.f32 %v893, %v905
          %v927 = vmax.f32 %v894, %v905
          %v928 = vmax.f32 %v895, %v905
          %v929 = vmax.f32 %v896, %v905
          %v930 = vmax.f32 %v897, %v905
          %v931 = vmax.f32 %v898, %v905
          %v932 = vmax.f32 %v899, %v905
          %v933 = vmax.f32 %v900, %v905
          %v934 = vmax.f32 %v901, %v905
          %v935 = vmax.f32 %v902, %v905
          %v936 = vmax.f32 %v903, %v905
          %v937 = vmax.f32 %v904, %v905
          %v938 = vlog2.pop %v906
          %v939 = vmul.f32 %v938, 0.6931472
          %v940 = vlog2.pop %v907
          %v941 = vmul.f32 %v940, 0.6931472
          %v942 = vlog2.pop %v908
          %v943 = vmul.f32 %v942, 0.6931472
          %v944 = vlog2.pop %v909
          %v945 = vmul.f32 %v944, 0.6931472
          %v946 = vlog2.pop %v910
          %v947 = vmul.f32 %v946, 0.6931472
          %v948 = vlog2.pop %v911
          %v949 = vmul.f32 %v948, 0.6931472
          %v950 = vlog2.pop %v912
          %v951 = vmul.f32 %v950, 0.6931472
          %v952 = vlog2.pop %v913
          %v953 = vmul.f32 %v952, 0.6931472
          %v954 = vlog2.pop %v914
          %v955 = vmul.f32 %v954, 0.6931472
          %v956 = vlog2.pop %v915
          %v957 = vmul.f32 %v956, 0.6931472
          %v958 = vlog2.pop %v916
          %v959 = vmul.f32 %v958, 0.6931472
          %v960 = vlog2.pop %v917
          %v961 = vmul.f32 %v960, 0.6931472
          %v962 = vlog2.pop %v918
          %v963 = vmul.f32 %v962, 0.6931472
          %v964 = vlog2.pop %v919
          %v965 = vmul.f32 %v964, 0.6931472
          %v966 = vlog2.pop %v920
          %v967 = vmul.f32 %v966, 0.6931472
          %v968 = vlog2.pop %v921
          %v969 = vmul.f32 %v968, 0.6931472
          %v970 = vlog2.pop %v922
          %v971 = vmul.f32 %v970, 0.6931472
          %v972 = vlog2.pop %v923
          %v973 = vmul.f32 %v972, 0.6931472
          %v974 = vlog2.pop %v924
          %v975 = vmul.f32 %v974, 0.6931472
          %v976 = vlog2.pop %v925
          %v977 = vmul.f32 %v976, 0.6931472
          %v978 = vlog2.pop %v926
          %v979 = vmul.f32 %v978, 0.6931472
          %v980 = vlog2.pop %v927
          %v981 = vmul.f32 %v980, 0.6931472
          %v982 = vlog2.pop %v928
          %v983 = vmul.f32 %v982, 0.6931472
          %v984 = vlog2.pop %v929
          %v985 = vmul.f32 %v984, 0.6931472
          %v986 = vlog2.pop %v930
          %v987 = vmul.f32 %v986, 0.6931472
          %v988 = vlog2.pop %v931
          %v989 = vmul.f32 %v988, 0.6931472
          %v990 = vlog2.pop %v932
          %v991 = vmul.f32 %v990, 0.6931472
          %v992 = vlog2.pop %v933
          %v993 = vmul.f32 %v992, 0.6931472
          %v994 = vlog2.pop %v934
          %v995 = vmul.f32 %v994, 0.6931472
          %v996 = vlog2.pop %v935
          %v997 = vmul.f32 %v996, 0.6931472
          %v998 = vlog2.pop %v936
          %v999 = vmul.f32 %v998, 0.6931472
          %v1000 = vlog2.pop %v937
          %v1001 = vmul.f32 %v1000, 0.6931472
          %v1002 = vsub.f32 %v810, %v939
          %v1003 = vsub.f32 %v812, %v941
          %v1004 = vsub.f32 %v814, %v943
          %v1005 = vsub.f32 %v816, %v945
          %v1006 = vsub.f32 %v818, %v947
          %v1007 = vsub.f32 %v820, %v949
          %v1008 = vsub.f32 %v822, %v951
          %v1009 = vsub.f32 %v824, %v953
          %v1010 = vsub.f32 %v826, %v955
          %v1011 = vsub.f32 %v828, %v957
          %v1012 = vsub.f32 %v830, %v959
          %v1013 = vsub.f32 %v832, %v961
          %v1014 = vsub.f32 %v834, %v963
          %v1015 = vsub.f32 %v836, %v965
          %v1016 = vsub.f32 %v838, %v967
          %v1017 = vsub.f32 %v840, %v969
          %v1018 = vsub.f32 %v842, %v971
          %v1019 = vsub.f32 %v844, %v973
          %v1020 = vsub.f32 %v846, %v975
          %v1021 = vsub.f32 %v848, %v977
          %v1022 = vsub.f32 %v850, %v979
          %v1023 = vsub.f32 %v852, %v981
          %v1024 = vsub.f32 %v854, %v983
          %v1025 = vsub.f32 %v856, %v985
          %v1026 = vsub.f32 %v858, %v987
          %v1027 = vsub.f32 %v860, %v989
          %v1028 = vsub.f32 %v862, %v991
          %v1029 = vsub.f32 %v864, %v993
          %v1030 = vsub.f32 %v866, %v995
          %v1031 = vsub.f32 %v868, %v997
          %v1032 = vsub.f32 %v870, %v999
          %v1033 = vsub.f32 %v872, %v1001
          %v1034 = vld [vmem:[#allocation4] sm:$0xff]
          %v1035 = vld [vmem:[#allocation4 + $0x8] sm:$0xff]
          %v1036 = vld [vmem:[#allocation4 + $0x10] sm:$0xff]
          %v1037 = vld [vmem:[#allocation4 + $0x18] sm:$0xff]
          %v1038 = vld [vmem:[#allocation4 + $0x20] sm:$0xff]
          %v1039 = vld [vmem:[#allocation4 + $0x28] sm:$0xff]
          %v1040 = vld [vmem:[#allocation4 + $0x30] sm:$0xff]
          %v1041 = vld [vmem:[#allocation4 + $0x38] sm:$0xff]
          %v1042 = vld [vmem:[#allocation4 + $0x40] sm:$0xff]
          %v1043 = vld [vmem:[#allocation4 + $0x48] sm:$0xff]
          %v1044 = vld [vmem:[#allocation4 + $0x50] sm:$0xff]
          %v1045 = vld [vmem:[#allocation4 + $0x58] sm:$0xff]
          %v1046 = vld [vmem:[#allocation4 + $0x60] sm:$0xff]
          %v1047 = vld [vmem:[#allocation4 + $0x68] sm:$0xff]
          %v1048 = vld [vmem:[#allocation4 + $0x70] sm:$0xff]
          %v1049 = vld [vmem:[#allocation4 + $0x78] sm:$0xff]
          %v1050 = vmul.f32 %v1002, %v1002
          %v1051 = vmul.f32 %v1003, %v1003
          %v1052 = vmul.f32 %v1004, %v1004
          %v1053 = vmul.f32 %v1005, %v1005
          %v1054 = vmul.f32 %v1006, %v1006
          %v1055 = vmul.f32 %v1007, %v1007
          %v1056 = vmul.f32 %v1008, %v1008
          %v1057 = vmul.f32 %v1009, %v1009
          %v1058 = vmul.f32 %v1010, %v1010
          %v1059 = vmul.f32 %v1011, %v1011
          %v1060 = vmul.f32 %v1012, %v1012
          %v1061 = vmul.f32 %v1013, %v1013
          %v1062 = vmul.f32 %v1014, %v1014
          %v1063 = vmul.f32 %v1015, %v1015
          %v1064 = vmul.f32 %v1016, %v1016
          %v1065 = vmul.f32 %v1017, %v1017
          %v1066 = vmul.f32 %v1018, %v1018
          %v1067 = vmul.f32 %v1019, %v1019
          %v1068 = vmul.f32 %v1020, %v1020
          %v1069 = vmul.f32 %v1021, %v1021
          %v1070 = vmul.f32 %v1022, %v1022
          %v1071 = vmul.f32 %v1023, %v1023
          %v1072 = vmul.f32 %v1024, %v1024
          %v1073 = vmul.f32 %v1025, %v1025
          %v1074 = vmul.f32 %v1026, %v1026
          %v1075 = vmul.f32 %v1027, %v1027
          %v1076 = vmul.f32 %v1028, %v1028
          %v1077 = vmul.f32 %v1029, %v1029
          %v1078 = vmul.f32 %v1030, %v1030
          %v1079 = vmul.f32 %v1031, %v1031
          %v1080 = vmul.f32 %v1032, %v1032
          %v1081 = vmul.f32 %v1033, %v1033
          %v1082 = vadd.f32 %v1050, %v1051
          %1083 = vadd.xlane.f32.xlu0 %v1082
          %v1084 = vpop.xlane.xlu0 %1083
          %v1085 = vadd.f32 %v1052, %v1053
          %1086 = vadd.xlane.f32.xlu0 %v1085
          %v1087 = vpop.xlane.xlu0 %1086
          %v1088 = vadd.f32 %v1054, %v1055
          %1089 = vadd.xlane.f32.xlu0 %v1088
          %v1090 = vpop.xlane.xlu0 %1089
          %v1091 = vadd.f32 %v1056, %v1057
          %1092 = vadd.xlane.f32.xlu0 %v1091
          %v1093 = vpop.xlane.xlu0 %1092
          %v1094 = vadd.f32 %v1058, %v1059
          %1095 = vadd.xlane.f32.xlu0 %v1094
          %v1096 = vpop.xlane.xlu0 %1095
          %v1097 = vadd.f32 %v1060, %v1061
          %1098 = vadd.xlane.f32.xlu0 %v1097
          %v1099 = vpop.xlane.xlu0 %1098
          %v1100 = vadd.f32 %v1062, %v1063
          %1101 = vadd.xlane.f32.xlu0 %v1100
          %v1102 = vpop.xlane.xlu0 %1101
          %v1103 = vadd.f32 %v1064, %v1065
          %1104 = vadd.xlane.f32.xlu0 %v1103
          %v1105 = vpop.xlane.xlu0 %1104
          %v1106 = vadd.f32 %v1066, %v1067
          %1107 = vadd.xlane.f32.xlu0 %v1106
          %v1108 = vpop.xlane.xlu0 %1107
          %v1109 = vadd.f32 %v1068, %v1069
          %1110 = vadd.xlane.f32.xlu0 %v1109
          %v1111 = vpop.xlane.xlu0 %1110
          %v1112 = vadd.f32 %v1070, %v1071
          %1113 = vadd.xlane.f32.xlu0 %v1112
          %v1114 = vpop.xlane.xlu0 %1113
          %v1115 = vadd.f32 %v1072, %v1073
          %1116 = vadd.xlane.f32.xlu0 %v1115
          %v1117 = vpop.xlane.xlu0 %1116
          %v1118 = vadd.f32 %v1074, %v1075
          %1119 = vadd.xlane.f32.xlu0 %v1118
          %v1120 = vpop.xlane.xlu0 %1119
          %v1121 = vadd.f32 %v1076, %v1077
          %1122 = vadd.xlane.f32.xlu0 %v1121
          %v1123 = vpop.xlane.xlu0 %1122
          %v1124 = vadd.f32 %v1078, %v1079
          %1125 = vadd.xlane.f32.xlu0 %v1124
          %v1126 = vpop.xlane.xlu0 %1125
          %v1127 = vadd.f32 %v1080, %v1081
          %1128 = vadd.xlane.f32.xlu0 %v1127
          %v1129 = vpop.xlane.xlu0 %1128
          %v1130 = vadd.f32 %v1034, %v1084
          %v1131 = vadd.f32 %v1035, %v1087
          %v1132 = vadd.f32 %v1036, %v1090
          %v1133 = vadd.f32 %v1037, %v1093
          %v1134 = vadd.f32 %v1038, %v1096
          %v1135 = vadd.f32 %v1039, %v1099
          %v1136 = vadd.f32 %v1040, %v1102
          %v1137 = vadd.f32 %v1041, %v1105
          %v1138 = vadd.f32 %v1042, %v1108
          %v1139 = vadd.f32 %v1043, %v1111
          %v1140 = vadd.f32 %v1044, %v1114
          %v1141 = vadd.f32 %v1045, %v1117
          %v1142 = vadd.f32 %v1046, %v1120
          %v1143 = vadd.f32 %v1047, %v1123
          %v1144 = vadd.f32 %v1048, %v1126
          %v1145 = vadd.f32 %v1049, %v1129
          %vm1146 = vcmask 7168
          %1147 = vst.msk [vmem:[#allocation4] sm:$0xff] %vm1146, %v1130
          %1148 = vst.msk [vmem:[#allocation4 + $0x8] sm:$0xff] %vm1146, %v1131
          %1149 = vst.msk [vmem:[#allocation4 + $0x10] sm:$0xff] %vm1146, %v1132
          %1150 = vst.msk [vmem:[#allocation4 + $0x18] sm:$0xff] %vm1146, %v1133
          %1151 = vst.msk [vmem:[#allocation4 + $0x20] sm:$0xff] %vm1146, %v1134
          %1152 = vst.msk [vmem:[#allocation4 + $0x28] sm:$0xff] %vm1146, %v1135
          %1153 = vst.msk [vmem:[#allocation4 + $0x30] sm:$0xff] %vm1146, %v1136
          %1154 = vst.msk [vmem:[#allocation4 + $0x38] sm:$0xff] %vm1146, %v1137
          %1155 = vst.msk [vmem:[#allocation4 + $0x40] sm:$0xff] %vm1146, %v1138
          %1156 = vst.msk [vmem:[#allocation4 + $0x48] sm:$0xff] %vm1146, %v1139
          %1157 = vst.msk [vmem:[#allocation4 + $0x50] sm:$0xff] %vm1146, %v1140
          %1158 = vst.msk [vmem:[#allocation4 + $0x58] sm:$0xff] %vm1146, %v1141
          %1159 = vst.msk [vmem:[#allocation4 + $0x60] sm:$0xff] %vm1146, %v1142
          %1160 = vst.msk [vmem:[#allocation4 + $0x68] sm:$0xff] %vm1146, %v1143
          %1161 = vst.msk [vmem:[#allocation4 + $0x70] sm:$0xff] %vm1146, %v1144
          %1162 = vst.msk [vmem:[#allocation4 + $0x78] sm:$0xff] %vm1146, %v1145
        $region52: #{tpu_custom_call.1} parent=27 // pred_fallthru
          _
        // Predicated region
        $region53: #{tpu_custom_call.1} parent=27 // pred_check
          _
        $region54: #{tpu_custom_call.1} parent=27 // pred_check_branch
          %1164 = sbr.rel (%p550) target = $region56
        $region55: #{tpu_custom_call.1} parent=27 // pred_region
          %v1165 = vld [vmem:[#allocation4] sm:$0xff]
          %v1166 = vld [vmem:[#allocation4 + $0x8] sm:$0xff]
          %v1167 = vld [vmem:[#allocation4 + $0x10] sm:$0xff]
          %v1168 = vld [vmem:[#allocation4 + $0x18] sm:$0xff]
          %v1169 = vld [vmem:[#allocation4 + $0x20] sm:$0xff]
          %v1170 = vld [vmem:[#allocation4 + $0x28] sm:$0xff]
          %v1171 = vld [vmem:[#allocation4 + $0x30] sm:$0xff]
          %v1172 = vld [vmem:[#allocation4 + $0x38] sm:$0xff]
          %v1173 = vld [vmem:[#allocation4 + $0x40] sm:$0xff]
          %v1174 = vld [vmem:[#allocation4 + $0x48] sm:$0xff]
          %v1175 = vld [vmem:[#allocation4 + $0x50] sm:$0xff]
          %v1176 = vld [vmem:[#allocation4 + $0x58] sm:$0xff]
          %v1177 = vld [vmem:[#allocation4 + $0x60] sm:$0xff]
          %v1178 = vld [vmem:[#allocation4 + $0x68] sm:$0xff]
          %v1179 = vld [vmem:[#allocation4 + $0x70] sm:$0xff]
          %v1180 = vld [vmem:[#allocation4 + $0x78] sm:$0xff]
          %vm1181 = vcmask 7168
          %v1182 = vsel %vm1181, %v1165, 0.0
          %v1183 = vsel %vm1181, %v1166, 0.0
          %v1184 = vadd.f32 %v1182, %v1183
          %v1185 = vsel %vm1181, %v1167, 0.0
          %v1186 = vadd.f32 %v1184, %v1185
          %v1187 = vsel %vm1181, %v1168, 0.0
          %v1188 = vadd.f32 %v1186, %v1187
          %v1189 = vsel %vm1181, %v1169, 0.0
          %v1190 = vadd.f32 %v1188, %v1189
          %v1191 = vsel %vm1181, %v1170, 0.0
          %v1192 = vadd.f32 %v1190, %v1191
          %v1193 = vsel %vm1181, %v1171, 0.0
          %v1194 = vadd.f32 %v1192, %v1193
          %v1195 = vsel %vm1181, %v1172, 0.0
          %v1196 = vadd.f32 %v1194, %v1195
          %v1197 = vsel %vm1181, %v1173, 0.0
          %v1198 = vadd.f32 %v1196, %v1197
          %v1199 = vsel %vm1181, %v1174, 0.0
          %v1200 = vadd.f32 %v1198, %v1199
          %v1201 = vsel %vm1181, %v1175, 0.0
          %v1202 = vadd.f32 %v1200, %v1201
          %v1203 = vsel %vm1181, %v1176, 0.0
          %v1204 = vadd.f32 %v1202, %v1203
          %v1205 = vsel %vm1181, %v1177, 0.0
          %v1206 = vadd.f32 %v1204, %v1205
          %v1207 = vsel %vm1181, %v1178, 0.0
          %v1208 = vadd.f32 %v1206, %v1207
          %v1209 = vsel %vm1181, %v1179, 0.0
          %v1210 = vadd.f32 %v1208, %v1209
          %v1211 = vsel %vm1181, %v1180, 0.0
          %v1212 = vadd.f32 %v1210, %v1211
          %1213 = vadd.xlane.f32.xlu0 %v1212
          %v1214 = vpop.xlane.xlu0 %1213
          %v1215 = vrot.slane %v1214, 4
          %v1216 = vadd.f32 %v1214, %v1215
          %v1217 = vrot.slane %v1216, 2
          %v1218 = vadd.f32 %v1216, %v1217
          %v1219 = vrot.slane %v1218, 1
          %v1220 = vadd.f32 %v1218, %v1219
          %s1221 = vtos %v1220
          %s1222 = smul.f32 %s1221, 0.0005755972
          %s1223 = scalar_lea.smem [#allocation11], 0
          %1224 = sst [smem:[%s1223]] %s1222
        $region56: #{tpu_custom_call.1} parent=27 // pred_fallthru
          _
        // Predicated region
        $region57: #{tpu_custom_call.1} parent=27 // pred_check
          %p1225 = pneg %p93
        $region58: #{tpu_custom_call.1} parent=27 // pred_check_branch
          %1227 = sbr.rel (%p1225) target = $region60
        $region59: #{tpu_custom_call.1} parent=27 // pred_region
          %s1229 = ssub.s32 16, 16
          %1230 = vsyncadd [#allocation8], %s1229
          %1233 = dma.smem_to_hbm [#allocation11], 16, %s2, [#allocation8]
        $region60: #{tpu_custom_call.1} parent=27 // pred_fallthru
          _
        // Predicated region
        $region61: #{tpu_custom_call.1} parent=27 // pred_check
          %p1234 = pneg %p93
        $region62: #{tpu_custom_call.1} parent=27 // pred_check_branch
          %1236 = sbr.rel (%p1234) target = $region64
        $region63: #{tpu_custom_call.1} parent=27 // pred_region
          %1237 = dma.done [#allocation8], 16
        $region64: #{tpu_custom_call.1} parent=27 // pred_fallthru
          _
        %1238 = sfence
      $region28: #{tpu_custom_call.1} parent=5 // pred_fallthru
        _
      %p1239 = scmp.le.s32.totalorder 2, %s11
      // Predicated region
      $region65: #{tpu_custom_call.1} parent=5 // pred_check
        %p1240 = pneg %p1239
      $region66: #{tpu_custom_call.1} parent=5 // pred_check_branch
        %1242 = sbr.rel (%p1240) target = $region68
      $region67: #{tpu_custom_call.1} parent=5 // pred_region
        %s1243 = ssub.s32 %s11, 2
      $region68: #{tpu_custom_call.1} parent=5 // pred_fallthru
        _
    $region6: #{tpu_custom_call.1} parent=1 // loop_footer
      %s15 = sadd.s32 1, %s11
    $region7: #{tpu_custom_call.1} parent=1 // loop_footer_branch
      %10 = sbr.rel target = $region3
    $region8: #{tpu_custom_call.1} parent=1 // loop_exit
      _
    %1244 = vsyncpa [#allocation7], 1
    %s1245 = scalar_lea.sflag [#allocation7], 1
    %1246 = vsyncpa %s1245, 1
    %1247 = vsyncpa [#allocation10], 1
    %1248 = vsyncpa [#allocation8], 1
    %s1249 = scalar_lea.sflag [#allocation8], 1
    %1250 = vsyncpa %s1249, 1

// kernel: tpu_custom_call.1
$region0: #{tpu_custom_call.1}
  #allocation0 [shape = 'u32[]', space=smem, size = 0x4, offset = 0x4, fixed_abs, tag = 'smem constant byte address 0x4 - core index']
  #allocation1 [shape = 'u32[144,128]{1,0:T(1,128)}', space=vmem, size = 0x12000, scoped, tag = 'internal scratch']
  #allocation2 [shape = 'f32[128,1]{1,0:T(8,128)}', space=vmem, size = 0x10000, scoped, tag = 'scratch operand']
  #allocation3 [shape = 'f32[128,1]{1,0:T(8,128)}', space=vmem, size = 0x10000, scoped, tag = 'scratch operand']
  #allocation4 [shape = 'f32[128,1]{1,0:T(8,128)}', space=vmem, size = 0x10000, scoped, tag = 'scratch operand']
  #allocation5 [shape = 'f32[2]{0:T(128)}', space=smem, size = 0x200, scoped, tag = 'scratch operand']
  %s0 = inlined_call_operand.hbm [shape: f32[128,256], index: 0, kind: input, shape index: {}]
  %s1 = inlined_call_operand.hbm [shape: f32[128,256], index: 1, kind: input, shape index: {}]
  %s2 = inlined_call_operand.hbm [shape: f32[1,1], index: 2, kind: output, shape index: {}]
  %s3 = sld [smem:[#allocation0]]
  $region69: #{tpu_custom_call.1} parent=0
    _
  %s5 = ssub.s32 1, %s3
  %s6 = scalar_select 0, %s5, %s3
  $region1: #{tpu_custom_call.1} parent=0
    #allocation6 [shape = 'u8[131072]{0}', space=vmem, size = 0x20000, scoped, tag = 'input window, operand 0, single buffered']
    #allocation7 [shape = 's32[2]{0}', space=sflag, size = 0x8, scoped, tag = 'scoped memory for tpu_custom_call.1']
    #allocation8 [shape = 's32[2]{0}', space=sflag, size = 0x8, scoped, tag = 'scoped memory for tpu_custom_call.1']
    #allocation9 [shape = 'u8[131072]{0}', space=vmem, size = 0x20000, scoped, tag = 'input window, operand 1, single buffered']
    #allocation10 [shape = 's32[1]{0}', space=sflag, size = 0x4, scoped, tag = 'scoped memory for tpu_custom_call.1']
    #allocation11 [shape = 'u8[512]{0}', space=smem, size = 0x200, scoped, tag = 'output window, operand 0, single buffered']
    %7 = vsyncpa [#allocation7], 0
    %8 = vsyncpa [#allocation10], 0
    %9 = vsyncpa [#allocation8], 0
    loop: start=0, step=1, limit=4
    $region2: #{tpu_custom_call.1} parent=1 // loop_pre_header
      _
    $region3: #{tpu_custom_call.1} parent=1 // loop_header
      %s11 = sphi 0, %s15
      %p12 = scmp.ge.s32.totalorder %s11, 4
      %s18 = sphi 0, %s30
      %s19 = sphi 0, %s26
      %s20 = sphi 0, %s18
      %s21 = sphi 0, %s19
      %s22 = sphi 0, %s20
      %s23 = sphi 0, %s21
      %s33 = sphi 0, %s35
      %s36 = sphi 0, %s33
      %s37 = sphi 0, %s36
      %s53 = sphi 0, %s37
      %s59 = sphi 0, %s61
      %s62 = sphi 0, %s59
      %s63 = sphi 0, %s62
      %s79 = sphi 0, %s63
      %s83 = sphi 0, %s83
      %s85 = sphi 0, %s83
      %s86 = sphi 0, %s85
      %s100 = sphi 0, %s86
    $region4: #{tpu_custom_call.1} parent=1 // loop_header_branch
      %14 = sbr.rel (%p12) target = $region8
    $region5: #{tpu_custom_call.1} parent=1 // loop_body
      %s16 = ssub.s32 %s11, 1
      %s17 = ssub.s32 %s11, 2
      %s24 = sadd.s32 1, %s19
      %p25 = scmp.ge.s32.totalorder %s24, 1
      %s26 = scalar_select %p25, 0, %s24
      %s27 = sadd.s32 1, %s18
      %s28 = scalar_select %p25, %s27, %s18
      %p29 = scmp.ge.s32.totalorder %s28, 2
      %s30 = scalar_select %p29, 0, %s28
      %s31 = ssub.s32 %s19, %s26
      %p32 = scmp.eq.s32.totalorder %s31, 0
      %s34 = sadd.s32 %s33, 1
      %s35 = scalar_select %p32, %s33, %s34
      %p38 = pneg %p32
      %p39 = scmp.eq.s32.totalorder %s11, 1
      %p40 = por %p38, %p39
      %p41 = scmp.ne.s32.totalorder %s33, %s36
      %p42 = scmp.eq.s32.totalorder %s11, 0
      %p43 = por %p41, %p42
      %p44 = scmp.ne.s32.totalorder %s33, %s36
      %p45 = scmp.eq.s32.totalorder %s16, 1
      %p46 = por %p44, %p45
      %p47 = scmp.ne.s32.totalorder %s36, %s37
      %p48 = scmp.eq.s32.totalorder %s16, 0
      %p49 = por %p47, %p48
      %p50 = scmp.ne.s32.totalorder %s36, %s37
      %p51 = scmp.eq.s32.totalorder %s17, 1
      %p52 = por %p50, %p51
      %p54 = scmp.ne.s32.totalorder %s37, %s53
      %p55 = scmp.eq.s32.totalorder %s17, 0
      %p56 = por %p54, %p55
      %s57 = ssub.s32 %s19, %s26
      %p58 = scmp.eq.s32.totalorder %s57, 0
      %s60 = sadd.s32 %s59, 1
      %s61 = scalar_select %p58, %s59, %s60
      %p64 = pneg %p58
      %p65 = scmp.eq.s32.totalorder %s11, 1
      %p66 = por %p64, %p65
      %p67 = scmp.ne.s32.totalorder %s59, %s62
      %p68 = scmp.eq.s32.totalorder %s11, 0
      %p69 = por %p67, %p68
      %p70 = scmp.ne.s32.totalorder %s59, %s62
      %p71 = scmp.eq.s32.totalorder %s16, 1
      %p72 = por %p70, %p71
      %p73 = scmp.ne.s32.totalorder %s62, %s63
      %p74 = scmp.eq.s32.totalorder %s16, 0
      %p75 = por %p73, %p74
      %p76 = scmp.ne.s32.totalorder %s62, %s63
      %p77 = scmp.eq.s32.totalorder %s17, 1
      %p78 = por %p76, %p77
      %p80 = scmp.ne.s32.totalorder %s63, %s79
      %p81 = scmp.eq.s32.totalorder %s17, 0
      %p82 = por %p80, %p81
      %s84 = sadd.s32 %s83, 1
      %p87 = scmp.eq.s32.totalorder %s11, 1
      %p88 = scmp.ne.s32.totalorder %s83, %s85
      %p89 = scmp.eq.s32.totalorder %s11, 0
      %p90 = por %p88, %p89
      %p91 = scmp.ne.s32.totalorder %s83, %s85
      %p92 = scmp.eq.s32.totalorder %s16, 1
      %p93 = por %p91, %p92
      %p94 = scmp.ne.s32.totalorder %s85, %s86
      %p95 = scmp.eq.s32.totalorder %s16, 0
      %p96 = por %p94, %p95
      %p97 = scmp.ne.s32.totalorder %s85, %s86
      %p98 = scmp.eq.s32.totalorder %s17, 1
      %p99 = por %p97, %p98
      %p101 = scmp.ne.s32.totalorder %s86, %s100
      %p102 = scmp.eq.s32.totalorder %s17, 0
      %p103 = por %p101, %p102
      %p104 = scmp.le.s32.totalorder 1, %s11
      %p105 = scmp.lt.s32.totalorder %s11, 3
      %p106 = pnand %p104, %p105
      %p107 = pneg %p106
      // Predicated region
      $region9: #{tpu_custom_call.1} parent=5 // pred_check
        _
      $region10: #{tpu_custom_call.1} parent=5 // pred_check_branch
        %109 = sbr.rel (%p106) target = $region12
      $region11: #{tpu_custom_call.1} parent=5 // pred_region
        %s110 = ssub.s32 %s11, 1
        // Predicated region
        $region13: #{tpu_custom_call.1} parent=11 // pred_check
          %p111 = pneg %p49
        $region14: #{tpu_custom_call.1} parent=11 // pred_check_branch
          %113 = sbr.rel (%p111) target = $region16
        $region15: #{tpu_custom_call.1} parent=11 // pred_region
          %s114 = smul.u32 2, %s21
          %s116 = ssub.s32 4096, 4096
          %117 = vsyncadd [#allocation7], %s116
          %s118 = smul.addr %s114, 128
          %s119 = scalar_lea.hbm %s0, %s118
          %s120 = sshll.u32 [#allocation6], 4
          %s121 = int_to_ptr.vmem [resolvable:$true] %s120
          %126 = dma.hbm_to_vmem [thread:$0]  %s119, 4096, %s121, [#allocation7], 256, 256, 16
        $region16: #{tpu_custom_call.1} parent=11 // pred_fallthru
          _
        // Predicated region
        $region17: #{tpu_custom_call.1} parent=11 // pred_check
          %p127 = pneg %p75
        $region18: #{tpu_custom_call.1} parent=11 // pred_check_branch
          %129 = sbr.rel (%p127) target = $region20
        $region19: #{tpu_custom_call.1} parent=11 // pred_region
          %s130 = smul.u32 2, %s21
          %s132 = ssub.s32 4096, 4096
          %133 = vsyncadd [#allocation10], %s132
          %s134 = smul.addr %s130, 128
          %s135 = scalar_lea.hbm %s1, %s134
          %s136 = sshll.u32 [#allocation9], 4
          %s137 = int_to_ptr.vmem [resolvable:$true] %s136
          %142 = dma.hbm_to_vmem [thread:$0]  %s135, 4096, %s137, [#allocation10], 256, 256, 16
        $region20: #{tpu_custom_call.1} parent=11 // pred_fallthru
          _
      $region12: #{tpu_custom_call.1} parent=5 // pred_fallthru
        _
      %p143 = scmp.lt.s32.totalorder %s11, 2
      // Predicated region
      $region21: #{tpu_custom_call.1} parent=5 // pred_check
        %p144 = pneg %p143
      $region22: #{tpu_custom_call.1} parent=5 // pred_check_branch
        %146 = sbr.rel (%p144) target = $region24
      $region23: #{tpu_custom_call.1} parent=5 // pred_region
        _
      $region24: #{tpu_custom_call.1} parent=5 // pred_fallthru
        _
      %p147 = scmp.le.s32.totalorder 1, %s11
      %p148 = scmp.lt.s32.totalorder %s11, 3
      %p149 = pnand %p147, %p148
      %p150 = pneg %p149
      // Predicated region
      $region25: #{tpu_custom_call.1} parent=5 // pred_check
        _
      $region26: #{tpu_custom_call.1} parent=5 // pred_check_branch
        %152 = sbr.rel (%p149) target = $region28
      $region27: #{tpu_custom_call.1} parent=5 // pred_region
        %s153 = ssub.s32 %s11, 1
        // Predicated region
        $region29: #{tpu_custom_call.1} parent=27 // pred_check
          %p154 = pneg %p49
        $region30: #{tpu_custom_call.1} parent=27 // pred_check_branch
          %156 = sbr.rel (%p154) target = $region32
        $region31: #{tpu_custom_call.1} parent=27 // pred_region
          %157 = dma.done [#allocation7], 4096
        $region32: #{tpu_custom_call.1} parent=27 // pred_fallthru
          _
        // Predicated region
        $region33: #{tpu_custom_call.1} parent=27 // pred_check
          %p158 = pneg %p75
        $region34: #{tpu_custom_call.1} parent=27 // pred_check_branch
          %160 = sbr.rel (%p158) target = $region36
        $region35: #{tpu_custom_call.1} parent=27 // pred_region
          %161 = dma.done [#allocation10], 4096
        $region36: #{tpu_custom_call.1} parent=27 // pred_fallthru
          _
        %p162 = pneg %p49
        %p163 = pneg %p46
        %p164 = pneg %p75
        %p165 = pneg %p72
        %p166 = pneg %p96
        %p167 = pneg %p93
        %s168 = smul.u32 2, %s21
        %s169 = smul.u32 2, %s21
        %p170 = scmp.eq.s32.totalorder %s20, 0
        %p171 = scmp.eq.s32.totalorder %s21, 0
        %p172 = pnand %p170, %p171
        %p173 = pneg %p172
        // Predicated region
        $region37: #{tpu_custom_call.1} parent=27 // pred_check
          _
        $region38: #{tpu_custom_call.1} parent=27 // pred_check_branch
          %175 = sbr.rel (%p172) target = $region40
        $region39: #{tpu_custom_call.1} parent=27 // pred_region
          %vm176 = vcmask 7168
          %177 = vst.msk [vmem:[#allocation2] sm:$0xff] %vm176, 0.0
          %178 = vst.msk [vmem:[#allocation2 + $0x8] sm:$0xff] %vm176, 0.0
          %179 = vst.msk [vmem:[#allocation2 + $0x10] sm:$0xff] %vm176, 0.0
          %180 = vst.msk [vmem:[#allocation2 + $0x18] sm:$0xff] %vm176, 0.0
          %181 = vst.msk [vmem:[#allocation2 + $0x20] sm:$0xff] %vm176, 0.0
          %182 = vst.msk [vmem:[#allocation2 + $0x28] sm:$0xff] %vm176, 0.0
          %183 = vst.msk [vmem:[#allocation2 + $0x30] sm:$0xff] %vm176, 0.0
          %184 = vst.msk [vmem:[#allocation2 + $0x38] sm:$0xff] %vm176, 0.0
          %185 = vst.msk [vmem:[#allocation2 + $0x40] sm:$0xff] %vm176, 0.0
          %186 = vst.msk [vmem:[#allocation2 + $0x48] sm:$0xff] %vm176, 0.0
          %187 = vst.msk [vmem:[#allocation2 + $0x50] sm:$0xff] %vm176, 0.0
          %188 = vst.msk [vmem:[#allocation2 + $0x58] sm:$0xff] %vm176, 0.0
          %189 = vst.msk [vmem:[#allocation2 + $0x60] sm:$0xff] %vm176, 0.0
          %190 = vst.msk [vmem:[#allocation2 + $0x68] sm:$0xff] %vm176, 0.0
          %191 = vst.msk [vmem:[#allocation2 + $0x70] sm:$0xff] %vm176, 0.0
          %192 = vst.msk [vmem:[#allocation2 + $0x78] sm:$0xff] %vm176, 0.0
          %193 = vst.msk [vmem:[#allocation3] sm:$0xff] %vm176, 0.0
          %194 = vst.msk [vmem:[#allocation3 + $0x8] sm:$0xff] %vm176, 0.0
          %195 = vst.msk [vmem:[#allocation3 + $0x10] sm:$0xff] %vm176, 0.0
          %196 = vst.msk [vmem:[#allocation3 + $0x18] sm:$0xff] %vm176, 0.0
          %197 = vst.msk [vmem:[#allocation3 + $0x20] sm:$0xff] %vm176, 0.0
          %198 = vst.msk [vmem:[#allocation3 + $0x28] sm:$0xff] %vm176, 0.0
          %199 = vst.msk [vmem:[#allocation3 + $0x30] sm:$0xff] %vm176, 0.0
          %200 = vst.msk [vmem:[#allocation3 + $0x38] sm:$0xff] %vm176, 0.0
          %201 = vst.msk [vmem:[#allocation3 + $0x40] sm:$0xff] %vm176, 0.0
          %202 = vst.msk [vmem:[#allocation3 + $0x48] sm:$0xff] %vm176, 0.0
          %203 = vst.msk [vmem:[#allocation3 + $0x50] sm:$0xff] %vm176, 0.0
          %204 = vst.msk [vmem:[#allocation3 + $0x58] sm:$0xff] %vm176, 0.0
          %205 = vst.msk [vmem:[#allocation3 + $0x60] sm:$0xff] %vm176, 0.0
          %206 = vst.msk [vmem:[#allocation3 + $0x68] sm:$0xff] %vm176, 0.0
          %207 = vst.msk [vmem:[#allocation3 + $0x70] sm:$0xff] %vm176, 0.0
          %208 = vst.msk [vmem:[#allocation3 + $0x78] sm:$0xff] %vm176, 0.0
          %209 = vst.msk [vmem:[#allocation4] sm:$0xff] %vm176, 0.0
          %210 = vst.msk [vmem:[#allocation4 + $0x8] sm:$0xff] %vm176, 0.0
          %211 = vst.msk [vmem:[#allocation4 + $0x10] sm:$0xff] %vm176, 0.0
          %212 = vst.msk [vmem:[#allocation4 + $0x18] sm:$0xff] %vm176, 0.0
          %213 = vst.msk [vmem:[#allocation4 + $0x20] sm:$0xff] %vm176, 0.0
          %214 = vst.msk [vmem:[#allocation4 + $0x28] sm:$0xff] %vm176, 0.0
          %215 = vst.msk [vmem:[#allocation4 + $0x30] sm:$0xff] %vm176, 0.0
          %216 = vst.msk [vmem:[#allocation4 + $0x38] sm:$0xff] %vm176, 0.0
          %217 = vst.msk [vmem:[#allocation4 + $0x40] sm:$0xff] %vm176, 0.0
          %218 = vst.msk [vmem:[#allocation4 + $0x48] sm:$0xff] %vm176, 0.0
          %219 = vst.msk [vmem:[#allocation4 + $0x50] sm:$0xff] %vm176, 0.0
          %220 = vst.msk [vmem:[#allocation4 + $0x58] sm:$0xff] %vm176, 0.0
          %221 = vst.msk [vmem:[#allocation4 + $0x60] sm:$0xff] %vm176, 0.0
          %222 = vst.msk [vmem:[#allocation4 + $0x68] sm:$0xff] %vm176, 0.0
          %223 = vst.msk [vmem:[#allocation4 + $0x70] sm:$0xff] %vm176, 0.0
          %224 = vst.msk [vmem:[#allocation4 + $0x78] sm:$0xff] %vm176, 0.0
        $region40: #{tpu_custom_call.1} parent=27 // pred_fallthru
          _
        // Predicated region
        $region41: #{tpu_custom_call.1} parent=27 // pred_check
          %p225 = pneg %p170
        $region42: #{tpu_custom_call.1} parent=27 // pred_check_branch
          %227 = sbr.rel (%p225) target = $region44
        $region43: #{tpu_custom_call.1} parent=27 // pred_region
          %v228 = vld [vmem:[#allocation6] sm:$0xff]
          %v229 = vld [vmem:[#allocation6 + $0x8] sm:$0xff]
          %v230 = vld [vmem:[#allocation6 + $0x10] sm:$0xff]
          %v231 = vld [vmem:[#allocation6 + $0x18] sm:$0xff]
          %v232 = vld [vmem:[#allocation6 + $0x20] sm:$0xff]
          %v233 = vld [vmem:[#allocation6 + $0x28] sm:$0xff]
          %v234 = vld [vmem:[#allocation6 + $0x30] sm:$0xff]
          %v235 = vld [vmem:[#allocation6 + $0x38] sm:$0xff]
          %v236 = vld [vmem:[#allocation6 + $0x40] sm:$0xff]
          %v237 = vld [vmem:[#allocation6 + $0x48] sm:$0xff]
          %v238 = vld [vmem:[#allocation6 + $0x50] sm:$0xff]
          %v239 = vld [vmem:[#allocation6 + $0x58] sm:$0xff]
          %v240 = vld [vmem:[#allocation6 + $0x60] sm:$0xff]
          %v241 = vld [vmem:[#allocation6 + $0x68] sm:$0xff]
          %v242 = vld [vmem:[#allocation6 + $0x70] sm:$0xff]
          %v243 = vld [vmem:[#allocation6 + $0x78] sm:$0xff]
          %v244 = vld [vmem:[#allocation6 + $0x80] sm:$0xff]
          %v245 = vld [vmem:[#allocation6 + $0x88] sm:$0xff]
          %v246 = vld [vmem:[#allocation6 + $0x90] sm:$0xff]
          %v247 = vld [vmem:[#allocation6 + $0x98] sm:$0xff]
          %v248 = vld [vmem:[#allocation6 + $0xa0] sm:$0xff]
          %v249 = vld [vmem:[#allocation6 + $0xa8] sm:$0xff]
          %v250 = vld [vmem:[#allocation6 + $0xb0] sm:$0xff]
          %v251 = vld [vmem:[#allocation6 + $0xb8] sm:$0xff]
          %v252 = vld [vmem:[#allocation6 + $0xc0] sm:$0xff]
          %v253 = vld [vmem:[#allocation6 + $0xc8] sm:$0xff]
          %v254 = vld [vmem:[#allocation6 + $0xd0] sm:$0xff]
          %v255 = vld [vmem:[#allocation6 + $0xd8] sm:$0xff]
          %v256 = vld [vmem:[#allocation6 + $0xe0] sm:$0xff]
          %v257 = vld [vmem:[#allocation6 + $0xe8] sm:$0xff]
          %v258 = vld [vmem:[#allocation6 + $0xf0] sm:$0xff]
          %v259 = vld [vmem:[#allocation6 + $0xf8] sm:$0xff]
          %v260 = vld [vmem:[#allocation9] sm:$0xff]
          %v261 = vld [vmem:[#allocation9 + $0x8] sm:$0xff]
          %v262 = vld [vmem:[#allocation9 + $0x10] sm:$0xff]
          %v263 = vld [vmem:[#allocation9 + $0x18] sm:$0xff]
          %v264 = vld [vmem:[#allocation9 + $0x20] sm:$0xff]
          %v265 = vld [vmem:[#allocation9 + $0x28] sm:$0xff]
          %v266 = vld [vmem:[#allocation9 + $0x30] sm:$0xff]
          %v267 = vld [vmem:[#allocation9 + $0x38] sm:$0xff]
          %v268 = vld [vmem:[#allocation9 + $0x40] sm:$0xff]
          %v269 = vld [vmem:[#allocation9 + $0x48] sm:$0xff]
          %v270 = vld [vmem:[#allocation9 + $0x50] sm:$0xff]
          %v271 = vld [vmem:[#allocation9 + $0x58] sm:$0xff]
          %v272 = vld [vmem:[#allocation9 + $0x60] sm:$0xff]
          %v273 = vld [vmem:[#allocation9 + $0x68] sm:$0xff]
          %v274 = vld [vmem:[#allocation9 + $0x70] sm:$0xff]
          %v275 = vld [vmem:[#allocation9 + $0x78] sm:$0xff]
          %v276 = vld [vmem:[#allocation9 + $0x80] sm:$0xff]
          %v277 = vld [vmem:[#allocation9 + $0x88] sm:$0xff]
          %v278 = vld [vmem:[#allocation9 + $0x90] sm:$0xff]
          %v279 = vld [vmem:[#allocation9 + $0x98] sm:$0xff]
          %v280 = vld [vmem:[#allocation9 + $0xa0] sm:$0xff]
          %v281 = vld [vmem:[#allocation9 + $0xa8] sm:$0xff]
          %v282 = vld [vmem:[#allocation9 + $0xb0] sm:$0xff]
          %v283 = vld [vmem:[#allocation9 + $0xb8] sm:$0xff]
          %v284 = vld [vmem:[#allocation9 + $0xc0] sm:$0xff]
          %v285 = vld [vmem:[#allocation9 + $0xc8] sm:$0xff]
          %v286 = vld [vmem:[#allocation9 + $0xd0] sm:$0xff]
          %v287 = vld [vmem:[#allocation9 + $0xd8] sm:$0xff]
          %v288 = vld [vmem:[#allocation9 + $0xe0] sm:$0xff]
          %v289 = vld [vmem:[#allocation9 + $0xe8] sm:$0xff]
          %v290 = vld [vmem:[#allocation9 + $0xf0] sm:$0xff]
          %v291 = vld [vmem:[#allocation9 + $0xf8] sm:$0xff]
          %v292 = vmul.f32 %v228, %v228
          %v293 = vmul.f32 %v229, %v229
          %v294 = vmul.f32 %v230, %v230
          %v295 = vmul.f32 %v231, %v231
          %v296 = vmul.f32 %v232, %v232
          %v297 = vmul.f32 %v233, %v233
          %v298 = vmul.f32 %v234, %v234
          %v299 = vmul.f32 %v235, %v235
          %v300 = vmul.f32 %v236, %v236
          %v301 = vmul.f32 %v237, %v237
          %v302 = vmul.f32 %v238, %v238
          %v303 = vmul.f32 %v239, %v239
          %v304 = vmul.f32 %v240, %v240
          %v305 = vmul.f32 %v241, %v241
          %v306 = vmul.f32 %v242, %v242
          %v307 = vmul.f32 %v243, %v243
          %v308 = vmul.f32 %v244, %v244
          %v309 = vmul.f32 %v245, %v245
          %v310 = vmul.f32 %v246, %v246
          %v311 = vmul.f32 %v247, %v247
          %v312 = vmul.f32 %v248, %v248
          %v313 = vmul.f32 %v249, %v249
          %v314 = vmul.f32 %v250, %v250
          %v315 = vmul.f32 %v251, %v251
          %v316 = vmul.f32 %v252, %v252
          %v317 = vmul.f32 %v253, %v253
          %v318 = vmul.f32 %v254, %v254
          %v319 = vmul.f32 %v255, %v255
          %v320 = vmul.f32 %v256, %v256
          %v321 = vmul.f32 %v257, %v257
          %v322 = vmul.f32 %v258, %v258
          %v323 = vmul.f32 %v259, %v259
          %v324 = vmul.f32 %v260, %v260
          %v325 = vmul.f32 %v261, %v261
          %v326 = vmul.f32 %v262, %v262
          %v327 = vmul.f32 %v263, %v263
          %v328 = vmul.f32 %v264, %v264
          %v329 = vmul.f32 %v265, %v265
          %v330 = vmul.f32 %v266, %v266
          %v331 = vmul.f32 %v267, %v267
          %v332 = vmul.f32 %v268, %v268
          %v333 = vmul.f32 %v269, %v269
          %v334 = vmul.f32 %v270, %v270
          %v335 = vmul.f32 %v271, %v271
          %v336 = vmul.f32 %v272, %v272
          %v337 = vmul.f32 %v273, %v273
          %v338 = vmul.f32 %v274, %v274
          %v339 = vmul.f32 %v275, %v275
          %v340 = vmul.f32 %v276, %v276
          %v341 = vmul.f32 %v277, %v277
          %v342 = vmul.f32 %v278, %v278
          %v343 = vmul.f32 %v279, %v279
          %v344 = vmul.f32 %v280, %v280
          %v345 = vmul.f32 %v281, %v281
          %v346 = vmul.f32 %v282, %v282
          %v347 = vmul.f32 %v283, %v283
          %v348 = vmul.f32 %v284, %v284
          %v349 = vmul.f32 %v285, %v285
          %v350 = vmul.f32 %v286, %v286
          %v351 = vmul.f32 %v287, %v287
          %v352 = vmul.f32 %v288, %v288
          %v353 = vmul.f32 %v289, %v289
          %v354 = vmul.f32 %v290, %v290
          %v355 = vmul.f32 %v291, %v291
          %v356 = vld [vmem:[#allocation2] sm:$0xff]
          %v357 = vld [vmem:[#allocation2 + $0x8] sm:$0xff]
          %v358 = vld [vmem:[#allocation2 + $0x10] sm:$0xff]
          %v359 = vld [vmem:[#allocation2 + $0x18] sm:$0xff]
          %v360 = vld [vmem:[#allocation2 + $0x20] sm:$0xff]
          %v361 = vld [vmem:[#allocation2 + $0x28] sm:$0xff]
          %v362 = vld [vmem:[#allocation2 + $0x30] sm:$0xff]
          %v363 = vld [vmem:[#allocation2 + $0x38] sm:$0xff]
          %v364 = vld [vmem:[#allocation2 + $0x40] sm:$0xff]
          %v365 = vld [vmem:[#allocation2 + $0x48] sm:$0xff]
          %v366 = vld [vmem:[#allocation2 + $0x50] sm:$0xff]
          %v367 = vld [vmem:[#allocation2 + $0x58] sm:$0xff]
          %v368 = vld [vmem:[#allocation2 + $0x60] sm:$0xff]
          %v369 = vld [vmem:[#allocation2 + $0x68] sm:$0xff]
          %v370 = vld [vmem:[#allocation2 + $0x70] sm:$0xff]
          %v371 = vld [vmem:[#allocation2 + $0x78] sm:$0xff]
          %v372 = vmax.f32 %v292, %v293
          %373 = vmax.xlane.f32.xlu0 %v372
          %v374 = vpop.xlane.xlu0 %373
          %v375 = vmax.f32 %v294, %v295
          %376 = vmax.xlane.f32.xlu0 %v375
          %v377 = vpop.xlane.xlu0 %376
          %v378 = vmax.f32 %v296, %v297
          %379 = vmax.xlane.f32.xlu0 %v378
          %v380 = vpop.xlane.xlu0 %379
          %v381 = vmax.f32 %v298, %v299
          %382 = vmax.xlane.f32.xlu0 %v381
          %v383 = vpop.xlane.xlu0 %382
          %v384 = vmax.f32 %v300, %v301
          %385 = vmax.xlane.f32.xlu0 %v384
          %v386 = vpop.xlane.xlu0 %385
          %v387 = vmax.f32 %v302, %v303
          %388 = vmax.xlane.f32.xlu0 %v387
          %v389 = vpop.xlane.xlu0 %388
          %v390 = vmax.f32 %v304, %v305
          %391 = vmax.xlane.f32.xlu0 %v390
          %v392 = vpop.xlane.xlu0 %391
          %v393 = vmax.f32 %v306, %v307
          %394 = vmax.xlane.f32.xlu0 %v393
          %v395 = vpop.xlane.xlu0 %394
          %v396 = vmax.f32 %v308, %v309
          %397 = vmax.xlane.f32.xlu0 %v396
          %v398 = vpop.xlane.xlu0 %397
          %v399 = vmax.f32 %v310, %v311
          %400 = vmax.xlane.f32.xlu0 %v399
          %v401 = vpop.xlane.xlu0 %400
          %v402 = vmax.f32 %v312, %v313
          %403 = vmax.xlane.f32.xlu0 %v402
          %v404 = vpop.xlane.xlu0 %403
          %v405 = vmax.f32 %v314, %v315
          %406 = vmax.xlane.f32.xlu0 %v405
          %v407 = vpop.xlane.xlu0 %406
          %v408 = vmax.f32 %v316, %v317
          %409 = vmax.xlane.f32.xlu0 %v408
          %v410 = vpop.xlane.xlu0 %409
          %v411 = vmax.f32 %v318, %v319
          %412 = vmax.xlane.f32.xlu0 %v411
          %v413 = vpop.xlane.xlu0 %412
          %v414 = vmax.f32 %v320, %v321
          %415 = vmax.xlane.f32.xlu0 %v414
          %v416 = vpop.xlane.xlu0 %415
          %v417 = vmax.f32 %v322, %v323
          %418 = vmax.xlane.f32.xlu0 %v417
          %v419 = vpop.xlane.xlu0 %418
          %v420 = vmax.f32 %v356, %v374
          %v421 = vmax.f32 %v357, %v377
          %v422 = vmax.f32 %v358, %v380
          %v423 = vmax.f32 %v359, %v383
          %v424 = vmax.f32 %v360, %v386
          %v425 = vmax.f32 %v361, %v389
          %v426 = vmax.f32 %v362, %v392
          %v427 = vmax.f32 %v363, %v395
          %v428 = vmax.f32 %v364, %v398
          %v429 = vmax.f32 %v365, %v401
          %v430 = vmax.f32 %v366, %v404
          %v431 = vmax.f32 %v367, %v407
          %v432 = vmax.f32 %v368, %v410
          %v433 = vmax.f32 %v369, %v413
          %v434 = vmax.f32 %v370, %v416
          %v435 = vmax.f32 %v371, %v419
          %vm436 = vcmask 7168
          %437 = vst.msk [vmem:[#allocation2] sm:$0xff] %vm436, %v420
          %438 = vst.msk [vmem:[#allocation2 + $0x8] sm:$0xff] %vm436, %v421
          %439 = vst.msk [vmem:[#allocation2 + $0x10] sm:$0xff] %vm436, %v422
          %440 = vst.msk [vmem:[#allocation2 + $0x18] sm:$0xff] %vm436, %v423
          %441 = vst.msk [vmem:[#allocation2 + $0x20] sm:$0xff] %vm436, %v424
          %442 = vst.msk [vmem:[#allocation2 + $0x28] sm:$0xff] %vm436, %v425
          %443 = vst.msk [vmem:[#allocation2 + $0x30] sm:$0xff] %vm436, %v426
          %444 = vst.msk [vmem:[#allocation2 + $0x38] sm:$0xff] %vm436, %v427
          %445 = vst.msk [vmem:[#allocation2 + $0x40] sm:$0xff] %vm436, %v428
          %446 = vst.msk [vmem:[#allocation2 + $0x48] sm:$0xff] %vm436, %v429
          %447 = vst.msk [vmem:[#allocation2 + $0x50] sm:$0xff] %vm436, %v430
          %448 = vst.msk [vmem:[#allocation2 + $0x58] sm:$0xff] %vm436, %v431
          %449 = vst.msk [vmem:[#allocation2 + $0x60] sm:$0xff] %vm436, %v432
          %450 = vst.msk [vmem:[#allocation2 + $0x68] sm:$0xff] %vm436, %v433
          %451 = vst.msk [vmem:[#allocation2 + $0x70] sm:$0xff] %vm436, %v434
          %452 = vst.msk [vmem:[#allocation2 + $0x78] sm:$0xff] %vm436, %v435
          %v453 = vld [vmem:[#allocation3] sm:$0xff]
          %v454 = vld [vmem:[#allocation3 + $0x8] sm:$0xff]
          %v455 = vld [vmem:[#allocation3 + $0x10] sm:$0xff]
          %v456 = vld [vmem:[#allocation3 + $0x18] sm:$0xff]
          %v457 = vld [vmem:[#allocation3 + $0x20] sm:$0xff]
          %v458 = vld [vmem:[#allocation3 + $0x28] sm:$0xff]
          %v459 = vld [vmem:[#allocation3 + $0x30] sm:$0xff]
          %v460 = vld [vmem:[#allocation3 + $0x38] sm:$0xff]
          %v461 = vld [vmem:[#allocation3 + $0x40] sm:$0xff]
          %v462 = vld [vmem:[#allocation3 + $0x48] sm:$0xff]
          %v463 = vld [vmem:[#allocation3 + $0x50] sm:$0xff]
          %v464 = vld [vmem:[#allocation3 + $0x58] sm:$0xff]
          %v465 = vld [vmem:[#allocation3 + $0x60] sm:$0xff]
          %v466 = vld [vmem:[#allocation3 + $0x68] sm:$0xff]
          %v467 = vld [vmem:[#allocation3 + $0x70] sm:$0xff]
          %v468 = vld [vmem:[#allocation3 + $0x78] sm:$0xff]
          %v469 = vmax.f32 %v324, %v325
          %470 = vmax.xlane.f32.xlu0 %v469
          %v471 = vpop.xlane.xlu0 %470
          %v472 = vmax.f32 %v326, %v327
          %473 = vmax.xlane.f32.xlu0 %v472
          %v474 = vpop.xlane.xlu0 %473
          %v475 = vmax.f32 %v328, %v329
          %476 = vmax.xlane.f32.xlu0 %v475
          %v477 = vpop.xlane.xlu0 %476
          %v478 = vmax.f32 %v330, %v331
          %479 = vmax.xlane.f32.xlu0 %v478
          %v480 = vpop.xlane.xlu0 %479
          %v481 = vmax.f32 %v332, %v333
          %482 = vmax.xlane.f32.xlu0 %v481
          %v483 = vpop.xlane.xlu0 %482
          %v484 = vmax.f32 %v334, %v335
          %485 = vmax.xlane.f32.xlu0 %v484
          %v486 = vpop.xlane.xlu0 %485
          %v487 = vmax.f32 %v336, %v337
          %488 = vmax.xlane.f32.xlu0 %v487
          %v489 = vpop.xlane.xlu0 %488
          %v490 = vmax.f32 %v338, %v339
          %491 = vmax.xlane.f32.xlu0 %v490
          %v492 = vpop.xlane.xlu0 %491
          %v493 = vmax.f32 %v340, %v341
          %494 = vmax.xlane.f32.xlu0 %v493
          %v495 = vpop.xlane.xlu0 %494
          %v496 = vmax.f32 %v342, %v343
          %497 = vmax.xlane.f32.xlu0 %v496
          %v498 = vpop.xlane.xlu0 %497
          %v499 = vmax.f32 %v344, %v345
          %500 = vmax.xlane.f32.xlu0 %v499
          %v501 = vpop.xlane.xlu0 %500
          %v502 = vmax.f32 %v346, %v347
          %503 = vmax.xlane.f32.xlu0 %v502
          %v504 = vpop.xlane.xlu0 %503
          %v505 = vmax.f32 %v348, %v349
          %506 = vmax.xlane.f32.xlu0 %v505
          %v507 = vpop.xlane.xlu0 %506
          %v508 = vmax.f32 %v350, %v351
          %509 = vmax.xlane.f32.xlu0 %v508
          %v510 = vpop.xlane.xlu0 %509
          %v511 = vmax.f32 %v352, %v353
          %512 = vmax.xlane.f32.xlu0 %v511
          %v513 = vpop.xlane.xlu0 %512
          %v514 = vmax.f32 %v354, %v355
          %515 = vmax.xlane.f32.xlu0 %v514
          %v516 = vpop.xlane.xlu0 %515
          %v517 = vmax.f32 %v453, %v471
          %v518 = vmax.f32 %v454, %v474
          %v519 = vmax.f32 %v455, %v477
          %v520 = vmax.f32 %v456, %v480
          %v521 = vmax.f32 %v457, %v483
          %v522 = vmax.f32 %v458, %v486
          %v523 = vmax.f32 %v459, %v489
          %v524 = vmax.f32 %v460, %v492
          %v525 = vmax.f32 %v461, %v495
          %v526 = vmax.f32 %v462, %v498
          %v527 = vmax.f32 %v463, %v501
          %v528 = vmax.f32 %v464, %v504
          %v529 = vmax.f32 %v465, %v507
          %v530 = vmax.f32 %v466, %v510
          %v531 = vmax.f32 %v467, %v513
          %v532 = vmax.f32 %v468, %v516
          %533 = vst.msk [vmem:[#allocation3] sm:$0xff] %vm436, %v517
          %534 = vst.msk [vmem:[#allocation3 + $0x8] sm:$0xff] %vm436, %v518
          %535 = vst.msk [vmem:[#allocation3 + $0x10] sm:$0xff] %vm436, %v519
          %536 = vst.msk [vmem:[#allocation3 + $0x18] sm:$0xff] %vm436, %v520
          %537 = vst.msk [vmem:[#allocation3 + $0x20] sm:$0xff] %vm436, %v521
          %538 = vst.msk [vmem:[#allocation3 + $0x28] sm:$0xff] %vm436, %v522
          %539 = vst.msk [vmem:[#allocation3 + $0x30] sm:$0xff] %vm436, %v523
          %540 = vst.msk [vmem:[#allocation3 + $0x38] sm:$0xff] %vm436, %v524
          %541 = vst.msk [vmem:[#allocation3 + $0x40] sm:$0xff] %vm436, %v525
          %542 = vst.msk [vmem:[#allocation3 + $0x48] sm:$0xff] %vm436, %v526
          %543 = vst.msk [vmem:[#allocation3 + $0x50] sm:$0xff] %vm436, %v527
          %544 = vst.msk [vmem:[#allocation3 + $0x58] sm:$0xff] %vm436, %v528
          %545 = vst.msk [vmem:[#allocation3 + $0x60] sm:$0xff] %vm436, %v529
          %546 = vst.msk [vmem:[#allocation3 + $0x68] sm:$0xff] %vm436, %v530
          %547 = vst.msk [vmem:[#allocation3 + $0x70] sm:$0xff] %vm436, %v531
          %548 = vst.msk [vmem:[#allocation3 + $0x78] sm:$0xff] %vm436, %v532
        $region44: #{tpu_custom_call.1} parent=27 // pred_fallthru
          _
        %p549 = scmp.eq.s32.totalorder %s20, 1
        %p550 = pnand %p549, %p171
        %p551 = pneg %p550
        // Predicated region
        $region45: #{tpu_custom_call.1} parent=27 // pred_check
          _
        $region46: #{tpu_custom_call.1} parent=27 // pred_check_branch
          %553 = sbr.rel (%p550) target = $region48
        $region47: #{tpu_custom_call.1} parent=27 // pred_region
          %v554 = vld [vmem:[#allocation2] sm:$0xff]
          %v555 = vld [vmem:[#allocation2 + $0x8] sm:$0xff]
          %v556 = vld [vmem:[#allocation2 + $0x10] sm:$0xff]
          %v557 = vld [vmem:[#allocation2 + $0x18] sm:$0xff]
          %v558 = vld [vmem:[#allocation2 + $0x20] sm:$0xff]
          %v559 = vld [vmem:[#allocation2 + $0x28] sm:$0xff]
          %v560 = vld [vmem:[#allocation2 + $0x30] sm:$0xff]
          %v561 = vld [vmem:[#allocation2 + $0x38] sm:$0xff]
          %v562 = vld [vmem:[#allocation2 + $0x40] sm:$0xff]
          %v563 = vld [vmem:[#allocation2 + $0x48] sm:$0xff]
          %v564 = vld [vmem:[#allocation2 + $0x50] sm:$0xff]
          %v565 = vld [vmem:[#allocation2 + $0x58] sm:$0xff]
          %v566 = vld [vmem:[#allocation2 + $0x60] sm:$0xff]
          %v567 = vld [vmem:[#allocation2 + $0x68] sm:$0xff]
          %v568 = vld [vmem:[#allocation2 + $0x70] sm:$0xff]
          %v569 = vld [vmem:[#allocation2 + $0x78] sm:$0xff]
          %vm570 = vcmask 7168
          %v571 = vsel %vm570, %v554, -inf
          %v572 = vsel %vm570, %v555, -inf
          %v573 = vsel %vm570, %v556, -inf
          %v574 = vsel %vm570, %v557, -inf
          %v575 = vsel %vm570, %v558, -inf
          %v576 = vmax.f32 %v571, %v575
          %v577 = vsel %vm570, %v559, -inf
          %v578 = vmax.f32 %v572, %v577
          %v579 = vsel %vm570, %v560, -inf
          %v580 = vmax.f32 %v573, %v579
          %v581 = vsel %vm570, %v561, -inf
          %v582 = vmax.f32 %v574, %v581
          %v583 = vsel %vm570, %v562, -inf
          %v584 = vmax.f32 %v576, %v583
          %v585 = vsel %vm570, %v563, -inf
          %v586 = vmax.f32 %v578, %v585
          %v587 = vsel %vm570, %v564, -inf
          %v588 = vmax.f32 %v580, %v587
          %v589 = vsel %vm570, %v565, -inf
          %v590 = vmax.f32 %v582, %v589
          %v591 = vsel %vm570, %v566, -inf
          %v592 = vmax.f32 %v584, %v591
          %v593 = vsel %vm570, %v567, -inf
          %v594 = vmax.f32 %v586, %v593
          %v595 = vsel %vm570, %v568, -inf
          %v596 = vmax.f32 %v588, %v595
          %v597 = vsel %vm570, %v569, -inf
          %v598 = vmax.f32 %v590, %v597
          %v599 = vmax.f32 %v592, %v594
          %v600 = vmax.f32 %v596, %v598
          %v601 = vmax.f32 %v599, %v600
          %602 = vmax.xlane.f32.xlu0 %v601
          %v603 = vpop.xlane.xlu0 %602
          %v604 = vrot.slane %v603, 4
          %v605 = vmax.f32 %v603, %v604
          %v606 = vrot.slane %v605, 2
          %v607 = vmax.f32 %v605, %v606
          %v608 = vrot.slane %v607, 1
          %v609 = vmax.f32 %v607, %v608
          %s610 = vtos %v609
          %s611 = smul.f32 %s610, 1e-08
          %s612 = smax.f32 %s611, 1e-14
          %s613 = scalar_lea.smem [#allocation5], 0
          %614 = sst [smem:[%s613]] %s612
          %v615 = vld [vmem:[#allocation3] sm:$0xff]
          %v616 = vld [vmem:[#allocation3 + $0x8] sm:$0xff]
          %v617 = vld [vmem:[#allocation3 + $0x10] sm:$0xff]
          %v618 = vld [vmem:[#allocation3 + $0x18] sm:$0xff]
          %v619 = vld [vmem:[#allocation3 + $0x20] sm:$0xff]
          %v620 = vld [vmem:[#allocation3 + $0x28] sm:$0xff]
          %v621 = vld [vmem:[#allocation3 + $0x30] sm:$0xff]
          %v622 = vld [vmem:[#allocation3 + $0x38] sm:$0xff]
          %v623 = vld [vmem:[#allocation3 + $0x40] sm:$0xff]
          %v624 = vld [vmem:[#allocation3 + $0x48] sm:$0xff]
          %v625 = vld [vmem:[#allocation3 + $0x50] sm:$0xff]
          %v626 = vld [vmem:[#allocation3 + $0x58] sm:$0xff]
          %v627 = vld [vmem:[#allocation3 + $0x60] sm:$0xff]
          %v628 = vld [vmem:[#allocation3 + $0x68] sm:$0xff]
          %v629 = vld [vmem:[#allocation3 + $0x70] sm:$0xff]
          %v630 = vld [vmem:[#allocation3 + $0x78] sm:$0xff]
          %v631 = vsel %vm570, %v615, -inf
          %v632 = vsel %vm570, %v616, -inf
          %v633 = vsel %vm570, %v617, -inf
          %v634 = vsel %vm570, %v618, -inf
          %v635 = vsel %vm570, %v619, -inf
          %v636 = vmax.f32 %v631, %v635
          %v637 = vsel %vm570, %v620, -inf
          %v638 = vmax.f32 %v632, %v637
          %v639 = vsel %vm570, %v621, -inf
          %v640 = vmax.f32 %v633, %v639
          %v641 = vsel %vm570, %v622, -inf
          %v642 = vmax.f32 %v634, %v641
          %v643 = vsel %vm570, %v623, -inf
          %v644 = vmax.f32 %v636, %v643
          %v645 = vsel %vm570, %v624, -inf
          %v646 = vmax.f32 %v638, %v645
          %v647 = vsel %vm570, %v625, -inf
          %v648 = vmax.f32 %v640, %v647
          %v649 = vsel %vm570, %v626, -inf
          %v650 = vmax.f32 %v642, %v649
          %v651 = vsel %vm570, %v627, -inf
          %v652 = vmax.f32 %v644, %v651
          %v653 = vsel %vm570, %v628, -inf
          %v654 = vmax.f32 %v646, %v653
          %v655 = vsel %vm570, %v629, -inf
          %v656 = vmax.f32 %v648, %v655
          %v657 = vsel %vm570, %v630, -inf
          %v658 = vmax.f32 %v650, %v657
          %v659 = vmax.f32 %v652, %v654
          %v660 = vmax.f32 %v656, %v658
          %v661 = vmax.f32 %v659, %v660
          %662 = vmax.xlane.f32.xlu0 %v661
          %v663 = vpop.xlane.xlu0 %662
          %v664 = vrot.slane %v663, 4
          %v665 = vmax.f32 %v663, %v664
          %v666 = vrot.slane %v665, 2
          %v667 = vmax.f32 %v665, %v666
          %v668 = vrot.slane %v667, 1
          %v669 = vmax.f32 %v667, %v668
          %s670 = vtos %v669
          %s671 = smul.f32 %s670, 1e-08
          %s672 = smax.f32 %s671, 1e-14
          %s673 = scalar_lea.smem [#allocation5], 1
          %674 = sst [smem:[%s673]] %s672
        $region48: #{tpu_custom_call.1} parent=27 // pred_fallthru
          _
        // Predicated region
        $region49: #{tpu_custom_call.1} parent=27 // pred_check
          %p675 = pneg %p549
        $region50: #{tpu_custom_call.1} parent=27 // pred_check_branch
          %677 = sbr.rel (%p675) target = $region52
        $region51: #{tpu_custom_call.1} parent=27 // pred_region
          %s678 = sld [smem:[#allocation5]]
          %s679 = sld [smem:[#allocation5 + $0x1]]
          %v680 = vld [vmem:[#allocation6] sm:$0xff]
          %v681 = vld [vmem:[#allocation6 + $0x8] sm:$0xff]
          %v682 = vld [vmem:[#allocation6 + $0x10] sm:$0xff]
          %v683 = vld [vmem:[#allocation6 + $0x18] sm:$0xff]
          %v684 = vld [vmem:[#allocation6 + $0x20] sm:$0xff]
          %v685 = vld [vmem:[#allocation6 + $0x28] sm:$0xff]
          %v686 = vld [vmem:[#allocation6 + $0x30] sm:$0xff]
          %v687 = vld [vmem:[#allocation6 + $0x38] sm:$0xff]
          %v688 = vld [vmem:[#allocation6 + $0x40] sm:$0xff]
          %v689 = vld [vmem:[#allocation6 + $0x48] sm:$0xff]
          %v690 = vld [vmem:[#allocation6 + $0x50] sm:$0xff]
          %v691 = vld [vmem:[#allocation6 + $0x58] sm:$0xff]
          %v692 = vld [vmem:[#allocation6 + $0x60] sm:$0xff]
          %v693 = vld [vmem:[#allocation6 + $0x68] sm:$0xff]
          %v694 = vld [vmem:[#allocation6 + $0x70] sm:$0xff]
          %v695 = vld [vmem:[#allocation6 + $0x78] sm:$0xff]
          %v696 = vld [vmem:[#allocation6 + $0x80] sm:$0xff]
          %v697 = vld [vmem:[#allocation6 + $0x88] sm:$0xff]
          %v698 = vld [vmem:[#allocation6 + $0x90] sm:$0xff]
          %v699 = vld [vmem:[#allocation6 + $0x98] sm:$0xff]
          %v700 = vld [vmem:[#allocation6 + $0xa0] sm:$0xff]
          %v701 = vld [vmem:[#allocation6 + $0xa8] sm:$0xff]
          %v702 = vld [vmem:[#allocation6 + $0xb0] sm:$0xff]
          %v703 = vld [vmem:[#allocation6 + $0xb8] sm:$0xff]
          %v704 = vld [vmem:[#allocation6 + $0xc0] sm:$0xff]
          %v705 = vld [vmem:[#allocation6 + $0xc8] sm:$0xff]
          %v706 = vld [vmem:[#allocation6 + $0xd0] sm:$0xff]
          %v707 = vld [vmem:[#allocation6 + $0xd8] sm:$0xff]
          %v708 = vld [vmem:[#allocation6 + $0xe0] sm:$0xff]
          %v709 = vld [vmem:[#allocation6 + $0xe8] sm:$0xff]
          %v710 = vld [vmem:[#allocation6 + $0xf0] sm:$0xff]
          %v711 = vld [vmem:[#allocation6 + $0xf8] sm:$0xff]
          %v712 = vld [vmem:[#allocation9] sm:$0xff]
          %v713 = vld [vmem:[#allocation9 + $0x8] sm:$0xff]
          %v714 = vld [vmem:[#allocation9 + $0x10] sm:$0xff]
          %v715 = vld [vmem:[#allocation9 + $0x18] sm:$0xff]
          %v716 = vld [vmem:[#allocation9 + $0x20] sm:$0xff]
          %v717 = vld [vmem:[#allocation9 + $0x28] sm:$0xff]
          %v718 = vld [vmem:[#allocation9 + $0x30] sm:$0xff]
          %v719 = vld [vmem:[#allocation9 + $0x38] sm:$0xff]
          %v720 = vld [vmem:[#allocation9 + $0x40] sm:$0xff]
          %v721 = vld [vmem:[#allocation9 + $0x48] sm:$0xff]
          %v722 = vld [vmem:[#allocation9 + $0x50] sm:$0xff]
          %v723 = vld [vmem:[#allocation9 + $0x58] sm:$0xff]
          %v724 = vld [vmem:[#allocation9 + $0x60] sm:$0xff]
          %v725 = vld [vmem:[#allocation9 + $0x68] sm:$0xff]
          %v726 = vld [vmem:[#allocation9 + $0x70] sm:$0xff]
          %v727 = vld [vmem:[#allocation9 + $0x78] sm:$0xff]
          %v728 = vld [vmem:[#allocation9 + $0x80] sm:$0xff]
          %v729 = vld [vmem:[#allocation9 + $0x88] sm:$0xff]
          %v730 = vld [vmem:[#allocation9 + $0x90] sm:$0xff]
          %v731 = vld [vmem:[#allocation9 + $0x98] sm:$0xff]
          %v732 = vld [vmem:[#allocation9 + $0xa0] sm:$0xff]
          %v733 = vld [vmem:[#allocation9 + $0xa8] sm:$0xff]
          %v734 = vld [vmem:[#allocation9 + $0xb0] sm:$0xff]
          %v735 = vld [vmem:[#allocation9 + $0xb8] sm:$0xff]
          %v736 = vld [vmem:[#allocation9 + $0xc0] sm:$0xff]
          %v737 = vld [vmem:[#allocation9 + $0xc8] sm:$0xff]
          %v738 = vld [vmem:[#allocation9 + $0xd0] sm:$0xff]
          %v739 = vld [vmem:[#allocation9 + $0xd8] sm:$0xff]
          %v740 = vld [vmem:[#allocation9 + $0xe0] sm:$0xff]
          %v741 = vld [vmem:[#allocation9 + $0xe8] sm:$0xff]
          %v742 = vld [vmem:[#allocation9 + $0xf0] sm:$0xff]
          %v743 = vld [vmem:[#allocation9 + $0xf8] sm:$0xff]
          %v744 = vmul.f32 %v680, %v680
          %v745 = vmul.f32 %v681, %v681
          %v746 = vmul.f32 %v682, %v682
          %v747 = vmul.f32 %v683, %v683
          %v748 = vmul.f32 %v684, %v684
          %v749 = vmul.f32 %v685, %v685
          %v750 = vmul.f32 %v686, %v686
          %v751 = vmul.f32 %v687, %v687
          %v752 = vmul.f32 %v688, %v688
          %v753 = vmul.f32 %v689, %v689
          %v754 = vmul.f32 %v690, %v690
          %v755 = vmul.f32 %v691, %v691
          %v756 = vmul.f32 %v692, %v692
          %v757 = vmul.f32 %v693, %v693
          %v758 = vmul.f32 %v694, %v694
          %v759 = vmul.f32 %v695, %v695
          %v760 = vmul.f32 %v696, %v696
          %v761 = vmul.f32 %v697, %v697
          %v762 = vmul.f32 %v698, %v698
          %v763 = vmul.f32 %v699, %v699
          %v764 = vmul.f32 %v700, %v700
          %v765 = vmul.f32 %v701, %v701
          %v766 = vmul.f32 %v702, %v702
          %v767 = vmul.f32 %v703, %v703
          %v768 = vmul.f32 %v704, %v704
          %v769 = vmul.f32 %v705, %v705
          %v770 = vmul.f32 %v706, %v706
          %v771 = vmul.f32 %v707, %v707
          %v772 = vmul.f32 %v708, %v708
          %v773 = vmul.f32 %v709, %v709
          %v774 = vmul.f32 %v710, %v710
          %v775 = vmul.f32 %v711, %v711
          %v776 = vstv %s678
          %v777 = vmax.f32 %v744, %v776
          %v778 = vmax.f32 %v745, %v776
          %v779 = vmax.f32 %v746, %v776
          %v780 = vmax.f32 %v747, %v776
          %v781 = vmax.f32 %v748, %v776
          %v782 = vmax.f32 %v749, %v776
          %v783 = vmax.f32 %v750, %v776
          %v784 = vmax.f32 %v751, %v776
          %v785 = vmax.f32 %v752, %v776
          %v786 = vmax.f32 %v753, %v776
          %v787 = vmax.f32 %v754, %v776
          %v788 = vmax.f32 %v755, %v776
          %v789 = vmax.f32 %v756, %v776
          %v790 = vmax.f32 %v757, %v776
          %v791 = vmax.f32 %v758, %v776
          %v792 = vmax.f32 %v759, %v776
          %v793 = vmax.f32 %v760, %v776
          %v794 = vmax.f32 %v761, %v776
          %v795 = vmax.f32 %v762, %v776
          %v796 = vmax.f32 %v763, %v776
          %v797 = vmax.f32 %v764, %v776
          %v798 = vmax.f32 %v765, %v776
          %v799 = vmax.f32 %v766, %v776
          %v800 = vmax.f32 %v767, %v776
          %v801 = vmax.f32 %v768, %v776
          %v802 = vmax.f32 %v769, %v776
          %v803 = vmax.f32 %v770, %v776
          %v804 = vmax.f32 %v771, %v776
          %v805 = vmax.f32 %v772, %v776
          %v806 = vmax.f32 %v773, %v776
          %v807 = vmax.f32 %v774, %v776
          %v808 = vmax.f32 %v775, %v776
          %v809 = vlog2.pop %v777
          %v810 = vmul.f32 %v809, 0.6931472
          %v811 = vlog2.pop %v778
          %v812 = vmul.f32 %v811, 0.6931472
          %v813 = vlog2.pop %v779
          %v814 = vmul.f32 %v813, 0.6931472
          %v815 = vlog2.pop %v780
          %v816 = vmul.f32 %v815, 0.6931472
          %v817 = vlog2.pop %v781
          %v818 = vmul.f32 %v817, 0.6931472
          %v819 = vlog2.pop %v782
          %v820 = vmul.f32 %v819, 0.6931472
          %v821 = vlog2.pop %v783
          %v822 = vmul.f32 %v821, 0.6931472
          %v823 = vlog2.pop %v784
          %v824 = vmul.f32 %v823, 0.6931472
          %v825 = vlog2.pop %v785
          %v826 = vmul.f32 %v825, 0.6931472
          %v827 = vlog2.pop %v786
          %v828 = vmul.f32 %v827, 0.6931472
          %v829 = vlog2.pop %v787
          %v830 = vmul.f32 %v829, 0.6931472
          %v831 = vlog2.pop %v788
          %v832 = vmul.f32 %v831, 0.6931472
          %v833 = vlog2.pop %v789
          %v834 = vmul.f32 %v833, 0.6931472
          %v835 = vlog2.pop %v790
          %v836 = vmul.f32 %v835, 0.6931472
          %v837 = vlog2.pop %v791
          %v838 = vmul.f32 %v837, 0.6931472
          %v839 = vlog2.pop %v792
          %v840 = vmul.f32 %v839, 0.6931472
          %v841 = vlog2.pop %v793
          %v842 = vmul.f32 %v841, 0.6931472
          %v843 = vlog2.pop %v794
          %v844 = vmul.f32 %v843, 0.6931472
          %v845 = vlog2.pop %v795
          %v846 = vmul.f32 %v845, 0.6931472
          %v847 = vlog2.pop %v796
          %v848 = vmul.f32 %v847, 0.6931472
          %v849 = vlog2.pop %v797
          %v850 = vmul.f32 %v849, 0.6931472
          %v851 = vlog2.pop %v798
          %v852 = vmul.f32 %v851, 0.6931472
          %v853 = vlog2.pop %v799
          %v854 = vmul.f32 %v853, 0.6931472
          %v855 = vlog2.pop %v800
          %v856 = vmul.f32 %v855, 0.6931472
          %v857 = vlog2.pop %v801
          %v858 = vmul.f32 %v857, 0.6931472
          %v859 = vlog2.pop %v802
          %v860 = vmul.f32 %v859, 0.6931472
          %v861 = vlog2.pop %v803
          %v862 = vmul.f32 %v861, 0.6931472
          %v863 = vlog2.pop %v804
          %v864 = vmul.f32 %v863, 0.6931472
          %v865 = vlog2.pop %v805
          %v866 = vmul.f32 %v865, 0.6931472
          %v867 = vlog2.pop %v806
          %v868 = vmul.f32 %v867, 0.6931472
          %v869 = vlog2.pop %v807
          %v870 = vmul.f32 %v869, 0.6931472
          %v871 = vlog2.pop %v808
          %v872 = vmul.f32 %v871, 0.6931472
          %v873 = vmul.f32 %v712, %v712
          %v874 = vmul.f32 %v713, %v713
          %v875 = vmul.f32 %v714, %v714
          %v876 = vmul.f32 %v715, %v715
          %v877 = vmul.f32 %v716, %v716
          %v878 = vmul.f32 %v717, %v717
          %v879 = vmul.f32 %v718, %v718
          %v880 = vmul.f32 %v719, %v719
          %v881 = vmul.f32 %v720, %v720
          %v882 = vmul.f32 %v721, %v721
          %v883 = vmul.f32 %v722, %v722
          %v884 = vmul.f32 %v723, %v723
          %v885 = vmul.f32 %v724, %v724
          %v886 = vmul.f32 %v725, %v725
          %v887 = vmul.f32 %v726, %v726
          %v888 = vmul.f32 %v727, %v727
          %v889 = vmul.f32 %v728, %v728
          %v890 = vmul.f32 %v729, %v729
          %v891 = vmul.f32 %v730, %v730
          %v892 = vmul.f32 %v731, %v731
          %v893 = vmul.f32 %v732, %v732
          %v894 = vmul.f32 %v733, %v733
          %v895 = vmul.f32 %v734, %v734
          %v896 = vmul.f32 %v735, %v735
          %v897 = vmul.f32 %v736, %v736
          %v898 = vmul.f32 %v737, %v737
          %v899 = vmul.f32 %v738, %v738
          %v900 = vmul.f32 %v739, %v739
          %v901 = vmul.f32 %v740, %v740
          %v902 = vmul.f32 %v741, %v741
          %v903 = vmul.f32 %v742, %v742
          %v904 = vmul.f32 %v743, %v743
          %v905 = vstv %s679
          %v906 = vmax.f32 %v873, %v905
          %v907 = vmax.f32 %v874, %v905
          %v908 = vmax.f32 %v875, %v905
          %v909 = vmax.f32 %v876, %v905
          %v910 = vmax.f32 %v877, %v905
          %v911 = vmax.f32 %v878, %v905
          %v912 = vmax.f32 %v879, %v905
          %v913 = vmax.f32 %v880, %v905
          %v914 = vmax.f32 %v881, %v905
          %v915 = vmax.f32 %v882, %v905
          %v916 = vmax.f32 %v883, %v905
          %v917 = vmax.f32 %v884, %v905
          %v918 = vmax.f32 %v885, %v905
          %v919 = vmax.f32 %v886, %v905
          %v920 = vmax.f32 %v887, %v905
          %v921 = vmax.f32 %v888, %v905
          %v922 = vmax.f32 %v889, %v905
          %v923 = vmax.f32 %v890, %v905
          %v924 = vmax.f32 %v891, %v905
          %v925 = vmax.f32 %v892, %v905
          %v926 = vmax.f32 %v893, %v905
          %v927 = vmax.f32 %v894, %v905
          %v928 = vmax.f32 %v895, %v905
          %v929 = vmax.f32 %v896, %v905
          %v930 = vmax.f32 %v897, %v905
          %v931 = vmax.f32 %v898, %v905
          %v932 = vmax.f32 %v899, %v905
          %v933 = vmax.f32 %v900, %v905
          %v934 = vmax.f32 %v901, %v905
          %v935 = vmax.f32 %v902, %v905
          %v936 = vmax.f32 %v903, %v905
          %v937 = vmax.f32 %v904, %v905
          %v938 = vlog2.pop %v906
          %v939 = vmul.f32 %v938, 0.6931472
          %v940 = vlog2.pop %v907
          %v941 = vmul.f32 %v940, 0.6931472
          %v942 = vlog2.pop %v908
          %v943 = vmul.f32 %v942, 0.6931472
          %v944 = vlog2.pop %v909
          %v945 = vmul.f32 %v944, 0.6931472
          %v946 = vlog2.pop %v910
          %v947 = vmul.f32 %v946, 0.6931472
          %v948 = vlog2.pop %v911
          %v949 = vmul.f32 %v948, 0.6931472
          %v950 = vlog2.pop %v912
          %v951 = vmul.f32 %v950, 0.6931472
          %v952 = vlog2.pop %v913
          %v953 = vmul.f32 %v952, 0.6931472
          %v954 = vlog2.pop %v914
          %v955 = vmul.f32 %v954, 0.6931472
          %v956 = vlog2.pop %v915
          %v957 = vmul.f32 %v956, 0.6931472
          %v958 = vlog2.pop %v916
          %v959 = vmul.f32 %v958, 0.6931472
          %v960 = vlog2.pop %v917
          %v961 = vmul.f32 %v960, 0.6931472
          %v962 = vlog2.pop %v918
          %v963 = vmul.f32 %v962, 0.6931472
          %v964 = vlog2.pop %v919
          %v965 = vmul.f32 %v964, 0.6931472
          %v966 = vlog2.pop %v920
          %v967 = vmul.f32 %v966, 0.6931472
          %v968 = vlog2.pop %v921
          %v969 = vmul.f32 %v968, 0.6931472
          %v970 = vlog2.pop %v922
          %v971 = vmul.f32 %v970, 0.6931472
          %v972 = vlog2.pop %v923
          %v973 = vmul.f32 %v972, 0.6931472
          %v974 = vlog2.pop %v924
          %v975 = vmul.f32 %v974, 0.6931472
          %v976 = vlog2.pop %v925
          %v977 = vmul.f32 %v976, 0.6931472
          %v978 = vlog2.pop %v926
          %v979 = vmul.f32 %v978, 0.6931472
          %v980 = vlog2.pop %v927
          %v981 = vmul.f32 %v980, 0.6931472
          %v982 = vlog2.pop %v928
          %v983 = vmul.f32 %v982, 0.6931472
          %v984 = vlog2.pop %v929
          %v985 = vmul.f32 %v984, 0.6931472
          %v986 = vlog2.pop %v930
          %v987 = vmul.f32 %v986, 0.6931472
          %v988 = vlog2.pop %v931
          %v989 = vmul.f32 %v988, 0.6931472
          %v990 = vlog2.pop %v932
          %v991 = vmul.f32 %v990, 0.6931472
          %v992 = vlog2.pop %v933
          %v993 = vmul.f32 %v992, 0.6931472
          %v994 = vlog2.pop %v934
          %v995 = vmul.f32 %v994, 0.6931472
          %v996 = vlog2.pop %v935
          %v997 = vmul.f32 %v996, 0.6931472
          %v998 = vlog2.pop %v936
          %v999 = vmul.f32 %v998, 0.6931472
          %v1000 = vlog2.pop %v937
          %v1001 = vmul.f32 %v1000, 0.6931472
          %v1002 = vsub.f32 %v810, %v939
          %v1003 = vsub.f32 %v812, %v941
          %v1004 = vsub.f32 %v814, %v943
          %v1005 = vsub.f32 %v816, %v945
          %v1006 = vsub.f32 %v818, %v947
          %v1007 = vsub.f32 %v820, %v949
          %v1008 = vsub.f32 %v822, %v951
          %v1009 = vsub.f32 %v824, %v953
          %v1010 = vsub.f32 %v826, %v955
          %v1011 = vsub.f32 %v828, %v957
          %v1012 = vsub.f32 %v830, %v959
          %v1013 = vsub.f32 %v832, %v961
          %v1014 = vsub.f32 %v834, %v963
          %v1015 = vsub.f32 %v836, %v965
          %v1016 = vsub.f32 %v838, %v967
          %v1017 = vsub.f32 %v840, %v969
          %v1018 = vsub.f32 %v842, %v971
          %v1019 = vsub.f32 %v844, %v973
          %v1020 = vsub.f32 %v846, %v975
          %v1021 = vsub.f32 %v848, %v977
          %v1022 = vsub.f32 %v850, %v979
          %v1023 = vsub.f32 %v852, %v981
          %v1024 = vsub.f32 %v854, %v983
          %v1025 = vsub.f32 %v856, %v985
          %v1026 = vsub.f32 %v858, %v987
          %v1027 = vsub.f32 %v860, %v989
          %v1028 = vsub.f32 %v862, %v991
          %v1029 = vsub.f32 %v864, %v993
          %v1030 = vsub.f32 %v866, %v995
          %v1031 = vsub.f32 %v868, %v997
          %v1032 = vsub.f32 %v870, %v999
          %v1033 = vsub.f32 %v872, %v1001
          %v1034 = vld [vmem:[#allocation4] sm:$0xff]
          %v1035 = vld [vmem:[#allocation4 + $0x8] sm:$0xff]
          %v1036 = vld [vmem:[#allocation4 + $0x10] sm:$0xff]
          %v1037 = vld [vmem:[#allocation4 + $0x18] sm:$0xff]
          %v1038 = vld [vmem:[#allocation4 + $0x20] sm:$0xff]
          %v1039 = vld [vmem:[#allocation4 + $0x28] sm:$0xff]
          %v1040 = vld [vmem:[#allocation4 + $0x30] sm:$0xff]
          %v1041 = vld [vmem:[#allocation4 + $0x38] sm:$0xff]
          %v1042 = vld [vmem:[#allocation4 + $0x40] sm:$0xff]
          %v1043 = vld [vmem:[#allocation4 + $0x48] sm:$0xff]
          %v1044 = vld [vmem:[#allocation4 + $0x50] sm:$0xff]
          %v1045 = vld [vmem:[#allocation4 + $0x58] sm:$0xff]
          %v1046 = vld [vmem:[#allocation4 + $0x60] sm:$0xff]
          %v1047 = vld [vmem:[#allocation4 + $0x68] sm:$0xff]
          %v1048 = vld [vmem:[#allocation4 + $0x70] sm:$0xff]
          %v1049 = vld [vmem:[#allocation4 + $0x78] sm:$0xff]
          %v1050 = vmul.f32 %v1002, %v1002
          %v1051 = vmul.f32 %v1003, %v1003
          %v1052 = vmul.f32 %v1004, %v1004
          %v1053 = vmul.f32 %v1005, %v1005
          %v1054 = vmul.f32 %v1006, %v1006
          %v1055 = vmul.f32 %v1007, %v1007
          %v1056 = vmul.f32 %v1008, %v1008
          %v1057 = vmul.f32 %v1009, %v1009
          %v1058 = vmul.f32 %v1010, %v1010
          %v1059 = vmul.f32 %v1011, %v1011
          %v1060 = vmul.f32 %v1012, %v1012
          %v1061 = vmul.f32 %v1013, %v1013
          %v1062 = vmul.f32 %v1014, %v1014
          %v1063 = vmul.f32 %v1015, %v1015
          %v1064 = vmul.f32 %v1016, %v1016
          %v1065 = vmul.f32 %v1017, %v1017
          %v1066 = vmul.f32 %v1018, %v1018
          %v1067 = vmul.f32 %v1019, %v1019
          %v1068 = vmul.f32 %v1020, %v1020
          %v1069 = vmul.f32 %v1021, %v1021
          %v1070 = vmul.f32 %v1022, %v1022
          %v1071 = vmul.f32 %v1023, %v1023
          %v1072 = vmul.f32 %v1024, %v1024
          %v1073 = vmul.f32 %v1025, %v1025
          %v1074 = vmul.f32 %v1026, %v1026
          %v1075 = vmul.f32 %v1027, %v1027
          %v1076 = vmul.f32 %v1028, %v1028
          %v1077 = vmul.f32 %v1029, %v1029
          %v1078 = vmul.f32 %v1030, %v1030
          %v1079 = vmul.f32 %v1031, %v1031
          %v1080 = vmul.f32 %v1032, %v1032
          %v1081 = vmul.f32 %v1033, %v1033
          %v1082 = vadd.f32 %v1050, %v1051
          %1083 = vadd.xlane.f32.xlu0 %v1082
          %v1084 = vpop.xlane.xlu0 %1083
          %v1085 = vadd.f32 %v1052, %v1053
          %1086 = vadd.xlane.f32.xlu0 %v1085
          %v1087 = vpop.xlane.xlu0 %1086
          %v1088 = vadd.f32 %v1054, %v1055
          %1089 = vadd.xlane.f32.xlu0 %v1088
          %v1090 = vpop.xlane.xlu0 %1089
          %v1091 = vadd.f32 %v1056, %v1057
          %1092 = vadd.xlane.f32.xlu0 %v1091
          %v1093 = vpop.xlane.xlu0 %1092
          %v1094 = vadd.f32 %v1058, %v1059
          %1095 = vadd.xlane.f32.xlu0 %v1094
          %v1096 = vpop.xlane.xlu0 %1095
          %v1097 = vadd.f32 %v1060, %v1061
          %1098 = vadd.xlane.f32.xlu0 %v1097
          %v1099 = vpop.xlane.xlu0 %1098
          %v1100 = vadd.f32 %v1062, %v1063
          %1101 = vadd.xlane.f32.xlu0 %v1100
          %v1102 = vpop.xlane.xlu0 %1101
          %v1103 = vadd.f32 %v1064, %v1065
          %1104 = vadd.xlane.f32.xlu0 %v1103
          %v1105 = vpop.xlane.xlu0 %1104
          %v1106 = vadd.f32 %v1066, %v1067
          %1107 = vadd.xlane.f32.xlu0 %v1106
          %v1108 = vpop.xlane.xlu0 %1107
          %v1109 = vadd.f32 %v1068, %v1069
          %1110 = vadd.xlane.f32.xlu0 %v1109
          %v1111 = vpop.xlane.xlu0 %1110
          %v1112 = vadd.f32 %v1070, %v1071
          %1113 = vadd.xlane.f32.xlu0 %v1112
          %v1114 = vpop.xlane.xlu0 %1113
          %v1115 = vadd.f32 %v1072, %v1073
          %1116 = vadd.xlane.f32.xlu0 %v1115
          %v1117 = vpop.xlane.xlu0 %1116
          %v1118 = vadd.f32 %v1074, %v1075
          %1119 = vadd.xlane.f32.xlu0 %v1118
          %v1120 = vpop.xlane.xlu0 %1119
          %v1121 = vadd.f32 %v1076, %v1077
          %1122 = vadd.xlane.f32.xlu0 %v1121
          %v1123 = vpop.xlane.xlu0 %1122
          %v1124 = vadd.f32 %v1078, %v1079
          %1125 = vadd.xlane.f32.xlu0 %v1124
          %v1126 = vpop.xlane.xlu0 %1125
          %v1127 = vadd.f32 %v1080, %v1081
          %1128 = vadd.xlane.f32.xlu0 %v1127
          %v1129 = vpop.xlane.xlu0 %1128
          %v1130 = vadd.f32 %v1034, %v1084
          %v1131 = vadd.f32 %v1035, %v1087
          %v1132 = vadd.f32 %v1036, %v1090
          %v1133 = vadd.f32 %v1037, %v1093
          %v1134 = vadd.f32 %v1038, %v1096
          %v1135 = vadd.f32 %v1039, %v1099
          %v1136 = vadd.f32 %v1040, %v1102
          %v1137 = vadd.f32 %v1041, %v1105
          %v1138 = vadd.f32 %v1042, %v1108
          %v1139 = vadd.f32 %v1043, %v1111
          %v1140 = vadd.f32 %v1044, %v1114
          %v1141 = vadd.f32 %v1045, %v1117
          %v1142 = vadd.f32 %v1046, %v1120
          %v1143 = vadd.f32 %v1047, %v1123
          %v1144 = vadd.f32 %v1048, %v1126
          %v1145 = vadd.f32 %v1049, %v1129
          %vm1146 = vcmask 7168
          %1147 = vst.msk [vmem:[#allocation4] sm:$0xff] %vm1146, %v1130
          %1148 = vst.msk [vmem:[#allocation4 + $0x8] sm:$0xff] %vm1146, %v1131
          %1149 = vst.msk [vmem:[#allocation4 + $0x10] sm:$0xff] %vm1146, %v1132
          %1150 = vst.msk [vmem:[#allocation4 + $0x18] sm:$0xff] %vm1146, %v1133
          %1151 = vst.msk [vmem:[#allocation4 + $0x20] sm:$0xff] %vm1146, %v1134
          %1152 = vst.msk [vmem:[#allocation4 + $0x28] sm:$0xff] %vm1146, %v1135
          %1153 = vst.msk [vmem:[#allocation4 + $0x30] sm:$0xff] %vm1146, %v1136
          %1154 = vst.msk [vmem:[#allocation4 + $0x38] sm:$0xff] %vm1146, %v1137
          %1155 = vst.msk [vmem:[#allocation4 + $0x40] sm:$0xff] %vm1146, %v1138
          %1156 = vst.msk [vmem:[#allocation4 + $0x48] sm:$0xff] %vm1146, %v1139
          %1157 = vst.msk [vmem:[#allocation4 + $0x50] sm:$0xff] %vm1146, %v1140
          %1158 = vst.msk [vmem:[#allocation4 + $0x58] sm:$0xff] %vm1146, %v1141
          %1159 = vst.msk [vmem:[#allocation4 + $0x60] sm:$0xff] %vm1146, %v1142
          %1160 = vst.msk [vmem:[#allocation4 + $0x68] sm:$0xff] %vm1146, %v1143
          %1161 = vst.msk [vmem:[#allocation4 + $0x70] sm:$0xff] %vm1146, %v1144
          %1162 = vst.msk [vmem:[#allocation4 + $0x78] sm:$0xff] %vm1146, %v1145
        $region52: #{tpu_custom_call.1} parent=27 // pred_fallthru
          _
        // Predicated region
        $region53: #{tpu_custom_call.1} parent=27 // pred_check
          _
        $region54: #{tpu_custom_call.1} parent=27 // pred_check_branch
          %1164 = sbr.rel (%p550) target = $region56
        $region55: #{tpu_custom_call.1} parent=27 // pred_region
          %v1165 = vld [vmem:[#allocation4] sm:$0xff]
          %v1166 = vld [vmem:[#allocation4 + $0x8] sm:$0xff]
          %v1167 = vld [vmem:[#allocation4 + $0x10] sm:$0xff]
          %v1168 = vld [vmem:[#allocation4 + $0x18] sm:$0xff]
          %v1169 = vld [vmem:[#allocation4 + $0x20] sm:$0xff]
          %v1170 = vld [vmem:[#allocation4 + $0x28] sm:$0xff]
          %v1171 = vld [vmem:[#allocation4 + $0x30] sm:$0xff]
          %v1172 = vld [vmem:[#allocation4 + $0x38] sm:$0xff]
          %v1173 = vld [vmem:[#allocation4 + $0x40] sm:$0xff]
          %v1174 = vld [vmem:[#allocation4 + $0x48] sm:$0xff]
          %v1175 = vld [vmem:[#allocation4 + $0x50] sm:$0xff]
          %v1176 = vld [vmem:[#allocation4 + $0x58] sm:$0xff]
          %v1177 = vld [vmem:[#allocation4 + $0x60] sm:$0xff]
          %v1178 = vld [vmem:[#allocation4 + $0x68] sm:$0xff]
          %v1179 = vld [vmem:[#allocation4 + $0x70] sm:$0xff]
          %v1180 = vld [vmem:[#allocation4 + $0x78] sm:$0xff]
          %vm1181 = vcmask 7168
          %v1182 = vsel %vm1181, %v1165, 0.0
          %v1183 = vsel %vm1181, %v1166, 0.0
          %v1184 = vadd.f32 %v1182, %v1183
          %v1185 = vsel %vm1181, %v1167, 0.0
          %v1186 = vadd.f32 %v1184, %v1185
          %v1187 = vsel %vm1181, %v1168, 0.0
          %v1188 = vadd.f32 %v1186, %v1187
          %v1189 = vsel %vm1181, %v1169, 0.0
          %v1190 = vadd.f32 %v1188, %v1189
          %v1191 = vsel %vm1181, %v1170, 0.0
          %v1192 = vadd.f32 %v1190, %v1191
          %v1193 = vsel %vm1181, %v1171, 0.0
          %v1194 = vadd.f32 %v1192, %v1193
          %v1195 = vsel %vm1181, %v1172, 0.0
          %v1196 = vadd.f32 %v1194, %v1195
          %v1197 = vsel %vm1181, %v1173, 0.0
          %v1198 = vadd.f32 %v1196, %v1197
          %v1199 = vsel %vm1181, %v1174, 0.0
          %v1200 = vadd.f32 %v1198, %v1199
          %v1201 = vsel %vm1181, %v1175, 0.0
          %v1202 = vadd.f32 %v1200, %v1201
          %v1203 = vsel %vm1181, %v1176, 0.0
          %v1204 = vadd.f32 %v1202, %v1203
          %v1205 = vsel %vm1181, %v1177, 0.0
          %v1206 = vadd.f32 %v1204, %v1205
          %v1207 = vsel %vm1181, %v1178, 0.0
          %v1208 = vadd.f32 %v1206, %v1207
          %v1209 = vsel %vm1181, %v1179, 0.0
          %v1210 = vadd.f32 %v1208, %v1209
          %v1211 = vsel %vm1181, %v1180, 0.0
          %v1212 = vadd.f32 %v1210, %v1211
          %1213 = vadd.xlane.f32.xlu0 %v1212
          %v1214 = vpop.xlane.xlu0 %1213
          %v1215 = vrot.slane %v1214, 4
          %v1216 = vadd.f32 %v1214, %v1215
          %v1217 = vrot.slane %v1216, 2
          %v1218 = vadd.f32 %v1216, %v1217
          %v1219 = vrot.slane %v1218, 1
          %v1220 = vadd.f32 %v1218, %v1219
          %s1221 = vtos %v1220
          %s1222 = smul.f32 %s1221, 0.0005755972
          %s1223 = scalar_lea.smem [#allocation11], 0
          %1224 = sst [smem:[%s1223]] %s1222
        $region56: #{tpu_custom_call.1} parent=27 // pred_fallthru
          _
        // Predicated region
        $region57: #{tpu_custom_call.1} parent=27 // pred_check
          %p1225 = pneg %p93
        $region58: #{tpu_custom_call.1} parent=27 // pred_check_branch
          %1227 = sbr.rel (%p1225) target = $region60
        $region59: #{tpu_custom_call.1} parent=27 // pred_region
          %s1229 = ssub.s32 16, 16
          %1230 = vsyncadd [#allocation8], %s1229
          %1233 = dma.smem_to_hbm [#allocation11], 16, %s2, [#allocation8]
        $region60: #{tpu_custom_call.1} parent=27 // pred_fallthru
          _
        // Predicated region
        $region61: #{tpu_custom_call.1} parent=27 // pred_check
          %p1234 = pneg %p93
        $region62: #{tpu_custom_call.1} parent=27 // pred_check_branch
          %1236 = sbr.rel (%p1234) target = $region64
        $region63: #{tpu_custom_call.1} parent=27 // pred_region
          %1237 = dma.done [#allocation8], 16
        $region64: #{tpu_custom_call.1} parent=27 // pred_fallthru
          _
        %1238 = sfence
      $region28: #{tpu_custom_call.1} parent=5 // pred_fallthru
        _
      %p1239 = scmp.le.s32.totalorder 2, %s11
      // Predicated region
      $region65: #{tpu_custom_call.1} parent=5 // pred_check
        %p1240 = pneg %p1239
      $region66: #{tpu_custom_call.1} parent=5 // pred_check_branch
        %1242 = sbr.rel (%p1240) target = $region68
      $region67: #{tpu_custom_call.1} parent=5 // pred_region
        %s1243 = ssub.s32 %s11, 2
      $region68: #{tpu_custom_call.1} parent=5 // pred_fallthru
        _
    $region6: #{tpu_custom_call.1} parent=1 // loop_footer
      %s15 = sadd.s32 1, %s11
    $region7: #{tpu_custom_call.1} parent=1 // loop_footer_branch
      %10 = sbr.rel target = $region3
    $region8: #{tpu_custom_call.1} parent=1 // loop_exit
      _
    %1244 = vsyncpa [#allocation7], 1
    %s1245 = scalar_lea.sflag [#allocation7], 1
    %1246 = vsyncpa %s1245, 1
    %1247 = vsyncpa [#allocation10], 1
    %1248 = vsyncpa [#allocation8], 1
    %s1249 = scalar_lea.sflag [#allocation8], 1
    %1250 = vsyncpa %s1249, 1

</llo_original>
